<compile_context>
chip_gen: v7x
topology: tpu7x:2x2x1
jax: 0.10.0
libtpu: 0.0.40
codegen_flags: <defaults>
</compile_context>

<pallas_src>
import functools
import math

import jax
import jax.numpy as jnp
from jax.experimental import pallas as pl
from jax.experimental.pallas import tpu as pltpu


PAD_N = 128  # lane-dense classifier width; real classes live in columns [:n_classes]


# ----------------------------------------------------------------------------
# Fused whole-forward Pallas kernel (one grid step == one batch element)
# ----------------------------------------------------------------------------

def _fused_forward_kernel(
    emb_ref, mask_ref, ln0g_ref, ln0b_ref,
    wqkv_ref, bqkv_ref, wo_ref, bo_ref,
    ln1g_ref, ln1b_ref, w1_ref, b1_ref, w2_ref, b2_ref, ln2g_ref, ln2b_ref,
    poolw_ref, poolb_ref, outw_ref, outb_ref,
    probs_ref,
    *, num_layers, num_heads, head_dim, eps, scale,
):
    H = num_heads * head_dim

    def layer_norm(x, g, b):
        mu = jnp.mean(x, axis=-1, keepdims=True)
        var = jnp.mean(jnp.square(x - mu), axis=-1, keepdims=True)
        return (x - mu) * jax.lax.rsqrt(var + eps) * g + b

    # ---- embedding LayerNorm ----
    h = layer_norm(emb_ref[0], ln0g_ref[...], ln0b_ref[...])        # (S, H)
    mask_bias = mask_ref[0]                                          # (1, S)

    # ---- encoder layers (statically unrolled; weights indexed per layer) ----
    for l in range(num_layers):
        x = h

        # fused QKV projection: (S, H) @ (H, 3H) + (1, 3H)
        qkv = jnp.dot(x, wqkv_ref[l], preferred_element_type=jnp.float32) + bqkv_ref[l]
        wo_l = wo_ref[l]                                             # (H, H)

        attn = jnp.zeros_like(x)                                     # (S, H)
        for hd in range(num_heads):
            c = hd * head_dim
            qh = qkv[:, c:c + head_dim]                              # (S, D)
            kh = qkv[:, H + c:H + c + head_dim]                      # (S, D)
            vh = qkv[:, 2 * H + c:2 * H + c + head_dim]              # (S, D)

            s = jnp.dot(qh, kh.T, preferred_element_type=jnp.float32) * scale + mask_bias
            s = s - jnp.max(s, axis=-1, keepdims=True)
            p = jnp.exp(s)
            p = p * pl.reciprocal(jnp.sum(p, axis=-1, keepdims=True), approx=True)
            ho = jnp.dot(p, vh, preferred_element_type=jnp.float32)  # (S, D)

            # head-merge + output projection fused:
            #   concat_h(ho) @ Wo  ==  sum_h  ho @ Wo[h*D:(h+1)*D, :]
            attn = attn + jnp.dot(ho, wo_l[c:c + head_dim, :],
                                  preferred_element_type=jnp.float32)

        attn = attn + bo_ref[l]
        h1 = layer_norm(x + attn, ln1g_ref[l], ln1b_ref[l])          # residual + LN1

        # feed-forward
        ff = jnp.dot(h1, w1_ref[l], preferred_element_type=jnp.float32) + b1_ref[l]
        ff = jax.nn.gelu(ff, approximate=True)   # TODO(synk): exact erf-based GELU
        ff = jnp.dot(ff, w2_ref[l], preferred_element_type=jnp.float32) + b2_ref[l]
        h = layer_norm(h1 + ff, ln2g_ref[l], ln2b_ref[l])            # residual + LN2

    # ---- pooler: tanh(Linear(CLS)); dropout(p=0.3) -> identity at inference ----
    cls = h[0:1, :]                                                  # (1, H)
    pooled = jnp.tanh(
        jnp.dot(cls, poolw_ref[...], preferred_element_type=jnp.float32) + poolb_ref[...]
    )

    # ---- classifier head + softmax into lane-dense (1, PAD_N) slab ----
    # padded columns carry bias -1e30 -> exp underflows to exactly 0, so the
    # softmax over the slab equals softmax over the real classes.
    logits = jnp.dot(pooled, outw_ref[...], preferred_element_type=jnp.float32) + outb_ref[...]
    logits = logits - jnp.max(logits, axis=-1, keepdims=True)
    e = jnp.exp(logits)
    probs_ref[0] = e / jnp.sum(e, axis=-1, keepdims=True)


# ----------------------------------------------------------------------------
# Model: parameters + forward
# ----------------------------------------------------------------------------

CFG = dict(
    vocab_size=100,
    max_pos=16,
    type_vocab=2,
    hidden=32,
    num_heads=2,
    head_dim=16,
    ffn=64,
    num_layers=2,
    n_classes=3,
)


def init_params(key, cfg):
    H, FF = cfg["hidden"], cfg["ffn"]
    std = 0.02

    def nrm(k, shape):
        return (std * jax.random.normal(k, shape)).astype(jnp.float32)

    keys = iter(jax.random.split(key, 64))
    p = {
        "word_emb": nrm(next(keys), (cfg["vocab_size"], H)),
        "pos_emb": nrm(next(keys), (cfg["max_pos"], H)),
        "type_emb": nrm(next(keys), (cfg["type_vocab"], H)),
        "emb_ln_g": jnp.ones((H,), jnp.float32),
        "emb_ln_b": jnp.zeros((H,), jnp.float32),
        "pool_w": nrm(next(keys), (H, H)),
        "pool_b": jnp.zeros((H,), jnp.float32),
        "out_w": nrm(next(keys), (H, cfg["n_classes"])),
        "out_b": jnp.zeros((cfg["n_classes"],), jnp.float32),
        "layers": [],
    }
    for _ in range(cfg["num_layers"]):
        layer = {
            "wq": nrm(next(keys), (H, H)), "bq": jnp.zeros((H,), jnp.float32),
            "wk": nrm(next(keys), (H, H)), "bk": jnp.zeros((H,), jnp.float32),
            "wv": nrm(next(keys), (H, H)), "bv": jnp.zeros((H,), jnp.float32),
            "wo": nrm(next(keys), (H, H)), "bo": jnp.zeros((H,), jnp.float32),
            "ln1_g": jnp.ones((H,), jnp.float32),
            "ln1_b": jnp.zeros((H,), jnp.float32),
            "w1": nrm(next(keys), (H, FF)), "b1": jnp.zeros((FF,), jnp.float32),
            "w2": nrm(next(keys), (FF, H)), "b2": jnp.zeros((H,), jnp.float32),
            "ln2_g": jnp.ones((H,), jnp.float32),
            "ln2_b": jnp.zeros((H,), jnp.float32),
        }
        p["layers"].append(layer)
    return p


def _full_spec(arr):
    """Whole-array VMEM block, same block for every grid step."""
    nd = arr.ndim
    return pl.BlockSpec(tuple(arr.shape), lambda b, _nd=nd: (0,) * _nd)


def _batch_spec(arr):
    """Block of size 1 along the leading (batch) axis; full on the rest."""
    nd = arr.ndim
    block = (1,) + tuple(arr.shape[1:])
    return pl.BlockSpec(block, lambda b, _nd=nd: (b,) + (0,) * (_nd - 1))


def job_posting_classifier_forward(params, input_ids, attention_mask, cfg):
    B, S = input_ids.shape
    H, NH, HD = cfg["hidden"], cfg["num_heads"], cfg["head_dim"]
    L, C = cfg["num_layers"], cfg["n_classes"]

    # ---- embeddings (gather is plain-JAX glue; LayerNorm runs in-kernel) ----
    we = params["word_emb"][input_ids]                    # (B, S, H)
    pe = params["pos_emb"][:S][None, :, :]                # (1, S, H)
    te = params["type_emb"][0][None, None, :]             # token_type_ids == 0
    emb = (we + pe + te).astype(jnp.float32)              # (B, S, H)

    # additive attention-mask bias, (B, 1, S)
    mask_bias = ((1.0 - attention_mask.astype(jnp.float32)) * (-1e9)).reshape(B, 1, S)

    # ---- stack per-layer weights; fuse Wq/Wk/Wv into one (H, 3H) matrix ----
    layers = params["layers"]
    stack = lambda name: jnp.stack([lyr[name] for lyr in layers])
    wqkv = jnp.stack([jnp.concatenate([l["wq"], l["wk"], l["wv"]], axis=1)
                      for l in layers])                                   # (L, H, 3H)
    bqkv = jnp.stack([jnp.concatenate([l["bq"], l["bk"], l["bv"]])[None, :]
                      for l in layers])                                   # (L, 1, 3H)
    wo = stack("wo")                                                      # (L, H, H)
    bo = stack("bo")[:, None, :]                                          # (L, 1, H)
    ln1g = stack("ln1_g")[:, None, :]
    ln1b = stack("ln1_b")[:, None, :]
    w1 = stack("w1")                                                      # (L, H, FF)
    b1 = stack("b1")[:, None, :]                                          # (L, 1, FF)
    w2 = stack("w2")                                                      # (L, FF, H)
    b2 = stack("b2")[:, None, :]
    ln2g = stack("ln2_g")[:, None, :]
    ln2b = stack("ln2_b")[:, None, :]

    ln0g = params["emb_ln_g"][None, :]                                    # (1, H)
    ln0b = params["emb_ln_b"][None, :]
    poolw = params["pool_w"]                                              # (H, H)
    poolb = params["pool_b"][None, :]                                     # (1, H)

    # lane-dense classifier head: pad N to 128; padded columns biased to -1e30
    outw = jnp.zeros((H, PAD_N), jnp.float32).at[:, :C].set(params["out_w"])
    outb = jnp.full((1, PAD_N), -1e30, jnp.float32).at[:, :C].set(params["out_b"][None, :])

    kernel = functools.partial(
        _fused_forward_kernel,
        num_layers=L, num_heads=NH, head_dim=HD,
        eps=1e-12, scale=1.0 / math.sqrt(HD),
    )

    inputs = (emb, mask_bias, ln0g, ln0b, wqkv, bqkv, wo, bo,
              ln1g, ln1b, w1, b1, w2, b2, ln2g, ln2b,
              poolw, poolb, outw, outb)
    in_specs = [
        _batch_spec(emb),        # (1, S, H) per batch element
        _batch_spec(mask_bias),  # (1, 1, S) per batch element
    ] + [_full_spec(a) for a in inputs[2:]]   # all weights fully resident

    probs_pad = pl.pallas_call(
        kernel,
        out_shape=jax.ShapeDtypeStruct((B, 1, PAD_N), jnp.float32),
        grid=(B,),
        in_specs=in_specs,
        out_specs=pl.BlockSpec((1, 1, PAD_N), lambda b: (b, 0, 0)),
        compiler_params=pltpu.CompilerParams(
            dimension_semantics=("parallel",)),    # v7x: batch split across 2 TCs
    )(*inputs)

    return probs_pad[:, 0, :C]                     # (B, n_classes)


# ----------------------------------------------------------------------------
# Main
# ----------------------------------------------------------------------------

if __name__ == "__main__":
    key = jax.random.PRNGKey(0)
    k_param, k_ids = jax.random.split(key)

    params = init_params(k_param, CFG)

    B, S = 2, 8
    input_ids = jax.random.randint(k_ids, (B, S), 0, CFG["vocab_size"], dtype=jnp.int32)
    attention_mask = jnp.ones((B, S), dtype=jnp.int32)
    # mask out the last two tokens of sequence 1 to exercise the mask path
    attention_mask = attention_mask.at[1, 6:].set(0)

    probs = job_posting_classifier_forward(params, input_ids, attention_mask, CFG)
    probs = jax.block_until_ready(probs)

    assert probs.shape == (B, CFG["n_classes"])
    assert bool(jnp.all(jnp.isfinite(probs)))
    assert bool(jnp.allclose(jnp.sum(probs, axis=1), 1.0, atol=1e-5))
    print("KERNEL_OK")
</pallas_src>

<mosaic_0001>
module attributes {stable_mosaic.version = 11 : i64} {
  func.func @_fused_forward_kernel(%arg0: i32, %arg1: memref<1x8x32xf32, #tpu.memory_space<vmem>>, %arg2: memref<1x1x8xf32, #tpu.memory_space<vmem>>, %arg3: memref<1x32xf32, #tpu.memory_space<vmem>>, %arg4: memref<1x32xf32, #tpu.memory_space<vmem>>, %arg5: memref<2x32x96xf32, #tpu.memory_space<vmem>>, %arg6: memref<2x1x96xf32, #tpu.memory_space<vmem>>, %arg7: memref<2x32x32xf32, #tpu.memory_space<vmem>>, %arg8: memref<2x1x32xf32, #tpu.memory_space<vmem>>, %arg9: memref<2x1x32xf32, #tpu.memory_space<vmem>>, %arg10: memref<2x1x32xf32, #tpu.memory_space<vmem>>, %arg11: memref<2x32x64xf32, #tpu.memory_space<vmem>>, %arg12: memref<2x1x64xf32, #tpu.memory_space<vmem>>, %arg13: memref<2x64x32xf32, #tpu.memory_space<vmem>>, %arg14: memref<2x1x32xf32, #tpu.memory_space<vmem>>, %arg15: memref<2x1x32xf32, #tpu.memory_space<vmem>>, %arg16: memref<2x1x32xf32, #tpu.memory_space<vmem>>, %arg17: memref<32x32xf32, #tpu.memory_space<vmem>>, %arg18: memref<1x32xf32, #tpu.memory_space<vmem>>, %arg19: memref<32x128xf32, #tpu.memory_space<vmem>>, %arg20: memref<1x128xf32, #tpu.memory_space<vmem>>, %arg21: memref<1x1x128xf32, #tpu.memory_space<vmem>>) attributes {dimension_semantics = [#tpu.dimension_semantics<parallel>], iteration_bounds = array<i64: 2>, scalar_prefetch = 0 : i64, scratch_operands = 0 : i64, tpu.core_type = #tpu.core_type<tc>, window_params = [{transform_indices = @transform_0, window_bounds = array<i64: 1, 8, 32>}, {transform_indices = @transform_1, window_bounds = array<i64: 1, 1, 8>}, {pipeline_mode = #tpu.pipeline_mode<synchronous>, transform_indices = @transform_2, window_bounds = array<i64: 1, 32>}, {pipeline_mode = #tpu.pipeline_mode<synchronous>, transform_indices = @transform_3, window_bounds = array<i64: 1, 32>}, {pipeline_mode = #tpu.pipeline_mode<synchronous>, transform_indices = @transform_4, window_bounds = array<i64: 2, 32, 96>}, {pipeline_mode = #tpu.pipeline_mode<synchronous>, transform_indices = @transform_5, window_bounds = array<i64: 2, 1, 96>}, {pipeline_mode = #tpu.pipeline_mode<synchronous>, transform_indices = @transform_6, window_bounds = array<i64: 2, 32, 32>}, {pipeline_mode = #tpu.pipeline_mode<synchronous>, transform_indices = @transform_7, window_bounds = array<i64: 2, 1, 32>}, {pipeline_mode = #tpu.pipeline_mode<synchronous>, transform_indices = @transform_8, window_bounds = array<i64: 2, 1, 32>}, {pipeline_mode = #tpu.pipeline_mode<synchronous>, transform_indices = @transform_9, window_bounds = array<i64: 2, 1, 32>}, {pipeline_mode = #tpu.pipeline_mode<synchronous>, transform_indices = @transform_10, window_bounds = array<i64: 2, 32, 64>}, {pipeline_mode = #tpu.pipeline_mode<synchronous>, transform_indices = @transform_11, window_bounds = array<i64: 2, 1, 64>}, {pipeline_mode = #tpu.pipeline_mode<synchronous>, transform_indices = @transform_12, window_bounds = array<i64: 2, 64, 32>}, {pipeline_mode = #tpu.pipeline_mode<synchronous>, transform_indices = @transform_13, window_bounds = array<i64: 2, 1, 32>}, {pipeline_mode = #tpu.pipeline_mode<synchronous>, transform_indices = @transform_14, window_bounds = array<i64: 2, 1, 32>}, {pipeline_mode = #tpu.pipeline_mode<synchronous>, transform_indices = @transform_15, window_bounds = array<i64: 2, 1, 32>}, {pipeline_mode = #tpu.pipeline_mode<synchronous>, transform_indices = @transform_16, window_bounds = array<i64: 32, 32>}, {pipeline_mode = #tpu.pipeline_mode<synchronous>, transform_indices = @transform_17, window_bounds = array<i64: 1, 32>}, {pipeline_mode = #tpu.pipeline_mode<synchronous>, transform_indices = @transform_18, window_bounds = array<i64: 32, 128>}, {pipeline_mode = #tpu.pipeline_mode<synchronous>, transform_indices = @transform_19, window_bounds = array<i64: 1, 128>}, {transform_indices = @transform_20, window_bounds = array<i64: 1, 1, 128>}]} {
    %c0 = arith.constant 0 : index
    %c0_0 = arith.constant 0 : index
    %c0_1 = arith.constant 0 : index
    %0 = vector.load %arg1[%c0, %c0_0, %c0_1] : memref<1x8x32xf32, #tpu.memory_space<vmem>>, vector<1x8x32xf32>
    %1 = vector.shape_cast %0 : vector<1x8x32xf32> to vector<8x32xf32>
    %c0_2 = arith.constant 0 : index
    %c0_3 = arith.constant 0 : index
    %2 = vector.load %arg3[%c0_2, %c0_3] : memref<1x32xf32, #tpu.memory_space<vmem>>, vector<1x32xf32>
    %c0_4 = arith.constant 0 : index
    %c0_5 = arith.constant 0 : index
    %3 = vector.load %arg4[%c0_4, %c0_5] : memref<1x32xf32, #tpu.memory_space<vmem>>, vector<1x32xf32>
    %cst = arith.constant dense<0.000000e+00> : vector<8xf32>
    %4 = vector.multi_reduction <add>, %1, %cst [1] : vector<8x32xf32> to vector<8xf32>
    %5 = vector.shape_cast %4 : vector<8xf32> to vector<8x1xf32>
    %cst_6 = arith.constant 3.200000e+01 : f32
    %6 = vector.broadcast %cst_6 : f32 to vector<8x1xf32>
    %7 = arith.divf %5, %6 : vector<8x1xf32>
    %8 = vector.broadcast %7 : vector<8x1xf32> to vector<8x32xf32>
    %9 = arith.subf %1, %8 : vector<8x32xf32>
    %10 = arith.mulf %9, %9 : vector<8x32xf32>
    %cst_7 = arith.constant dense<0.000000e+00> : vector<8xf32>
    %11 = vector.multi_reduction <add>, %10, %cst_7 [1] : vector<8x32xf32> to vector<8xf32>
    %12 = vector.shape_cast %11 : vector<8xf32> to vector<8x1xf32>
    %cst_8 = arith.constant 3.200000e+01 : f32
    %13 = vector.broadcast %cst_8 : f32 to vector<8x1xf32>
    %14 = arith.divf %12, %13 : vector<8x1xf32>
    %15 = vector.broadcast %7 : vector<8x1xf32> to vector<8x32xf32>
    %16 = arith.subf %1, %15 : vector<8x32xf32>
    %cst_9 = arith.constant 9.99999996E-13 : f32
    %17 = vector.broadcast %cst_9 : f32 to vector<8x1xf32>
    %18 = arith.addf %14, %17 : vector<8x1xf32>
    %19 = math.rsqrt %18 : vector<8x1xf32>
    %20 = vector.broadcast %19 : vector<8x1xf32> to vector<8x32xf32>
    %21 = arith.mulf %16, %20 : vector<8x32xf32>
    %22 = vector.broadcast %2 : vector<1x32xf32> to vector<8x32xf32>
    %23 = arith.mulf %21, %22 : vector<8x32xf32>
    %24 = vector.broadcast %3 : vector<1x32xf32> to vector<8x32xf32>
    %25 = arith.addf %23, %24 : vector<8x32xf32>
    %c0_10 = arith.constant 0 : index
    %c0_11 = arith.constant 0 : index
    %c0_12 = arith.constant 0 : index
    %26 = vector.load %arg2[%c0_10, %c0_11, %c0_12] : memref<1x1x8xf32, #tpu.memory_space<vmem>>, vector<1x1x8xf32>
    %27 = vector.shape_cast %26 : vector<1x1x8xf32> to vector<1x8xf32>
    %c0_13 = arith.constant 0 : index
    %c0_14 = arith.constant 0 : index
    %c0_15 = arith.constant 0 : index
    %28 = vector.load %arg5[%c0_13, %c0_14, %c0_15] : memref<2x32x96xf32, #tpu.memory_space<vmem>>, vector<1x32x96xf32>
    %29 = vector.shape_cast %28 : vector<1x32x96xf32> to vector<32x96xf32>
    %cst_16 = arith.constant dense<0.000000e+00> : vector<8x96xf32>
    %30 = tpu.matmul %25, %29, %cst_16 {dimension_numbers = #tpu.dot_dimension_numbers<[1], [0], [0], [1], [0, 0, 1, 1], [], []>} : vector<8x32xf32>, vector<32x96xf32>, vector<8x96xf32> -> vector<8x96xf32>
    %c0_17 = arith.constant 0 : index
    %c0_18 = arith.constant 0 : index
    %c0_19 = arith.constant 0 : index
    %31 = vector.load %arg6[%c0_17, %c0_18, %c0_19] : memref<2x1x96xf32, #tpu.memory_space<vmem>>, vector<1x1x96xf32>
    %32 = vector.shape_cast %31 : vector<1x1x96xf32> to vector<1x96xf32>
    %33 = vector.broadcast %32 : vector<1x96xf32> to vector<8x96xf32>
    %34 = arith.addf %30, %33 : vector<8x96xf32>
    %c0_20 = arith.constant 0 : index
    %c0_21 = arith.constant 0 : index
    %c0_22 = arith.constant 0 : index
    %35 = vector.load %arg7[%c0_20, %c0_21, %c0_22] : memref<2x32x32xf32, #tpu.memory_space<vmem>>, vector<1x32x32xf32>
    %36 = vector.shape_cast %35 : vector<1x32x32xf32> to vector<32x32xf32>
    %cst_23 = arith.constant 0.000000e+00 : f32
    %37 = vector.broadcast %cst_23 : f32 to vector<8x32xf32>
    %38 = vector.extract_strided_slice %34 {offsets = [0, 0], sizes = [8, 16], strides = [1, 1]} : vector<8x96xf32> to vector<8x16xf32>
    %39 = vector.extract_strided_slice %34 {offsets = [0, 32], sizes = [8, 16], strides = [1, 1]} : vector<8x96xf32> to vector<8x16xf32>
    %40 = vector.extract_strided_slice %34 {offsets = [0, 64], sizes = [8, 16], strides = [1, 1]} : vector<8x96xf32> to vector<8x16xf32>
    %41 = tpu.transpose %39, [1, 0] : vector<8x16xf32> -> vector<16x8xf32>
    %cst_24 = arith.constant dense<0.000000e+00> : vector<8x8xf32>
    %42 = tpu.matmul %38, %41, %cst_24 {dimension_numbers = #tpu.dot_dimension_numbers<[1], [0], [0], [1], [0, 0, 1, 1], [], []>} : vector<8x16xf32>, vector<16x8xf32>, vector<8x8xf32> -> vector<8x8xf32>
    %cst_25 = arith.constant 2.500000e-01 : f32
    %43 = vector.broadcast %cst_25 : f32 to vector<8x8xf32>
    %44 = arith.mulf %42, %43 : vector<8x8xf32>
    %45 = vector.broadcast %27 : vector<1x8xf32> to vector<8x8xf32>
    %46 = arith.addf %44, %45 : vector<8x8xf32>
    %cst_26 = arith.constant dense<0xFF800000> : vector<8xf32>
    %47 = vector.multi_reduction <maximumf>, %46, %cst_26 [1] : vector<8x8xf32> to vector<8xf32>
    %48 = vector.shape_cast %47 : vector<8xf32> to vector<8x1xf32>
    %49 = vector.broadcast %48 : vector<8x1xf32> to vector<8x8xf32>
    %50 = arith.subf %46, %49 : vector<8x8xf32>
    %51 = math.exp %50 : vector<8x8xf32>
    %cst_27 = arith.constant dense<0.000000e+00> : vector<8xf32>
    %52 = vector.multi_reduction <add>, %51, %cst_27 [1] : vector<8x8xf32> to vector<8xf32>
    %53 = vector.shape_cast %52 : vector<8xf32> to vector<8x1xf32>
    %54 = tpu.reciprocal %53 {approx = true} : vector<8x1xf32> -> vector<8x1xf32>
    %55 = vector.broadcast %54 : vector<8x1xf32> to vector<8x8xf32>
    %56 = arith.mulf %51, %55 : vector<8x8xf32>
    %cst_28 = arith.constant dense<0.000000e+00> : vector<8x16xf32>
    %57 = tpu.matmul %56, %40, %cst_28 {dimension_numbers = #tpu.dot_dimension_numbers<[1], [0], [0], [1], [0, 0, 1, 1], [], []>} : vector<8x8xf32>, vector<8x16xf32>, vector<8x16xf32> -> vector<8x16xf32>
    %58 = vector.extract_strided_slice %36 {offsets = [0, 0], sizes = [16, 32], strides = [1, 1]} : vector<32x32xf32> to vector<16x32xf32>
    %cst_29 = arith.constant dense<0.000000e+00> : vector<8x32xf32>
    %59 = tpu.matmul %57, %58, %cst_29 {dimension_numbers = #tpu.dot_dimension_numbers<[1], [0], [0], [1], [0, 0, 1, 1], [], []>} : vector<8x16xf32>, vector<16x32xf32>, vector<8x32xf32> -> vector<8x32xf32>
    %60 = arith.addf %37, %59 : vector<8x32xf32>
    %61 = vector.extract_strided_slice %34 {offsets = [0, 16], sizes = [8, 16], strides = [1, 1]} : vector<8x96xf32> to vector<8x16xf32>
    %62 = vector.extract_strided_slice %34 {offsets = [0, 48], sizes = [8, 16], strides = [1, 1]} : vector<8x96xf32> to vector<8x16xf32>
    %63 = vector.extract_strided_slice %34 {offsets = [0, 80], sizes = [8, 16], strides = [1, 1]} : vector<8x96xf32> to vector<8x16xf32>
    %64 = tpu.transpose %62, [1, 0] : vector<8x16xf32> -> vector<16x8xf32>
    %cst_30 = arith.constant dense<0.000000e+00> : vector<8x8xf32>
    %65 = tpu.matmul %61, %64, %cst_30 {dimension_numbers = #tpu.dot_dimension_numbers<[1], [0], [0], [1], [0, 0, 1, 1], [], []>} : vector<8x16xf32>, vector<16x8xf32>, vector<8x8xf32> -> vector<8x8xf32>
    %cst_31 = arith.constant 2.500000e-01 : f32
    %66 = vector.broadcast %cst_31 : f32 to vector<8x8xf32>
    %67 = arith.mulf %65, %66 : vector<8x8xf32>
    %68 = vector.broadcast %27 : vector<1x8xf32> to vector<8x8xf32>
    %69 = arith.addf %67, %68 : vector<8x8xf32>
    %cst_32 = arith.constant dense<0xFF800000> : vector<8xf32>
    %70 = vector.multi_reduction <maximumf>, %69, %cst_32 [1] : vector<8x8xf32> to vector<8xf32>
    %71 = vector.shape_cast %70 : vector<8xf32> to vector<8x1xf32>
    %72 = vector.broadcast %71 : vector<8x1xf32> to vector<8x8xf32>
    %73 = arith.subf %69, %72 : vector<8x8xf32>
    %74 = math.exp %73 : vector<8x8xf32>
    %cst_33 = arith.constant dense<0.000000e+00> : vector<8xf32>
    %75 = vector.multi_reduction <add>, %74, %cst_33 [1] : vector<8x8xf32> to vector<8xf32>
    %76 = vector.shape_cast %75 : vector<8xf32> to vector<8x1xf32>
    %77 = tpu.reciprocal %76 {approx = true} : vector<8x1xf32> -> vector<8x1xf32>
    %78 = vector.broadcast %77 : vector<8x1xf32> to vector<8x8xf32>
    %79 = arith.mulf %74, %78 : vector<8x8xf32>
    %cst_34 = arith.constant dense<0.000000e+00> : vector<8x16xf32>
    %80 = tpu.matmul %79, %63, %cst_34 {dimension_numbers = #tpu.dot_dimension_numbers<[1], [0], [0], [1], [0, 0, 1, 1], [], []>} : vector<8x8xf32>, vector<8x16xf32>, vector<8x16xf32> -> vector<8x16xf32>
    %81 = vector.extract_strided_slice %36 {offsets = [16, 0], sizes = [16, 32], strides = [1, 1]} : vector<32x32xf32> to vector<16x32xf32>
    %cst_35 = arith.constant dense<0.000000e+00> : vector<8x32xf32>
    %82 = tpu.matmul %80, %81, %cst_35 {dimension_numbers = #tpu.dot_dimension_numbers<[1], [0], [0], [1], [0, 0, 1, 1], [], []>} : vector<8x16xf32>, vector<16x32xf32>, vector<8x32xf32> -> vector<8x32xf32>
    %83 = arith.addf %60, %82 : vector<8x32xf32>
    %c0_36 = arith.constant 0 : index
    %c0_37 = arith.constant 0 : index
    %c0_38 = arith.constant 0 : index
    %84 = vector.load %arg8[%c0_36, %c0_37, %c0_38] : memref<2x1x32xf32, #tpu.memory_space<vmem>>, vector<1x1x32xf32>
    %85 = vector.shape_cast %84 : vector<1x1x32xf32> to vector<1x32xf32>
    %86 = vector.broadcast %85 : vector<1x32xf32> to vector<8x32xf32>
    %87 = arith.addf %83, %86 : vector<8x32xf32>
    %88 = arith.addf %25, %87 : vector<8x32xf32>
    %c0_39 = arith.constant 0 : index
    %c0_40 = arith.constant 0 : index
    %c0_41 = arith.constant 0 : index
    %89 = vector.load %arg9[%c0_39, %c0_40, %c0_41] : memref<2x1x32xf32, #tpu.memory_space<vmem>>, vector<1x1x32xf32>
    %90 = vector.shape_cast %89 : vector<1x1x32xf32> to vector<1x32xf32>
    %c0_42 = arith.constant 0 : index
    %c0_43 = arith.constant 0 : index
    %c0_44 = arith.constant 0 : index
    %91 = vector.load %arg10[%c0_42, %c0_43, %c0_44] : memref<2x1x32xf32, #tpu.memory_space<vmem>>, vector<1x1x32xf32>
    %92 = vector.shape_cast %91 : vector<1x1x32xf32> to vector<1x32xf32>
    %cst_45 = arith.constant dense<0.000000e+00> : vector<8xf32>
    %93 = vector.multi_reduction <add>, %88, %cst_45 [1] : vector<8x32xf32> to vector<8xf32>
    %94 = vector.shape_cast %93 : vector<8xf32> to vector<8x1xf32>
    %cst_46 = arith.constant 3.200000e+01 : f32
    %95 = vector.broadcast %cst_46 : f32 to vector<8x1xf32>
    %96 = arith.divf %94, %95 : vector<8x1xf32>
    %97 = vector.broadcast %96 : vector<8x1xf32> to vector<8x32xf32>
    %98 = arith.subf %88, %97 : vector<8x32xf32>
    %99 = arith.mulf %98, %98 : vector<8x32xf32>
    %cst_47 = arith.constant dense<0.000000e+00> : vector<8xf32>
    %100 = vector.multi_reduction <add>, %99, %cst_47 [1] : vector<8x32xf32> to vector<8xf32>
    %101 = vector.shape_cast %100 : vector<8xf32> to vector<8x1xf32>
    %cst_48 = arith.constant 3.200000e+01 : f32
    %102 = vector.broadcast %cst_48 : f32 to vector<8x1xf32>
    %103 = arith.divf %101, %102 : vector<8x1xf32>
    %104 = vector.broadcast %96 : vector<8x1xf32> to vector<8x32xf32>
    %105 = arith.subf %88, %104 : vector<8x32xf32>
    %cst_49 = arith.constant 9.99999996E-13 : f32
    %106 = vector.broadcast %cst_49 : f32 to vector<8x1xf32>
    %107 = arith.addf %103, %106 : vector<8x1xf32>
    %108 = math.rsqrt %107 : vector<8x1xf32>
    %109 = vector.broadcast %108 : vector<8x1xf32> to vector<8x32xf32>
    %110 = arith.mulf %105, %109 : vector<8x32xf32>
    %111 = vector.broadcast %90 : vector<1x32xf32> to vector<8x32xf32>
    %112 = arith.mulf %110, %111 : vector<8x32xf32>
    %113 = vector.broadcast %92 : vector<1x32xf32> to vector<8x32xf32>
    %114 = arith.addf %112, %113 : vector<8x32xf32>
    %c0_50 = arith.constant 0 : index
    %c0_51 = arith.constant 0 : index
    %c0_52 = arith.constant 0 : index
    %115 = vector.load %arg11[%c0_50, %c0_51, %c0_52] : memref<2x32x64xf32, #tpu.memory_space<vmem>>, vector<1x32x64xf32>
    %116 = vector.shape_cast %115 : vector<1x32x64xf32> to vector<32x64xf32>
    %cst_53 = arith.constant dense<0.000000e+00> : vector<8x64xf32>
    %117 = tpu.matmul %114, %116, %cst_53 {dimension_numbers = #tpu.dot_dimension_numbers<[1], [0], [0], [1], [0, 0, 1, 1], [], []>} : vector<8x32xf32>, vector<32x64xf32>, vector<8x64xf32> -> vector<8x64xf32>
    %c0_54 = arith.constant 0 : index
    %c0_55 = arith.constant 0 : index
    %c0_56 = arith.constant 0 : index
    %118 = vector.load %arg12[%c0_54, %c0_55, %c0_56] : memref<2x1x64xf32, #tpu.memory_space<vmem>>, vector<1x1x64xf32>
    %119 = vector.shape_cast %118 : vector<1x1x64xf32> to vector<1x64xf32>
    %120 = vector.broadcast %119 : vector<1x64xf32> to vector<8x64xf32>
    %121 = arith.addf %117, %120 : vector<8x64xf32>
    %122 = arith.mulf %121, %121 : vector<8x64xf32>
    %123 = arith.mulf %121, %122 : vector<8x64xf32>
    %cst_57 = arith.constant 4.471500e-02 : f32
    %124 = vector.broadcast %cst_57 : f32 to vector<8x64xf32>
    %125 = arith.mulf %124, %123 : vector<8x64xf32>
    %126 = arith.addf %121, %125 : vector<8x64xf32>
    %cst_58 = arith.constant 0.797884583 : f32
    %127 = vector.broadcast %cst_58 : f32 to vector<8x64xf32>
    %128 = arith.mulf %127, %126 : vector<8x64xf32>
    %129 = math.tanh %128 : vector<8x64xf32>
    %cst_59 = arith.constant 1.000000e+00 : f32
    %130 = vector.broadcast %cst_59 : f32 to vector<8x64xf32>
    %131 = arith.addf %130, %129 : vector<8x64xf32>
    %cst_60 = arith.constant 5.000000e-01 : f32
    %132 = vector.broadcast %cst_60 : f32 to vector<8x64xf32>
    %133 = arith.mulf %132, %131 : vector<8x64xf32>
    %134 = arith.mulf %121, %133 : vector<8x64xf32>
    %c0_61 = arith.constant 0 : index
    %c0_62 = arith.constant 0 : index
    %c0_63 = arith.constant 0 : index
    %135 = vector.load %arg13[%c0_61, %c0_62, %c0_63] : memref<2x64x32xf32, #tpu.memory_space<vmem>>, vector<1x64x32xf32>
    %136 = vector.shape_cast %135 : vector<1x64x32xf32> to vector<64x32xf32>
    %cst_64 = arith.constant dense<0.000000e+00> : vector<8x32xf32>
    %137 = tpu.matmul %134, %136, %cst_64 {dimension_numbers = #tpu.dot_dimension_numbers<[1], [0], [0], [1], [0, 0, 1, 1], [], []>} : vector<8x64xf32>, vector<64x32xf32>, vector<8x32xf32> -> vector<8x32xf32>
    %c0_65 = arith.constant 0 : index
    %c0_66 = arith.constant 0 : index
    %c0_67 = arith.constant 0 : index
    %138 = vector.load %arg14[%c0_65, %c0_66, %c0_67] : memref<2x1x32xf32, #tpu.memory_space<vmem>>, vector<1x1x32xf32>
    %139 = vector.shape_cast %138 : vector<1x1x32xf32> to vector<1x32xf32>
    %140 = vector.broadcast %139 : vector<1x32xf32> to vector<8x32xf32>
    %141 = arith.addf %137, %140 : vector<8x32xf32>
    %142 = arith.addf %114, %141 : vector<8x32xf32>
    %c0_68 = arith.constant 0 : index
    %c0_69 = arith.constant 0 : index
    %c0_70 = arith.constant 0 : index
    %143 = vector.load %arg15[%c0_68, %c0_69, %c0_70] : memref<2x1x32xf32, #tpu.memory_space<vmem>>, vector<1x1x32xf32>
    %144 = vector.shape_cast %143 : vector<1x1x32xf32> to vector<1x32xf32>
    %c0_71 = arith.constant 0 : index
    %c0_72 = arith.constant 0 : index
    %c0_73 = arith.constant 0 : index
    %145 = vector.load %arg16[%c0_71, %c0_72, %c0_73] : memref<2x1x32xf32, #tpu.memory_space<vmem>>, vector<1x1x32xf32>
    %146 = vector.shape_cast %145 : vector<1x1x32xf32> to vector<1x32xf32>
    %cst_74 = arith.constant dense<0.000000e+00> : vector<8xf32>
    %147 = vector.multi_reduction <add>, %142, %cst_74 [1] : vector<8x32xf32> to vector<8xf32>
    %148 = vector.shape_cast %147 : vector<8xf32> to vector<8x1xf32>
    %cst_75 = arith.constant 3.200000e+01 : f32
    %149 = vector.broadcast %cst_75 : f32 to vector<8x1xf32>
    %150 = arith.divf %148, %149 : vector<8x1xf32>
    %151 = vector.broadcast %150 : vector<8x1xf32> to vector<8x32xf32>
    %152 = arith.subf %142, %151 : vector<8x32xf32>
    %153 = arith.mulf %152, %152 : vector<8x32xf32>
    %cst_76 = arith.constant dense<0.000000e+00> : vector<8xf32>
    %154 = vector.multi_reduction <add>, %153, %cst_76 [1] : vector<8x32xf32> to vector<8xf32>
    %155 = vector.shape_cast %154 : vector<8xf32> to vector<8x1xf32>
    %cst_77 = arith.constant 3.200000e+01 : f32
    %156 = vector.broadcast %cst_77 : f32 to vector<8x1xf32>
    %157 = arith.divf %155, %156 : vector<8x1xf32>
    %158 = vector.broadcast %150 : vector<8x1xf32> to vector<8x32xf32>
    %159 = arith.subf %142, %158 : vector<8x32xf32>
    %cst_78 = arith.constant 9.99999996E-13 : f32
    %160 = vector.broadcast %cst_78 : f32 to vector<8x1xf32>
    %161 = arith.addf %157, %160 : vector<8x1xf32>
    %162 = math.rsqrt %161 : vector<8x1xf32>
    %163 = vector.broadcast %162 : vector<8x1xf32> to vector<8x32xf32>
    %164 = arith.mulf %159, %163 : vector<8x32xf32>
    %165 = vector.broadcast %144 : vector<1x32xf32> to vector<8x32xf32>
    %166 = arith.mulf %164, %165 : vector<8x32xf32>
    %167 = vector.broadcast %146 : vector<1x32xf32> to vector<8x32xf32>
    %168 = arith.addf %166, %167 : vector<8x32xf32>
    %c1 = arith.constant 1 : index
    %c0_79 = arith.constant 0 : index
    %c0_80 = arith.constant 0 : index
    %169 = vector.load %arg5[%c1, %c0_79, %c0_80] : memref<2x32x96xf32, #tpu.memory_space<vmem>>, vector<1x32x96xf32>
    %170 = vector.shape_cast %169 : vector<1x32x96xf32> to vector<32x96xf32>
    %cst_81 = arith.constant dense<0.000000e+00> : vector<8x96xf32>
    %171 = tpu.matmul %168, %170, %cst_81 {dimension_numbers = #tpu.dot_dimension_numbers<[1], [0], [0], [1], [0, 0, 1, 1], [], []>} : vector<8x32xf32>, vector<32x96xf32>, vector<8x96xf32> -> vector<8x96xf32>
    %c1_82 = arith.constant 1 : index
    %c0_83 = arith.constant 0 : index
    %c0_84 = arith.constant 0 : index
    %172 = vector.load %arg6[%c1_82, %c0_83, %c0_84] : memref<2x1x96xf32, #tpu.memory_space<vmem>>, vector<1x1x96xf32>
    %173 = vector.shape_cast %172 : vector<1x1x96xf32> to vector<1x96xf32>
    %174 = vector.broadcast %173 : vector<1x96xf32> to vector<8x96xf32>
    %175 = arith.addf %171, %174 : vector<8x96xf32>
    %c1_85 = arith.constant 1 : index
    %c0_86 = arith.constant 0 : index
    %c0_87 = arith.constant 0 : index
    %176 = vector.load %arg7[%c1_85, %c0_86, %c0_87] : memref<2x32x32xf32, #tpu.memory_space<vmem>>, vector<1x32x32xf32>
    %177 = vector.shape_cast %176 : vector<1x32x32xf32> to vector<32x32xf32>
    %cst_88 = arith.constant 0.000000e+00 : f32
    %178 = vector.broadcast %cst_88 : f32 to vector<8x32xf32>
    %179 = vector.extract_strided_slice %175 {offsets = [0, 0], sizes = [8, 16], strides = [1, 1]} : vector<8x96xf32> to vector<8x16xf32>
    %180 = vector.extract_strided_slice %175 {offsets = [0, 32], sizes = [8, 16], strides = [1, 1]} : vector<8x96xf32> to vector<8x16xf32>
    %181 = vector.extract_strided_slice %175 {offsets = [0, 64], sizes = [8, 16], strides = [1, 1]} : vector<8x96xf32> to vector<8x16xf32>
    %182 = tpu.transpose %180, [1, 0] : vector<8x16xf32> -> vector<16x8xf32>
    %cst_89 = arith.constant dense<0.000000e+00> : vector<8x8xf32>
    %183 = tpu.matmul %179, %182, %cst_89 {dimension_numbers = #tpu.dot_dimension_numbers<[1], [0], [0], [1], [0, 0, 1, 1], [], []>} : vector<8x16xf32>, vector<16x8xf32>, vector<8x8xf32> -> vector<8x8xf32>
    %cst_90 = arith.constant 2.500000e-01 : f32
    %184 = vector.broadcast %cst_90 : f32 to vector<8x8xf32>
    %185 = arith.mulf %183, %184 : vector<8x8xf32>
    %186 = vector.broadcast %27 : vector<1x8xf32> to vector<8x8xf32>
    %187 = arith.addf %185, %186 : vector<8x8xf32>
    %cst_91 = arith.constant dense<0xFF800000> : vector<8xf32>
    %188 = vector.multi_reduction <maximumf>, %187, %cst_91 [1] : vector<8x8xf32> to vector<8xf32>
    %189 = vector.shape_cast %188 : vector<8xf32> to vector<8x1xf32>
    %190 = vector.broadcast %189 : vector<8x1xf32> to vector<8x8xf32>
    %191 = arith.subf %187, %190 : vector<8x8xf32>
    %192 = math.exp %191 : vector<8x8xf32>
    %cst_92 = arith.constant dense<0.000000e+00> : vector<8xf32>
    %193 = vector.multi_reduction <add>, %192, %cst_92 [1] : vector<8x8xf32> to vector<8xf32>
    %194 = vector.shape_cast %193 : vector<8xf32> to vector<8x1xf32>
    %195 = tpu.reciprocal %194 {approx = true} : vector<8x1xf32> -> vector<8x1xf32>
    %196 = vector.broadcast %195 : vector<8x1xf32> to vector<8x8xf32>
    %197 = arith.mulf %192, %196 : vector<8x8xf32>
    %cst_93 = arith.constant dense<0.000000e+00> : vector<8x16xf32>
    %198 = tpu.matmul %197, %181, %cst_93 {dimension_numbers = #tpu.dot_dimension_numbers<[1], [0], [0], [1], [0, 0, 1, 1], [], []>} : vector<8x8xf32>, vector<8x16xf32>, vector<8x16xf32> -> vector<8x16xf32>
    %199 = vector.extract_strided_slice %177 {offsets = [0, 0], sizes = [16, 32], strides = [1, 1]} : vector<32x32xf32> to vector<16x32xf32>
    %cst_94 = arith.constant dense<0.000000e+00> : vector<8x32xf32>
    %200 = tpu.matmul %198, %199, %cst_94 {dimension_numbers = #tpu.dot_dimension_numbers<[1], [0], [0], [1], [0, 0, 1, 1], [], []>} : vector<8x16xf32>, vector<16x32xf32>, vector<8x32xf32> -> vector<8x32xf32>
    %201 = arith.addf %178, %200 : vector<8x32xf32>
    %202 = vector.extract_strided_slice %175 {offsets = [0, 16], sizes = [8, 16], strides = [1, 1]} : vector<8x96xf32> to vector<8x16xf32>
    %203 = vector.extract_strided_slice %175 {offsets = [0, 48], sizes = [8, 16], strides = [1, 1]} : vector<8x96xf32> to vector<8x16xf32>
    %204 = vector.extract_strided_slice %175 {offsets = [0, 80], sizes = [8, 16], strides = [1, 1]} : vector<8x96xf32> to vector<8x16xf32>
    %205 = tpu.transpose %203, [1, 0] : vector<8x16xf32> -> vector<16x8xf32>
    %cst_95 = arith.constant dense<0.000000e+00> : vector<8x8xf32>
    %206 = tpu.matmul %202, %205, %cst_95 {dimension_numbers = #tpu.dot_dimension_numbers<[1], [0], [0], [1], [0, 0, 1, 1], [], []>} : vector<8x16xf32>, vector<16x8xf32>, vector<8x8xf32> -> vector<8x8xf32>
    %cst_96 = arith.constant 2.500000e-01 : f32
    %207 = vector.broadcast %cst_96 : f32 to vector<8x8xf32>
    %208 = arith.mulf %206, %207 : vector<8x8xf32>
    %209 = vector.broadcast %27 : vector<1x8xf32> to vector<8x8xf32>
    %210 = arith.addf %208, %209 : vector<8x8xf32>
    %cst_97 = arith.constant dense<0xFF800000> : vector<8xf32>
    %211 = vector.multi_reduction <maximumf>, %210, %cst_97 [1] : vector<8x8xf32> to vector<8xf32>
    %212 = vector.shape_cast %211 : vector<8xf32> to vector<8x1xf32>
    %213 = vector.broadcast %212 : vector<8x1xf32> to vector<8x8xf32>
    %214 = arith.subf %210, %213 : vector<8x8xf32>
    %215 = math.exp %214 : vector<8x8xf32>
    %cst_98 = arith.constant dense<0.000000e+00> : vector<8xf32>
    %216 = vector.multi_reduction <add>, %215, %cst_98 [1] : vector<8x8xf32> to vector<8xf32>
    %217 = vector.shape_cast %216 : vector<8xf32> to vector<8x1xf32>
    %218 = tpu.reciprocal %217 {approx = true} : vector<8x1xf32> -> vector<8x1xf32>
    %219 = vector.broadcast %218 : vector<8x1xf32> to vector<8x8xf32>
    %220 = arith.mulf %215, %219 : vector<8x8xf32>
    %cst_99 = arith.constant dense<0.000000e+00> : vector<8x16xf32>
    %221 = tpu.matmul %220, %204, %cst_99 {dimension_numbers = #tpu.dot_dimension_numbers<[1], [0], [0], [1], [0, 0, 1, 1], [], []>} : vector<8x8xf32>, vector<8x16xf32>, vector<8x16xf32> -> vector<8x16xf32>
    %222 = vector.extract_strided_slice %177 {offsets = [16, 0], sizes = [16, 32], strides = [1, 1]} : vector<32x32xf32> to vector<16x32xf32>
    %cst_100 = arith.constant dense<0.000000e+00> : vector<8x32xf32>
    %223 = tpu.matmul %221, %222, %cst_100 {dimension_numbers = #tpu.dot_dimension_numbers<[1], [0], [0], [1], [0, 0, 1, 1], [], []>} : vector<8x16xf32>, vector<16x32xf32>, vector<8x32xf32> -> vector<8x32xf32>
    %224 = arith.addf %201, %223 : vector<8x32xf32>
    %c1_101 = arith.constant 1 : index
    %c0_102 = arith.constant 0 : index
    %c0_103 = arith.constant 0 : index
    %225 = vector.load %arg8[%c1_101, %c0_102, %c0_103] : memref<2x1x32xf32, #tpu.memory_space<vmem>>, vector<1x1x32xf32>
    %226 = vector.shape_cast %225 : vector<1x1x32xf32> to vector<1x32xf32>
    %227 = vector.broadcast %226 : vector<1x32xf32> to vector<8x32xf32>
    %228 = arith.addf %224, %227 : vector<8x32xf32>
    %229 = arith.addf %168, %228 : vector<8x32xf32>
    %c1_104 = arith.constant 1 : index
    %c0_105 = arith.constant 0 : index
    %c0_106 = arith.constant 0 : index
    %230 = vector.load %arg9[%c1_104, %c0_105, %c0_106] : memref<2x1x32xf32, #tpu.memory_space<vmem>>, vector<1x1x32xf32>
    %231 = vector.shape_cast %230 : vector<1x1x32xf32> to vector<1x32xf32>
    %c1_107 = arith.constant 1 : index
    %c0_108 = arith.constant 0 : index
    %c0_109 = arith.constant 0 : index
    %232 = vector.load %arg10[%c1_107, %c0_108, %c0_109] : memref<2x1x32xf32, #tpu.memory_space<vmem>>, vector<1x1x32xf32>
    %233 = vector.shape_cast %232 : vector<1x1x32xf32> to vector<1x32xf32>
    %cst_110 = arith.constant dense<0.000000e+00> : vector<8xf32>
    %234 = vector.multi_reduction <add>, %229, %cst_110 [1] : vector<8x32xf32> to vector<8xf32>
    %235 = vector.shape_cast %234 : vector<8xf32> to vector<8x1xf32>
    %cst_111 = arith.constant 3.200000e+01 : f32
    %236 = vector.broadcast %cst_111 : f32 to vector<8x1xf32>
    %237 = arith.divf %235, %236 : vector<8x1xf32>
    %238 = vector.broadcast %237 : vector<8x1xf32> to vector<8x32xf32>
    %239 = arith.subf %229, %238 : vector<8x32xf32>
    %240 = arith.mulf %239, %239 : vector<8x32xf32>
    %cst_112 = arith.constant dense<0.000000e+00> : vector<8xf32>
    %241 = vector.multi_reduction <add>, %240, %cst_112 [1] : vector<8x32xf32> to vector<8xf32>
    %242 = vector.shape_cast %241 : vector<8xf32> to vector<8x1xf32>
    %cst_113 = arith.constant 3.200000e+01 : f32
    %243 = vector.broadcast %cst_113 : f32 to vector<8x1xf32>
    %244 = arith.divf %242, %243 : vector<8x1xf32>
    %245 = vector.broadcast %237 : vector<8x1xf32> to vector<8x32xf32>
    %246 = arith.subf %229, %245 : vector<8x32xf32>
    %cst_114 = arith.constant 9.99999996E-13 : f32
    %247 = vector.broadcast %cst_114 : f32 to vector<8x1xf32>
    %248 = arith.addf %244, %247 : vector<8x1xf32>
    %249 = math.rsqrt %248 : vector<8x1xf32>
    %250 = vector.broadcast %249 : vector<8x1xf32> to vector<8x32xf32>
    %251 = arith.mulf %246, %250 : vector<8x32xf32>
    %252 = vector.broadcast %231 : vector<1x32xf32> to vector<8x32xf32>
    %253 = arith.mulf %251, %252 : vector<8x32xf32>
    %254 = vector.broadcast %233 : vector<1x32xf32> to vector<8x32xf32>
    %255 = arith.addf %253, %254 : vector<8x32xf32>
    %c1_115 = arith.constant 1 : index
    %c0_116 = arith.constant 0 : index
    %c0_117 = arith.constant 0 : index
    %256 = vector.load %arg11[%c1_115, %c0_116, %c0_117] : memref<2x32x64xf32, #tpu.memory_space<vmem>>, vector<1x32x64xf32>
    %257 = vector.shape_cast %256 : vector<1x32x64xf32> to vector<32x64xf32>
    %cst_118 = arith.constant dense<0.000000e+00> : vector<8x64xf32>
    %258 = tpu.matmul %255, %257, %cst_118 {dimension_numbers = #tpu.dot_dimension_numbers<[1], [0], [0], [1], [0, 0, 1, 1], [], []>} : vector<8x32xf32>, vector<32x64xf32>, vector<8x64xf32> -> vector<8x64xf32>
    %c1_119 = arith.constant 1 : index
    %c0_120 = arith.constant 0 : index
    %c0_121 = arith.constant 0 : index
    %259 = vector.load %arg12[%c1_119, %c0_120, %c0_121] : memref<2x1x64xf32, #tpu.memory_space<vmem>>, vector<1x1x64xf32>
    %260 = vector.shape_cast %259 : vector<1x1x64xf32> to vector<1x64xf32>
    %261 = vector.broadcast %260 : vector<1x64xf32> to vector<8x64xf32>
    %262 = arith.addf %258, %261 : vector<8x64xf32>
    %263 = arith.mulf %262, %262 : vector<8x64xf32>
    %264 = arith.mulf %262, %263 : vector<8x64xf32>
    %cst_122 = arith.constant 4.471500e-02 : f32
    %265 = vector.broadcast %cst_122 : f32 to vector<8x64xf32>
    %266 = arith.mulf %265, %264 : vector<8x64xf32>
    %267 = arith.addf %262, %266 : vector<8x64xf32>
    %cst_123 = arith.constant 0.797884583 : f32
    %268 = vector.broadcast %cst_123 : f32 to vector<8x64xf32>
    %269 = arith.mulf %268, %267 : vector<8x64xf32>
    %270 = math.tanh %269 : vector<8x64xf32>
    %cst_124 = arith.constant 1.000000e+00 : f32
    %271 = vector.broadcast %cst_124 : f32 to vector<8x64xf32>
    %272 = arith.addf %271, %270 : vector<8x64xf32>
    %cst_125 = arith.constant 5.000000e-01 : f32
    %273 = vector.broadcast %cst_125 : f32 to vector<8x64xf32>
    %274 = arith.mulf %273, %272 : vector<8x64xf32>
    %275 = arith.mulf %262, %274 : vector<8x64xf32>
    %c1_126 = arith.constant 1 : index
    %c0_127 = arith.constant 0 : index
    %c0_128 = arith.constant 0 : index
    %276 = vector.load %arg13[%c1_126, %c0_127, %c0_128] : memref<2x64x32xf32, #tpu.memory_space<vmem>>, vector<1x64x32xf32>
    %277 = vector.shape_cast %276 : vector<1x64x32xf32> to vector<64x32xf32>
    %cst_129 = arith.constant dense<0.000000e+00> : vector<8x32xf32>
    %278 = tpu.matmul %275, %277, %cst_129 {dimension_numbers = #tpu.dot_dimension_numbers<[1], [0], [0], [1], [0, 0, 1, 1], [], []>} : vector<8x64xf32>, vector<64x32xf32>, vector<8x32xf32> -> vector<8x32xf32>
    %c1_130 = arith.constant 1 : index
    %c0_131 = arith.constant 0 : index
    %c0_132 = arith.constant 0 : index
    %279 = vector.load %arg14[%c1_130, %c0_131, %c0_132] : memref<2x1x32xf32, #tpu.memory_space<vmem>>, vector<1x1x32xf32>
    %280 = vector.shape_cast %279 : vector<1x1x32xf32> to vector<1x32xf32>
    %281 = vector.broadcast %280 : vector<1x32xf32> to vector<8x32xf32>
    %282 = arith.addf %278, %281 : vector<8x32xf32>
    %283 = arith.addf %255, %282 : vector<8x32xf32>
    %c1_133 = arith.constant 1 : index
    %c0_134 = arith.constant 0 : index
    %c0_135 = arith.constant 0 : index
    %284 = vector.load %arg15[%c1_133, %c0_134, %c0_135] : memref<2x1x32xf32, #tpu.memory_space<vmem>>, vector<1x1x32xf32>
    %285 = vector.shape_cast %284 : vector<1x1x32xf32> to vector<1x32xf32>
    %c1_136 = arith.constant 1 : index
    %c0_137 = arith.constant 0 : index
    %c0_138 = arith.constant 0 : index
    %286 = vector.load %arg16[%c1_136, %c0_137, %c0_138] : memref<2x1x32xf32, #tpu.memory_space<vmem>>, vector<1x1x32xf32>
    %287 = vector.shape_cast %286 : vector<1x1x32xf32> to vector<1x32xf32>
    %cst_139 = arith.constant dense<0.000000e+00> : vector<8xf32>
    %288 = vector.multi_reduction <add>, %283, %cst_139 [1] : vector<8x32xf32> to vector<8xf32>
    %289 = vector.shape_cast %288 : vector<8xf32> to vector<8x1xf32>
    %cst_140 = arith.constant 3.200000e+01 : f32
    %290 = vector.broadcast %cst_140 : f32 to vector<8x1xf32>
    %291 = arith.divf %289, %290 : vector<8x1xf32>
    %292 = vector.broadcast %291 : vector<8x1xf32> to vector<8x32xf32>
    %293 = arith.subf %283, %292 : vector<8x32xf32>
    %294 = arith.mulf %293, %293 : vector<8x32xf32>
    %cst_141 = arith.constant dense<0.000000e+00> : vector<8xf32>
    %295 = vector.multi_reduction <add>, %294, %cst_141 [1] : vector<8x32xf32> to vector<8xf32>
    %296 = vector.shape_cast %295 : vector<8xf32> to vector<8x1xf32>
    %cst_142 = arith.constant 3.200000e+01 : f32
    %297 = vector.broadcast %cst_142 : f32 to vector<8x1xf32>
    %298 = arith.divf %296, %297 : vector<8x1xf32>
    %299 = vector.broadcast %291 : vector<8x1xf32> to vector<8x32xf32>
    %300 = arith.subf %283, %299 : vector<8x32xf32>
    %cst_143 = arith.constant 9.99999996E-13 : f32
    %301 = vector.broadcast %cst_143 : f32 to vector<8x1xf32>
    %302 = arith.addf %298, %301 : vector<8x1xf32>
    %303 = math.rsqrt %302 : vector<8x1xf32>
    %304 = vector.broadcast %303 : vector<8x1xf32> to vector<8x32xf32>
    %305 = arith.mulf %300, %304 : vector<8x32xf32>
    %306 = vector.broadcast %285 : vector<1x32xf32> to vector<8x32xf32>
    %307 = arith.mulf %305, %306 : vector<8x32xf32>
    %308 = vector.broadcast %287 : vector<1x32xf32> to vector<8x32xf32>
    %309 = arith.addf %307, %308 : vector<8x32xf32>
    %310 = vector.extract_strided_slice %309 {offsets = [0, 0], sizes = [1, 32], strides = [1, 1]} : vector<8x32xf32> to vector<1x32xf32>
    %c0_144 = arith.constant 0 : index
    %c0_145 = arith.constant 0 : index
    %311 = vector.load %arg17[%c0_144, %c0_145] : memref<32x32xf32, #tpu.memory_space<vmem>>, vector<32x32xf32>
    %cst_146 = arith.constant dense<0.000000e+00> : vector<1x32xf32>
    %312 = tpu.matmul %310, %311, %cst_146 {dimension_numbers = #tpu.dot_dimension_numbers<[1], [0], [0], [1], [0, 0, 1, 1], [], []>} : vector<1x32xf32>, vector<32x32xf32>, vector<1x32xf32> -> vector<1x32xf32>
    %c0_147 = arith.constant 0 : index
    %c0_148 = arith.constant 0 : index
    %313 = vector.load %arg18[%c0_147, %c0_148] : memref<1x32xf32, #tpu.memory_space<vmem>>, vector<1x32xf32>
    %314 = arith.addf %312, %313 : vector<1x32xf32>
    %315 = math.tanh %314 : vector<1x32xf32>
    %c0_149 = arith.constant 0 : index
    %c0_150 = arith.constant 0 : index
    %316 = vector.load %arg19[%c0_149, %c0_150] : memref<32x128xf32, #tpu.memory_space<vmem>>, vector<32x128xf32>
    %cst_151 = arith.constant dense<0.000000e+00> : vector<1x128xf32>
    %317 = tpu.matmul %315, %316, %cst_151 {dimension_numbers = #tpu.dot_dimension_numbers<[1], [0], [0], [1], [0, 0, 1, 1], [], []>} : vector<1x32xf32>, vector<32x128xf32>, vector<1x128xf32> -> vector<1x128xf32>
    %c0_152 = arith.constant 0 : index
    %c0_153 = arith.constant 0 : index
    %318 = vector.load %arg20[%c0_152, %c0_153] : memref<1x128xf32, #tpu.memory_space<vmem>>, vector<1x128xf32>
    %319 = arith.addf %317, %318 : vector<1x128xf32>
    %cst_154 = arith.constant dense<0xFF800000> : vector<1xf32>
    %320 = vector.multi_reduction <maximumf>, %319, %cst_154 [1] : vector<1x128xf32> to vector<1xf32>
    %321 = vector.shape_cast %320 : vector<1xf32> to vector<1x1xf32>
    %322 = vector.broadcast %321 : vector<1x1xf32> to vector<1x128xf32>
    %323 = arith.subf %319, %322 : vector<1x128xf32>
    %324 = math.exp %323 : vector<1x128xf32>
    %cst_155 = arith.constant dense<0.000000e+00> : vector<1xf32>
    %325 = vector.multi_reduction <add>, %324, %cst_155 [1] : vector<1x128xf32> to vector<1xf32>
    %326 = vector.shape_cast %325 : vector<1xf32> to vector<1x1xf32>
    %327 = vector.broadcast %326 : vector<1x1xf32> to vector<1x128xf32>
    %328 = arith.divf %324, %327 : vector<1x128xf32>
    %c0_156 = arith.constant 0 : index
    %c0_157 = arith.constant 0 : index
    %c0_158 = arith.constant 0 : index
    %329 = vector.load %arg21[%c0_156, %c0_157, %c0_158] : memref<1x1x128xf32, #tpu.memory_space<vmem>>, vector<1x1x128xf32>
    %330 = vector.shape_cast %329 : vector<1x1x128xf32> to vector<1x128xf32>
    %331 = vector.shape_cast %328 : vector<1x128xf32> to vector<1x1x128xf32>
    tpu.vector_store %arg21[%c0_156, %c0_157, %c0_158], %331 {strides = array<i32>} : memref<1x1x128xf32, #tpu.memory_space<vmem>>, vector<1x1x128xf32>,
    return
  }
  func.func @transform_0(%arg0: i32) -> (i32, i32, i32) {
    %c0_i32 = arith.constant 0 : i32
    %c0_i32_0 = arith.constant 0 : i32
    %c0_i32_1 = arith.constant 0 : i32
    return %arg0, %c0_i32, %c0_i32_0 : i32, i32, i32
  }
  func.func @transform_1(%arg0: i32) -> (i32, i32, i32) {
    %c0_i32 = arith.constant 0 : i32
    %c0_i32_0 = arith.constant 0 : i32
    %c0_i32_1 = arith.constant 0 : i32
    return %arg0, %c0_i32, %c0_i32_0 : i32, i32, i32
  }
  func.func @transform_2(%arg0: i32) -> (i32, i32) {
    %c0_i32 = arith.constant 0 : i32
    %c0_i32_0 = arith.constant 0 : i32
    %c0_i32_1 = arith.constant 0 : i32
    return %c0_i32, %c0_i32_0 : i32, i32
  }
  func.func @transform_3(%arg0: i32) -> (i32, i32) {
    %c0_i32 = arith.constant 0 : i32
    %c0_i32_0 = arith.constant 0 : i32
    %c0_i32_1 = arith.constant 0 : i32
    return %c0_i32, %c0_i32_0 : i32, i32
  }
  func.func @transform_4(%arg0: i32) -> (i32, i32, i32) {
    %c0_i32 = arith.constant 0 : i32
    %c0_i32_0 = arith.constant 0 : i32
    %c0_i32_1 = arith.constant 0 : i32
    %c0_i32_2 = arith.constant 0 : i32
    return %c0_i32, %c0_i32_0, %c0_i32_1 : i32, i32, i32
  }
  func.func @transform_5(%arg0: i32) -> (i32, i32, i32) {
    %c0_i32 = arith.constant 0 : i32
    %c0_i32_0 = arith.constant 0 : i32
    %c0_i32_1 = arith.constant 0 : i32
    %c0_i32_2 = arith.constant 0 : i32
    return %c0_i32, %c0_i32_0, %c0_i32_1 : i32, i32, i32
  }
  func.func @transform_6(%arg0: i32) -> (i32, i32, i32) {
    %c0_i32 = arith.constant 0 : i32
    %c0_i32_0 = arith.constant 0 : i32
    %c0_i32_1 = arith.constant 0 : i32
    %c0_i32_2 = arith.constant 0 : i32
    return %c0_i32, %c0_i32_0, %c0_i32_1 : i32, i32, i32
  }
  func.func @transform_7(%arg0: i32) -> (i32, i32, i32) {
    %c0_i32 = arith.constant 0 : i32
    %c0_i32_0 = arith.constant 0 : i32
    %c0_i32_1 = arith.constant 0 : i32
    %c0_i32_2 = arith.constant 0 : i32
    return %c0_i32, %c0_i32_0, %c0_i32_1 : i32, i32, i32
  }
  func.func @transform_8(%arg0: i32) -> (i32, i32, i32) {
    %c0_i32 = arith.constant 0 : i32
    %c0_i32_0 = arith.constant 0 : i32
    %c0_i32_1 = arith.constant 0 : i32
    %c0_i32_2 = arith.constant 0 : i32
    return %c0_i32, %c0_i32_0, %c0_i32_1 : i32, i32, i32
  }
  func.func @transform_9(%arg0: i32) -> (i32, i32, i32) {
    %c0_i32 = arith.constant 0 : i32
    %c0_i32_0 = arith.constant 0 : i32
    %c0_i32_1 = arith.constant 0 : i32
    %c0_i32_2 = arith.constant 0 : i32
    return %c0_i32, %c0_i32_0, %c0_i32_1 : i32, i32, i32
  }
  func.func @transform_10(%arg0: i32) -> (i32, i32, i32) {
    %c0_i32 = arith.constant 0 : i32
    %c0_i32_0 = arith.constant 0 : i32
    %c0_i32_1 = arith.constant 0 : i32
    %c0_i32_2 = arith.constant 0 : i32
    return %c0_i32, %c0_i32_0, %c0_i32_1 : i32, i32, i32
  }
  func.func @transform_11(%arg0: i32) -> (i32, i32, i32) {
    %c0_i32 = arith.constant 0 : i32
    %c0_i32_0 = arith.constant 0 : i32
    %c0_i32_1 = arith.constant 0 : i32
    %c0_i32_2 = arith.constant 0 : i32
    return %c0_i32, %c0_i32_0, %c0_i32_1 : i32, i32, i32
  }
  func.func @transform_12(%arg0: i32) -> (i32, i32, i32) {
    %c0_i32 = arith.constant 0 : i32
    %c0_i32_0 = arith.constant 0 : i32
    %c0_i32_1 = arith.constant 0 : i32
    %c0_i32_2 = arith.constant 0 : i32
    return %c0_i32, %c0_i32_0, %c0_i32_1 : i32, i32, i32
  }
  func.func @transform_13(%arg0: i32) -> (i32, i32, i32) {
    %c0_i32 = arith.constant 0 : i32
    %c0_i32_0 = arith.constant 0 : i32
    %c0_i32_1 = arith.constant 0 : i32
    %c0_i32_2 = arith.constant 0 : i32
    return %c0_i32, %c0_i32_0, %c0_i32_1 : i32, i32, i32
  }
  func.func @transform_14(%arg0: i32) -> (i32, i32, i32) {
    %c0_i32 = arith.constant 0 : i32
    %c0_i32_0 = arith.constant 0 : i32
    %c0_i32_1 = arith.constant 0 : i32
    %c0_i32_2 = arith.constant 0 : i32
    return %c0_i32, %c0_i32_0, %c0_i32_1 : i32, i32, i32
  }
  func.func @transform_15(%arg0: i32) -> (i32, i32, i32) {
    %c0_i32 = arith.constant 0 : i32
    %c0_i32_0 = arith.constant 0 : i32
    %c0_i32_1 = arith.constant 0 : i32
    %c0_i32_2 = arith.constant 0 : i32
    return %c0_i32, %c0_i32_0, %c0_i32_1 : i32, i32, i32
  }
  func.func @transform_16(%arg0: i32) -> (i32, i32) {
    %c0_i32 = arith.constant 0 : i32
    %c0_i32_0 = arith.constant 0 : i32
    %c0_i32_1 = arith.constant 0 : i32
    return %c0_i32, %c0_i32_0 : i32, i32
  }
  func.func @transform_17(%arg0: i32) -> (i32, i32) {
    %c0_i32 = arith.constant 0 : i32
    %c0_i32_0 = arith.constant 0 : i32
    %c0_i32_1 = arith.constant 0 : i32
    return %c0_i32, %c0_i32_0 : i32, i32
  }
  func.func @transform_18(%arg0: i32) -> (i32, i32) {
    %c0_i32 = arith.constant 0 : i32
    %c0_i32_0 = arith.constant 0 : i32
    %c0_i32_1 = arith.constant 0 : i32
    return %c0_i32, %c0_i32_0 : i32, i32
  }
  func.func @transform_19(%arg0: i32) -> (i32, i32) {
    %c0_i32 = arith.constant 0 : i32
    %c0_i32_0 = arith.constant 0 : i32
    %c0_i32_1 = arith.constant 0 : i32
    return %c0_i32, %c0_i32_0 : i32, i32
  }
  func.func @transform_20(%arg0: i32) -> (i32, i32, i32) {
    %c0_i32 = arith.constant 0 : i32
    %c0_i32_0 = arith.constant 0 : i32
    %c0_i32_1 = arith.constant 0 : i32
    return %arg0, %c0_i32, %c0_i32_0 : i32, i32, i32
  }
}

</mosaic_0001>

<llo_original>
// kernel: tpu_custom_call.1
$region0: #{tpu_custom_call.1}
  #allocation0 [shape = 'u32[]', space=smem, size = 0x4, offset = 0x4, fixed_abs, tag = 'smem constant byte address 0x4 - core index']
  #allocation1 [shape = 'u32[144,128]{1,0:T(1,128)}', space=vmem, size = 0x12000, scoped, tag = 'internal scratch']
  %s0 = inlined_call_operand.hbm [shape: f32[2,8,32], index: 0, kind: input, shape index: {}]
  %s1 = inlined_call_operand.hbm [shape: f32[2,1,8], index: 1, kind: input, shape index: {}]
  %s2 = inlined_call_operand.hbm [shape: f32[1,32], index: 2, kind: input, shape index: {}]
  %s3 = inlined_call_operand.hbm [shape: f32[1,32], index: 3, kind: input, shape index: {}]
  %s4 = inlined_call_operand.vmem [shape: f32[2,32,96], index: 4, kind: input, shape index: {}]
  %s5 = inlined_call_operand.hbm [shape: f32[2,1,96], index: 5, kind: input, shape index: {}]
  %s6 = inlined_call_operand.vmem [shape: f32[2,32,32], index: 6, kind: input, shape index: {}]
  %s7 = inlined_call_operand.hbm [shape: f32[2,1,32], index: 7, kind: input, shape index: {}]
  %s8 = inlined_call_operand.hbm [shape: f32[2,1,32], index: 8, kind: input, shape index: {}]
  %s9 = inlined_call_operand.hbm [shape: f32[2,1,32], index: 9, kind: input, shape index: {}]
  %s10 = inlined_call_operand.vmem [shape: f32[2,32,64], index: 10, kind: input, shape index: {}]
  %s11 = inlined_call_operand.hbm [shape: f32[2,1,64], index: 11, kind: input, shape index: {}]
  %s12 = inlined_call_operand.vmem [shape: f32[2,64,32], index: 12, kind: input, shape index: {}]
  %s13 = inlined_call_operand.hbm [shape: f32[2,1,32], index: 13, kind: input, shape index: {}]
  %s14 = inlined_call_operand.hbm [shape: f32[2,1,32], index: 14, kind: input, shape index: {}]
  %s15 = inlined_call_operand.hbm [shape: f32[2,1,32], index: 15, kind: input, shape index: {}]
  %s16 = inlined_call_operand.vmem [shape: f32[32,32], index: 16, kind: input, shape index: {}]
  %s17 = inlined_call_operand.hbm [shape: f32[1,32], index: 17, kind: input, shape index: {}]
  %s18 = inlined_call_operand.vmem [shape: f32[32,128], index: 18, kind: input, shape index: {}]
  %s19 = inlined_call_operand.vmem [shape: f32[1,128], index: 19, kind: input, shape index: {}]
  %s20 = inlined_call_operand.hbm [shape: f32[2,1,128], index: 20, kind: output, shape index: {}]
  %s21 = sld [smem:[#allocation0]]
  $region165: #{tpu_custom_call.1} parent=0
    _
  %s23 = ssub.s32 1, %s21
  %s24 = scalar_select 0, %s23, %s21
  $region1: #{tpu_custom_call.1} parent=0
    #allocation2 [shape = 'u8[8192]{0}', space=vmem, size = 0x2000, scoped, tag = 'input window, operand 0']
    #allocation3 [shape = 's32[2]{0}', space=sflag, size = 0x8, scoped, tag = 'scoped memory for tpu_custom_call.1']
    #allocation4 [shape = 's32[2]{0}', space=sflag, size = 0x8, scoped, tag = 'scoped memory for tpu_custom_call.1']
    #allocation5 [shape = 'u8[1024]{0}', space=vmem, size = 0x400, scoped, tag = 'input window, operand 1']
    #allocation6 [shape = 's32[2]{0}', space=sflag, size = 0x8, scoped, tag = 'scoped memory for tpu_custom_call.1']
    #allocation7 [shape = 'u8[512]{0}', space=vmem, size = 0x400, scoped, tag = 'input window, operand 2, single buffered']
    #allocation8 [shape = 'u8[512]{0}', space=vmem, size = 0x400, scoped, tag = 'input window, operand 3, single buffered']
    #allocation9 [shape = 's32[1]{0}', space=sflag, size = 0x4, scoped, tag = 'scoped memory for tpu_custom_call.1']
    #allocation10 [shape = 'u8[1024]{0}', space=vmem, size = 0x400, scoped, tag = 'input window, operand 5, single buffered']
    #allocation11 [shape = 'u8[1024]{0}', space=vmem, size = 0x400, scoped, tag = 'input window, operand 7, single buffered']
    #allocation12 [shape = 's32[1]{0}', space=sflag, size = 0x4, scoped, tag = 'scoped memory for tpu_custom_call.1']
    #allocation13 [shape = 'u8[1024]{0}', space=vmem, size = 0x400, scoped, tag = 'input window, operand 8, single buffered']
    #allocation14 [shape = 'u8[1024]{0}', space=vmem, size = 0x400, scoped, tag = 'input window, operand 9, single buffered']
    #allocation15 [shape = 's32[1]{0}', space=sflag, size = 0x4, scoped, tag = 'scoped memory for tpu_custom_call.1']
    #allocation16 [shape = 'u8[1024]{0}', space=vmem, size = 0x400, scoped, tag = 'input window, operand 11, single buffered']
    #allocation17 [shape = 'u8[1024]{0}', space=vmem, size = 0x400, scoped, tag = 'input window, operand 13, single buffered']
    #allocation18 [shape = 's32[1]{0}', space=sflag, size = 0x4, scoped, tag = 'scoped memory for tpu_custom_call.1']
    #allocation19 [shape = 'u8[1024]{0}', space=vmem, size = 0x400, scoped, tag = 'input window, operand 14, single buffered']
    #allocation20 [shape = 'u8[1024]{0}', space=vmem, size = 0x400, scoped, tag = 'input window, operand 15, single buffered']
    #allocation21 [shape = 's32[1]{0}', space=sflag, size = 0x4, scoped, tag = 'scoped memory for tpu_custom_call.1']
    #allocation22 [shape = 'u8[512]{0}', space=vmem, size = 0x400, scoped, tag = 'input window, operand 17, single buffered']
    #allocation23 [shape = 'u8[1024]{0}', space=vmem, size = 0x400, scoped, tag = 'output window, operand 0']
    %25 = vsyncpa [#allocation3], 0
    %s26 = scalar_lea.sflag [#allocation3], 1
    %27 = vsyncpa %s26, 0
    %28 = vsyncpa [#allocation6], 0
    %s29 = scalar_lea.sflag [#allocation6], 1
    %30 = vsyncpa %s29, 0
    %31 = vsyncpa [#allocation9], 0
    %32 = vsyncpa [#allocation12], 0
    %33 = vsyncpa [#allocation15], 0
    %34 = vsyncpa [#allocation18], 0
    %35 = vsyncpa [#allocation21], 0
    %36 = vsyncpa [#allocation4], 0
    %s37 = scalar_lea.sflag [#allocation4], 1
    %38 = vsyncpa %s37, 0
    loop: start=0, step=1, limit=4
    $region2: #{tpu_custom_call.1} parent=1 // loop_pre_header
      _
    $region3: #{tpu_custom_call.1} parent=1 // loop_header
      %s40 = sphi 0, %s44
      %p41 = scmp.ge.s32.totalorder %s40, 4
      %s50 = sphi 0, %s52
      %s53 = sphi 0, %s50
      %s54 = sphi 0, %s53
      %s70 = sphi 0, %s54
      %s76 = sphi 0, %s78
      %s79 = sphi 0, %s76
      %s80 = sphi 0, %s79
      %s96 = sphi 0, %s80
      %s100 = sphi 0, %s100
      %s102 = sphi 0, %s100
      %s103 = sphi 0, %s102
      %s117 = sphi 0, %s103
      %s121 = sphi 0, %s121
      %s123 = sphi 0, %s121
      %s124 = sphi 0, %s123
      %s138 = sphi 0, %s124
      %s142 = sphi 0, %s142
      %s144 = sphi 0, %s142
      %s145 = sphi 0, %s144
      %s159 = sphi 0, %s145
      %s163 = sphi 0, %s163
      %s165 = sphi 0, %s163
      %s166 = sphi 0, %s165
      %s180 = sphi 0, %s166
      %s184 = sphi 0, %s184
      %s186 = sphi 0, %s184
      %s187 = sphi 0, %s186
      %s201 = sphi 0, %s187
      %s205 = sphi 0, %s205
      %s207 = sphi 0, %s205
      %s208 = sphi 0, %s207
      %s222 = sphi 0, %s208
      %s226 = sphi 0, %s226
      %s228 = sphi 0, %s226
      %s229 = sphi 0, %s228
      %s243 = sphi 0, %s229
      %s247 = sphi 0, %s247
      %s249 = sphi 0, %s247
      %s250 = sphi 0, %s249
      %s264 = sphi 0, %s250
      %s268 = sphi 0, %s268
      %s270 = sphi 0, %s268
      %s271 = sphi 0, %s270
      %s285 = sphi 0, %s271
      %s289 = sphi 0, %s289
      %s291 = sphi 0, %s289
      %s292 = sphi 0, %s291
      %s306 = sphi 0, %s292
      %s310 = sphi 0, %s310
      %s312 = sphi 0, %s310
      %s313 = sphi 0, %s312
      %s327 = sphi 0, %s313
      %s331 = sphi 0, %s331
      %s333 = sphi 0, %s331
      %s334 = sphi 0, %s333
      %s348 = sphi 0, %s334
      %s352 = sphi 0, %s352
      %s354 = sphi 0, %s352
      %s355 = sphi 0, %s354
      %s369 = sphi 0, %s355
      %s373 = sphi 0, %s373
      %s375 = sphi 0, %s373
      %s376 = sphi 0, %s375
      %s390 = sphi 0, %s376
      %s394 = sphi 0, %s394
      %s396 = sphi 0, %s394
      %s397 = sphi 0, %s396
      %s411 = sphi 0, %s397
      %s415 = sphi 0, %s415
      %s417 = sphi 0, %s415
      %s418 = sphi 0, %s417
      %s432 = sphi 0, %s418
      %s436 = sphi 0, %s436
      %s438 = sphi 0, %s436
      %s439 = sphi 0, %s438
      %s453 = sphi 0, %s439
      %s457 = sphi 0, %s457
      %s459 = sphi 0, %s457
      %s460 = sphi 0, %s459
      %s474 = sphi 0, %s460
      %s480 = sphi 0, %s482
      %s483 = sphi 0, %s480
      %s484 = sphi 0, %s483
      %s500 = sphi 0, %s484
    $region4: #{tpu_custom_call.1} parent=1 // loop_header_branch
      %43 = sbr.rel (%p41) target = $region8
    $region5: #{tpu_custom_call.1} parent=1 // loop_body
      %s45 = ssub.s32 %s40, 1
      %s46 = ssub.s32 %s40, 2
      %s47 = sadd.s32 %s40, 1
      %s48 = ssub.s32 %s40, %s47
      %p49 = scmp.eq.s32.totalorder %s48, 0
      %s51 = sadd.s32 %s50, 1
      %s52 = scalar_select %p49, %s50, %s51
      %p55 = pneg %p49
      %p56 = scmp.eq.s32.totalorder %s40, 1
      %p57 = por %p55, %p56
      %p58 = scmp.ne.s32.totalorder %s50, %s53
      %p59 = scmp.eq.s32.totalorder %s40, 0
      %p60 = por %p58, %p59
      %p61 = scmp.ne.s32.totalorder %s50, %s53
      %p62 = scmp.eq.s32.totalorder %s45, 1
      %p63 = por %p61, %p62
      %p64 = scmp.ne.s32.totalorder %s53, %s54
      %p65 = scmp.eq.s32.totalorder %s45, 0
      %p66 = por %p64, %p65
      %p67 = scmp.ne.s32.totalorder %s53, %s54
      %p68 = scmp.eq.s32.totalorder %s46, 1
      %p69 = por %p67, %p68
      %p71 = scmp.ne.s32.totalorder %s54, %s70
      %p72 = scmp.eq.s32.totalorder %s46, 0
      %p73 = por %p71, %p72
      %s74 = ssub.s32 %s40, %s47
      %p75 = scmp.eq.s32.totalorder %s74, 0
      %s77 = sadd.s32 %s76, 1
      %s78 = scalar_select %p75, %s76, %s77
      %p81 = pneg %p75
      %p82 = scmp.eq.s32.totalorder %s40, 1
      %p83 = por %p81, %p82
      %p84 = scmp.ne.s32.totalorder %s76, %s79
      %p85 = scmp.eq.s32.totalorder %s40, 0
      %p86 = por %p84, %p85
      %p87 = scmp.ne.s32.totalorder %s76, %s79
      %p88 = scmp.eq.s32.totalorder %s45, 1
      %p89 = por %p87, %p88
      %p90 = scmp.ne.s32.totalorder %s79, %s80
      %p91 = scmp.eq.s32.totalorder %s45, 0
      %p92 = por %p90, %p91
      %p93 = scmp.ne.s32.totalorder %s79, %s80
      %p94 = scmp.eq.s32.totalorder %s46, 1
      %p95 = por %p93, %p94
      %p97 = scmp.ne.s32.totalorder %s80, %s96
      %p98 = scmp.eq.s32.totalorder %s46, 0
      %p99 = por %p97, %p98
      %s101 = sadd.s32 %s100, 1
      %p104 = scmp.eq.s32.totalorder %s40, 1
      %p105 = scmp.ne.s32.totalorder %s100, %s102
      %p106 = scmp.eq.s32.totalorder %s40, 0
      %p107 = por %p105, %p106
      %p108 = scmp.ne.s32.totalorder %s100, %s102
      %p109 = scmp.eq.s32.totalorder %s45, 1
      %p110 = por %p108, %p109
      %p111 = scmp.ne.s32.totalorder %s102, %s103
      %p112 = scmp.eq.s32.totalorder %s45, 0
      %p113 = por %p111, %p112
      %p114 = scmp.ne.s32.totalorder %s102, %s103
      %p115 = scmp.eq.s32.totalorder %s46, 1
      %p116 = por %p114, %p115
      %p118 = scmp.ne.s32.totalorder %s103, %s117
      %p119 = scmp.eq.s32.totalorder %s46, 0
      %p120 = por %p118, %p119
      %s122 = sadd.s32 %s121, 1
      %p125 = scmp.eq.s32.totalorder %s40, 1
      %p126 = scmp.ne.s32.totalorder %s121, %s123
      %p127 = scmp.eq.s32.totalorder %s40, 0
      %p128 = por %p126, %p127
      %p129 = scmp.ne.s32.totalorder %s121, %s123
      %p130 = scmp.eq.s32.totalorder %s45, 1
      %p131 = por %p129, %p130
      %p132 = scmp.ne.s32.totalorder %s123, %s124
      %p133 = scmp.eq.s32.totalorder %s45, 0
      %p134 = por %p132, %p133
      %p135 = scmp.ne.s32.totalorder %s123, %s124
      %p136 = scmp.eq.s32.totalorder %s46, 1
      %p137 = por %p135, %p136
      %p139 = scmp.ne.s32.totalorder %s124, %s138
      %p140 = scmp.eq.s32.totalorder %s46, 0
      %p141 = por %p139, %p140
      %s143 = sadd.s32 %s142, 1
      %p146 = scmp.eq.s32.totalorder %s40, 1
      %p147 = scmp.ne.s32.totalorder %s142, %s144
      %p148 = scmp.eq.s32.totalorder %s40, 0
      %p149 = por %p147, %p148
      %p150 = scmp.ne.s32.totalorder %s142, %s144
      %p151 = scmp.eq.s32.totalorder %s45, 1
      %p152 = por %p150, %p151
      %p153 = scmp.ne.s32.totalorder %s144, %s145
      %p154 = scmp.eq.s32.totalorder %s45, 0
      %p155 = por %p153, %p154
      %p156 = scmp.ne.s32.totalorder %s144, %s145
      %p157 = scmp.eq.s32.totalorder %s46, 1
      %p158 = por %p156, %p157
      %p160 = scmp.ne.s32.totalorder %s145, %s159
      %p161 = scmp.eq.s32.totalorder %s46, 0
      %p162 = por %p160, %p161
      %s164 = sadd.s32 %s163, 1
      %p167 = scmp.eq.s32.totalorder %s40, 1
      %p168 = scmp.ne.s32.totalorder %s163, %s165
      %p169 = scmp.eq.s32.totalorder %s40, 0
      %p170 = por %p168, %p169
      %p171 = scmp.ne.s32.totalorder %s163, %s165
      %p172 = scmp.eq.s32.totalorder %s45, 1
      %p173 = por %p171, %p172
      %p174 = scmp.ne.s32.totalorder %s165, %s166
      %p175 = scmp.eq.s32.totalorder %s45, 0
      %p176 = por %p174, %p175
      %p177 = scmp.ne.s32.totalorder %s165, %s166
      %p178 = scmp.eq.s32.totalorder %s46, 1
      %p179 = por %p177, %p178
      %p181 = scmp.ne.s32.totalorder %s166, %s180
      %p182 = scmp.eq.s32.totalorder %s46, 0
      %p183 = por %p181, %p182
      %s185 = sadd.s32 %s184, 1
      %p188 = scmp.eq.s32.totalorder %s40, 1
      %p189 = scmp.ne.s32.totalorder %s184, %s186
      %p190 = scmp.eq.s32.totalorder %s40, 0
      %p191 = por %p189, %p190
      %p192 = scmp.ne.s32.totalorder %s184, %s186
      %p193 = scmp.eq.s32.totalorder %s45, 1
      %p194 = por %p192, %p193
      %p195 = scmp.ne.s32.totalorder %s186, %s187
      %p196 = scmp.eq.s32.totalorder %s45, 0
      %p197 = por %p195, %p196
      %p198 = scmp.ne.s32.totalorder %s186, %s187
      %p199 = scmp.eq.s32.totalorder %s46, 1
      %p200 = por %p198, %p199
      %p202 = scmp.ne.s32.totalorder %s187, %s201
      %p203 = scmp.eq.s32.totalorder %s46, 0
      %p204 = por %p202, %p203
      %s206 = sadd.s32 %s205, 1
      %p209 = scmp.eq.s32.totalorder %s40, 1
      %p210 = scmp.ne.s32.totalorder %s205, %s207
      %p211 = scmp.eq.s32.totalorder %s40, 0
      %p212 = por %p210, %p211
      %p213 = scmp.ne.s32.totalorder %s205, %s207
      %p214 = scmp.eq.s32.totalorder %s45, 1
      %p215 = por %p213, %p214
      %p216 = scmp.ne.s32.totalorder %s207, %s208
      %p217 = scmp.eq.s32.totalorder %s45, 0
      %p218 = por %p216, %p217
      %p219 = scmp.ne.s32.totalorder %s207, %s208
      %p220 = scmp.eq.s32.totalorder %s46, 1
      %p221 = por %p219, %p220
      %p223 = scmp.ne.s32.totalorder %s208, %s222
      %p224 = scmp.eq.s32.totalorder %s46, 0
      %p225 = por %p223, %p224
      %s227 = sadd.s32 %s226, 1
      %p230 = scmp.eq.s32.totalorder %s40, 1
      %p231 = scmp.ne.s32.totalorder %s226, %s228
      %p232 = scmp.eq.s32.totalorder %s40, 0
      %p233 = por %p231, %p232
      %p234 = scmp.ne.s32.totalorder %s226, %s228
      %p235 = scmp.eq.s32.totalorder %s45, 1
      %p236 = por %p234, %p235
      %p237 = scmp.ne.s32.totalorder %s228, %s229
      %p238 = scmp.eq.s32.totalorder %s45, 0
      %p239 = por %p237, %p238
      %p240 = scmp.ne.s32.totalorder %s228, %s229
      %p241 = scmp.eq.s32.totalorder %s46, 1
      %p242 = por %p240, %p241
      %p244 = scmp.ne.s32.totalorder %s229, %s243
      %p245 = scmp.eq.s32.totalorder %s46, 0
      %p246 = por %p244, %p245
      %s248 = sadd.s32 %s247, 1
      %p251 = scmp.eq.s32.totalorder %s40, 1
      %p252 = scmp.ne.s32.totalorder %s247, %s249
      %p253 = scmp.eq.s32.totalorder %s40, 0
      %p254 = por %p252, %p253
      %p255 = scmp.ne.s32.totalorder %s247, %s249
      %p256 = scmp.eq.s32.totalorder %s45, 1
      %p257 = por %p255, %p256
      %p258 = scmp.ne.s32.totalorder %s249, %s250
      %p259 = scmp.eq.s32.totalorder %s45, 0
      %p260 = por %p258, %p259
      %p261 = scmp.ne.s32.totalorder %s249, %s250
      %p262 = scmp.eq.s32.totalorder %s46, 1
      %p263 = por %p261, %p262
      %p265 = scmp.ne.s32.totalorder %s250, %s264
      %p266 = scmp.eq.s32.totalorder %s46, 0
      %p267 = por %p265, %p266
      %s269 = sadd.s32 %s268, 1
      %p272 = scmp.eq.s32.totalorder %s40, 1
      %p273 = scmp.ne.s32.totalorder %s268, %s270
      %p274 = scmp.eq.s32.totalorder %s40, 0
      %p275 = por %p273, %p274
      %p276 = scmp.ne.s32.totalorder %s268, %s270
      %p277 = scmp.eq.s32.totalorder %s45, 1
      %p278 = por %p276, %p277
      %p279 = scmp.ne.s32.totalorder %s270, %s271
      %p280 = scmp.eq.s32.totalorder %s45, 0
      %p281 = por %p279, %p280
      %p282 = scmp.ne.s32.totalorder %s270, %s271
      %p283 = scmp.eq.s32.totalorder %s46, 1
      %p284 = por %p282, %p283
      %p286 = scmp.ne.s32.totalorder %s271, %s285
      %p287 = scmp.eq.s32.totalorder %s46, 0
      %p288 = por %p286, %p287
      %s290 = sadd.s32 %s289, 1
      %p293 = scmp.eq.s32.totalorder %s40, 1
      %p294 = scmp.ne.s32.totalorder %s289, %s291
      %p295 = scmp.eq.s32.totalorder %s40, 0
      %p296 = por %p294, %p295
      %p297 = scmp.ne.s32.totalorder %s289, %s291
      %p298 = scmp.eq.s32.totalorder %s45, 1
      %p299 = por %p297, %p298
      %p300 = scmp.ne.s32.totalorder %s291, %s292
      %p301 = scmp.eq.s32.totalorder %s45, 0
      %p302 = por %p300, %p301
      %p303 = scmp.ne.s32.totalorder %s291, %s292
      %p304 = scmp.eq.s32.totalorder %s46, 1
      %p305 = por %p303, %p304
      %p307 = scmp.ne.s32.totalorder %s292, %s306
      %p308 = scmp.eq.s32.totalorder %s46, 0
      %p309 = por %p307, %p308
      %s311 = sadd.s32 %s310, 1
      %p314 = scmp.eq.s32.totalorder %s40, 1
      %p315 = scmp.ne.s32.totalorder %s310, %s312
      %p316 = scmp.eq.s32.totalorder %s40, 0
      %p317 = por %p315, %p316
      %p318 = scmp.ne.s32.totalorder %s310, %s312
      %p319 = scmp.eq.s32.totalorder %s45, 1
      %p320 = por %p318, %p319
      %p321 = scmp.ne.s32.totalorder %s312, %s313
      %p322 = scmp.eq.s32.totalorder %s45, 0
      %p323 = por %p321, %p322
      %p324 = scmp.ne.s32.totalorder %s312, %s313
      %p325 = scmp.eq.s32.totalorder %s46, 1
      %p326 = por %p324, %p325
      %p328 = scmp.ne.s32.totalorder %s313, %s327
      %p329 = scmp.eq.s32.totalorder %s46, 0
      %p330 = por %p328, %p329
      %s332 = sadd.s32 %s331, 1
      %p335 = scmp.eq.s32.totalorder %s40, 1
      %p336 = scmp.ne.s32.totalorder %s331, %s333
      %p337 = scmp.eq.s32.totalorder %s40, 0
      %p338 = por %p336, %p337
      %p339 = scmp.ne.s32.totalorder %s331, %s333
      %p340 = scmp.eq.s32.totalorder %s45, 1
      %p341 = por %p339, %p340
      %p342 = scmp.ne.s32.totalorder %s333, %s334
      %p343 = scmp.eq.s32.totalorder %s45, 0
      %p344 = por %p342, %p343
      %p345 = scmp.ne.s32.totalorder %s333, %s334
      %p346 = scmp.eq.s32.totalorder %s46, 1
      %p347 = por %p345, %p346
      %p349 = scmp.ne.s32.totalorder %s334, %s348
      %p350 = scmp.eq.s32.totalorder %s46, 0
      %p351 = por %p349, %p350
      %s353 = sadd.s32 %s352, 1
      %p356 = scmp.eq.s32.totalorder %s40, 1
      %p357 = scmp.ne.s32.totalorder %s352, %s354
      %p358 = scmp.eq.s32.totalorder %s40, 0
      %p359 = por %p357, %p358
      %p360 = scmp.ne.s32.totalorder %s352, %s354
      %p361 = scmp.eq.s32.totalorder %s45, 1
      %p362 = por %p360, %p361
      %p363 = scmp.ne.s32.totalorder %s354, %s355
      %p364 = scmp.eq.s32.totalorder %s45, 0
      %p365 = por %p363, %p364
      %p366 = scmp.ne.s32.totalorder %s354, %s355
      %p367 = scmp.eq.s32.totalorder %s46, 1
      %p368 = por %p366, %p367
      %p370 = scmp.ne.s32.totalorder %s355, %s369
      %p371 = scmp.eq.s32.totalorder %s46, 0
      %p372 = por %p370, %p371
      %s374 = sadd.s32 %s373, 1
      %p377 = scmp.eq.s32.totalorder %s40, 1
      %p378 = scmp.ne.s32.totalorder %s373, %s375
      %p379 = scmp.eq.s32.totalorder %s40, 0
      %p380 = por %p378, %p379
      %p381 = scmp.ne.s32.totalorder %s373, %s375
      %p382 = scmp.eq.s32.totalorder %s45, 1
      %p383 = por %p381, %p382
      %p384 = scmp.ne.s32.totalorder %s375, %s376
      %p385 = scmp.eq.s32.totalorder %s45, 0
      %p386 = por %p384, %p385
      %p387 = scmp.ne.s32.totalorder %s375, %s376
      %p388 = scmp.eq.s32.totalorder %s46, 1
      %p389 = por %p387, %p388
      %p391 = scmp.ne.s32.totalorder %s376, %s390
      %p392 = scmp.eq.s32.totalorder %s46, 0
      %p393 = por %p391, %p392
      %s395 = sadd.s32 %s394, 1
      %p398 = scmp.eq.s32.totalorder %s40, 1
      %p399 = scmp.ne.s32.totalorder %s394, %s396
      %p400 = scmp.eq.s32.totalorder %s40, 0
      %p401 = por %p399, %p400
      %p402 = scmp.ne.s32.totalorder %s394, %s396
      %p403 = scmp.eq.s32.totalorder %s45, 1
      %p404 = por %p402, %p403
      %p405 = scmp.ne.s32.totalorder %s396, %s397
      %p406 = scmp.eq.s32.totalorder %s45, 0
      %p407 = por %p405, %p406
      %p408 = scmp.ne.s32.totalorder %s396, %s397
      %p409 = scmp.eq.s32.totalorder %s46, 1
      %p410 = por %p408, %p409
      %p412 = scmp.ne.s32.totalorder %s397, %s411
      %p413 = scmp.eq.s32.totalorder %s46, 0
      %p414 = por %p412, %p413
      %s416 = sadd.s32 %s415, 1
      %p419 = scmp.eq.s32.totalorder %s40, 1
      %p420 = scmp.ne.s32.totalorder %s415, %s417
      %p421 = scmp.eq.s32.totalorder %s40, 0
      %p422 = por %p420, %p421
      %p423 = scmp.ne.s32.totalorder %s415, %s417
      %p424 = scmp.eq.s32.totalorder %s45, 1
      %p425 = por %p423, %p424
      %p426 = scmp.ne.s32.totalorder %s417, %s418
      %p427 = scmp.eq.s32.totalorder %s45, 0
      %p428 = por %p426, %p427
      %p429 = scmp.ne.s32.totalorder %s417, %s418
      %p430 = scmp.eq.s32.totalorder %s46, 1
      %p431 = por %p429, %p430
      %p433 = scmp.ne.s32.totalorder %s418, %s432
      %p434 = scmp.eq.s32.totalorder %s46, 0
      %p435 = por %p433, %p434
      %s437 = sadd.s32 %s436, 1
      %p440 = scmp.eq.s32.totalorder %s40, 1
      %p441 = scmp.ne.s32.totalorder %s436, %s438
      %p442 = scmp.eq.s32.totalorder %s40, 0
      %p443 = por %p441, %p442
      %p444 = scmp.ne.s32.totalorder %s436, %s438
      %p445 = scmp.eq.s32.totalorder %s45, 1
      %p446 = por %p444, %p445
      %p447 = scmp.ne.s32.totalorder %s438, %s439
      %p448 = scmp.eq.s32.totalorder %s45, 0
      %p449 = por %p447, %p448
      %p450 = scmp.ne.s32.totalorder %s438, %s439
      %p451 = scmp.eq.s32.totalorder %s46, 1
      %p452 = por %p450, %p451
      %p454 = scmp.ne.s32.totalorder %s439, %s453
      %p455 = scmp.eq.s32.totalorder %s46, 0
      %p456 = por %p454, %p455
      %s458 = sadd.s32 %s457, 1
      %p461 = scmp.eq.s32.totalorder %s40, 1
      %p462 = scmp.ne.s32.totalorder %s457, %s459
      %p463 = scmp.eq.s32.totalorder %s40, 0
      %p464 = por %p462, %p463
      %p465 = scmp.ne.s32.totalorder %s457, %s459
      %p466 = scmp.eq.s32.totalorder %s45, 1
      %p467 = por %p465, %p466
      %p468 = scmp.ne.s32.totalorder %s459, %s460
      %p469 = scmp.eq.s32.totalorder %s45, 0
      %p470 = por %p468, %p469
      %p471 = scmp.ne.s32.totalorder %s459, %s460
      %p472 = scmp.eq.s32.totalorder %s46, 1
      %p473 = por %p471, %p472
      %p475 = scmp.ne.s32.totalorder %s460, %s474
      %p476 = scmp.eq.s32.totalorder %s46, 0
      %p477 = por %p475, %p476
      %s478 = ssub.s32 %s40, %s47
      %p479 = scmp.eq.s32.totalorder %s478, 0
      %s481 = sadd.s32 %s480, 1
      %s482 = scalar_select %p479, %s480, %s481
      %p485 = pneg %p479
      %p486 = scmp.eq.s32.totalorder %s40, 1
      %p487 = por %p485, %p486
      %p488 = scmp.ne.s32.totalorder %s480, %s483
      %p489 = scmp.eq.s32.totalorder %s40, 0
      %p490 = por %p488, %p489
      %p491 = scmp.ne.s32.totalorder %s480, %s483
      %p492 = scmp.eq.s32.totalorder %s45, 1
      %p493 = por %p491, %p492
      %p494 = scmp.ne.s32.totalorder %s483, %s484
      %p495 = scmp.eq.s32.totalorder %s45, 0
      %p496 = por %p494, %p495
      %p497 = scmp.ne.s32.totalorder %s483, %s484
      %p498 = scmp.eq.s32.totalorder %s46, 1
      %p499 = por %p497, %p498
      %p501 = scmp.ne.s32.totalorder %s484, %s500
      %p502 = scmp.eq.s32.totalorder %s46, 0
      %p503 = por %p501, %p502
      %p504 = scmp.le.s32.totalorder 1, %s40
      %p505 = scmp.lt.s32.totalorder %s40, 3
      %p506 = pnand %p504, %p505
      %p507 = pneg %p506
      // Predicated region
      $region9: #{tpu_custom_call.1} parent=5 // pred_check
        _
      $region10: #{tpu_custom_call.1} parent=5 // pred_check_branch
        %509 = sbr.rel (%p506) target = $region12
      $region11: #{tpu_custom_call.1} parent=5 // pred_region
        %s510 = ssub.s32 %s40, 1
        // Predicated region
        $region13: #{tpu_custom_call.1} parent=11 // pred_check
          %p511 = pneg %p113
        $region14: #{tpu_custom_call.1} parent=11 // pred_check_branch
          %513 = sbr.rel (%p511) target = $region16
        $region15: #{tpu_custom_call.1} parent=11 // pred_region
          %s515 = ssub.s32 16, 16
          %516 = vsyncadd [#allocation6], %s515
          %s518 = sshll.u32 [#allocation7], 4
          %s519 = int_to_ptr.vmem [resolvable:$true] %s518
          %521 = dma.hbm_to_vmem [thread:$0]  %s2, 16, %s519, [#allocation6]
        $region16: #{tpu_custom_call.1} parent=11 // pred_fallthru
          _
        // Predicated region
        $region17: #{tpu_custom_call.1} parent=11 // pred_check
          %p522 = pneg %p134
        $region18: #{tpu_custom_call.1} parent=11 // pred_check_branch
          %524 = sbr.rel (%p522) target = $region20
        $region19: #{tpu_custom_call.1} parent=11 // pred_region
          %s526 = ssub.s32 16, 16
          %527 = vsyncadd [#allocation9], %s526
          %s529 = sshll.u32 [#allocation8], 4
          %s530 = int_to_ptr.vmem [resolvable:$true] %s529
          %532 = dma.hbm_to_vmem [thread:$0]  %s3, 16, %s530, [#allocation9]
        $region20: #{tpu_custom_call.1} parent=11 // pred_fallthru
          _
        // Predicated region
        $region21: #{tpu_custom_call.1} parent=11 // pred_check
          %p533 = pneg %p155
        $region22: #{tpu_custom_call.1} parent=11 // pred_check_branch
          %535 = sbr.rel (%p533) target = $region24
        $region23: #{tpu_custom_call.1} parent=11 // pred_region
          _
        $region24: #{tpu_custom_call.1} parent=11 // pred_fallthru
          _
        // Predicated region
        $region25: #{tpu_custom_call.1} parent=11 // pred_check
          %p536 = pneg %p176
        $region26: #{tpu_custom_call.1} parent=11 // pred_check_branch
          %538 = sbr.rel (%p536) target = $region28
        $region27: #{tpu_custom_call.1} parent=11 // pred_region
          %s540 = ssub.s32 32, 32
          %541 = vsyncadd [#allocation9], %s540
          %s542 = sshll.u32 [#allocation10], 4
          %s543 = int_to_ptr.vmem [resolvable:$true] %s542
          %548 = dma.hbm_to_vmem [thread:$0]  %s5, 32, %s543, [#allocation9], 16, 16, 1
        $region28: #{tpu_custom_call.1} parent=11 // pred_fallthru
          _
        // Predicated region
        $region29: #{tpu_custom_call.1} parent=11 // pred_check
          %p549 = pneg %p197
        $region30: #{tpu_custom_call.1} parent=11 // pred_check_branch
          %551 = sbr.rel (%p549) target = $region32
        $region31: #{tpu_custom_call.1} parent=11 // pred_region
          _
        $region32: #{tpu_custom_call.1} parent=11 // pred_fallthru
          _
        // Predicated region
        $region33: #{tpu_custom_call.1} parent=11 // pred_check
          %p552 = pneg %p218
        $region34: #{tpu_custom_call.1} parent=11 // pred_check_branch
          %554 = sbr.rel (%p552) target = $region36
        $region35: #{tpu_custom_call.1} parent=11 // pred_region
          %s556 = ssub.s32 32, 32
          %557 = vsyncadd [#allocation12], %s556
          %s558 = sshll.u32 [#allocation11], 4
          %s559 = int_to_ptr.vmem [resolvable:$true] %s558
          %564 = dma.hbm_to_vmem [thread:$0]  %s7, 32, %s559, [#allocation12], 16, 16, 1
        $region36: #{tpu_custom_call.1} parent=11 // pred_fallthru
          _
        // Predicated region
        $region37: #{tpu_custom_call.1} parent=11 // pred_check
          %p565 = pneg %p239
        $region38: #{tpu_custom_call.1} parent=11 // pred_check_branch
          %567 = sbr.rel (%p565) target = $region40
        $region39: #{tpu_custom_call.1} parent=11 // pred_region
          %s569 = ssub.s32 32, 32
          %570 = vsyncadd [#allocation12], %s569
          %s571 = sshll.u32 [#allocation13], 4
          %s572 = int_to_ptr.vmem [resolvable:$true] %s571
          %577 = dma.hbm_to_vmem [thread:$0]  %s8, 32, %s572, [#allocation12], 16, 16, 1
        $region40: #{tpu_custom_call.1} parent=11 // pred_fallthru
          _
        // Predicated region
        $region41: #{tpu_custom_call.1} parent=11 // pred_check
          %p578 = pneg %p260
        $region42: #{tpu_custom_call.1} parent=11 // pred_check_branch
          %580 = sbr.rel (%p578) target = $region44
        $region43: #{tpu_custom_call.1} parent=11 // pred_region
          %s582 = ssub.s32 32, 32
          %583 = vsyncadd [#allocation15], %s582
          %s584 = sshll.u32 [#allocation14], 4
          %s585 = int_to_ptr.vmem [resolvable:$true] %s584
          %590 = dma.hbm_to_vmem [thread:$0]  %s9, 32, %s585, [#allocation15], 16, 16, 1
        $region44: #{tpu_custom_call.1} parent=11 // pred_fallthru
          _
        // Predicated region
        $region45: #{tpu_custom_call.1} parent=11 // pred_check
          %p591 = pneg %p281
        $region46: #{tpu_custom_call.1} parent=11 // pred_check_branch
          %593 = sbr.rel (%p591) target = $region48
        $region47: #{tpu_custom_call.1} parent=11 // pred_region
          _
        $region48: #{tpu_custom_call.1} parent=11 // pred_fallthru
          _
        // Predicated region
        $region49: #{tpu_custom_call.1} parent=11 // pred_check
          %p594 = pneg %p302
        $region50: #{tpu_custom_call.1} parent=11 // pred_check_branch
          %596 = sbr.rel (%p594) target = $region52
        $region51: #{tpu_custom_call.1} parent=11 // pred_region
          %s598 = ssub.s32 32, 32
          %599 = vsyncadd [#allocation15], %s598
          %s600 = sshll.u32 [#allocation16], 4
          %s601 = int_to_ptr.vmem [resolvable:$true] %s600
          %606 = dma.hbm_to_vmem [thread:$0]  %s11, 32, %s601, [#allocation15], 16, 16, 1
        $region52: #{tpu_custom_call.1} parent=11 // pred_fallthru
          _
        // Predicated region
        $region53: #{tpu_custom_call.1} parent=11 // pred_check
          %p607 = pneg %p323
        $region54: #{tpu_custom_call.1} parent=11 // pred_check_branch
          %609 = sbr.rel (%p607) target = $region56
        $region55: #{tpu_custom_call.1} parent=11 // pred_region
          _
        $region56: #{tpu_custom_call.1} parent=11 // pred_fallthru
          _
        // Predicated region
        $region57: #{tpu_custom_call.1} parent=11 // pred_check
          %p610 = pneg %p344
        $region58: #{tpu_custom_call.1} parent=11 // pred_check_branch
          %612 = sbr.rel (%p610) target = $region60
        $region59: #{tpu_custom_call.1} parent=11 // pred_region
          %s614 = ssub.s32 32, 32
          %615 = vsyncadd [#allocation18], %s614
          %s616 = sshll.u32 [#allocation17], 4
          %s617 = int_to_ptr.vmem [resolvable:$true] %s616
          %622 = dma.hbm_to_vmem [thread:$0]  %s13, 32, %s617, [#allocation18], 16, 16, 1
        $region60: #{tpu_custom_call.1} parent=11 // pred_fallthru
          _
        // Predicated region
        $region61: #{tpu_custom_call.1} parent=11 // pred_check
          %p623 = pneg %p365
        $region62: #{tpu_custom_call.1} parent=11 // pred_check_branch
          %625 = sbr.rel (%p623) target = $region64
        $region63: #{tpu_custom_call.1} parent=11 // pred_region
          %s627 = ssub.s32 32, 32
          %628 = vsyncadd [#allocation18], %s627
          %s629 = sshll.u32 [#allocation19], 4
          %s630 = int_to_ptr.vmem [resolvable:$true] %s629
          %635 = dma.hbm_to_vmem [thread:$0]  %s14, 32, %s630, [#allocation18], 16, 16, 1
        $region64: #{tpu_custom_call.1} parent=11 // pred_fallthru
          _
        // Predicated region
        $region65: #{tpu_custom_call.1} parent=11 // pred_check
          %p636 = pneg %p386
        $region66: #{tpu_custom_call.1} parent=11 // pred_check_branch
          %638 = sbr.rel (%p636) target = $region68
        $region67: #{tpu_custom_call.1} parent=11 // pred_region
          %s640 = ssub.s32 32, 32
          %641 = vsyncadd [#allocation21], %s640
          %s642 = sshll.u32 [#allocation20], 4
          %s643 = int_to_ptr.vmem [resolvable:$true] %s642
          %648 = dma.hbm_to_vmem [thread:$0]  %s15, 32, %s643, [#allocation21], 16, 16, 1
        $region68: #{tpu_custom_call.1} parent=11 // pred_fallthru
          _
        // Predicated region
        $region69: #{tpu_custom_call.1} parent=11 // pred_check
          %p649 = pneg %p407
        $region70: #{tpu_custom_call.1} parent=11 // pred_check_branch
          %651 = sbr.rel (%p649) target = $region72
        $region71: #{tpu_custom_call.1} parent=11 // pred_region
          _
        $region72: #{tpu_custom_call.1} parent=11 // pred_fallthru
          _
        // Predicated region
        $region73: #{tpu_custom_call.1} parent=11 // pred_check
          %p652 = pneg %p428
        $region74: #{tpu_custom_call.1} parent=11 // pred_check_branch
          %654 = sbr.rel (%p652) target = $region76
        $region75: #{tpu_custom_call.1} parent=11 // pred_region
          %s656 = ssub.s32 16, 16
          %657 = vsyncadd [#allocation21], %s656
          %s659 = sshll.u32 [#allocation22], 4
          %s660 = int_to_ptr.vmem [resolvable:$true] %s659
          %662 = dma.hbm_to_vmem [thread:$0]  %s17, 16, %s660, [#allocation21]
        $region76: #{tpu_custom_call.1} parent=11 // pred_fallthru
          _
        // Predicated region
        $region77: #{tpu_custom_call.1} parent=11 // pred_check
          %p663 = pneg %p449
        $region78: #{tpu_custom_call.1} parent=11 // pred_check_branch
          %665 = sbr.rel (%p663) target = $region80
        $region79: #{tpu_custom_call.1} parent=11 // pred_region
          _
        $region80: #{tpu_custom_call.1} parent=11 // pred_fallthru
          _
        // Predicated region
        $region81: #{tpu_custom_call.1} parent=11 // pred_check
          %p666 = pneg %p470
        $region82: #{tpu_custom_call.1} parent=11 // pred_check_branch
          %668 = sbr.rel (%p666) target = $region84
        $region83: #{tpu_custom_call.1} parent=11 // pred_region
          _
        $region84: #{tpu_custom_call.1} parent=11 // pred_fallthru
          _
      $region12: #{tpu_custom_call.1} parent=5 // pred_fallthru
        _
      %p669 = scmp.lt.s32.totalorder %s40, 2
      // Predicated region
      $region85: #{tpu_custom_call.1} parent=5 // pred_check
        %p670 = pneg %p669
      $region86: #{tpu_custom_call.1} parent=5 // pred_check_branch
        %672 = sbr.rel (%p670) target = $region88
      $region87: #{tpu_custom_call.1} parent=5 // pred_region
        // Predicated region
        $region89: #{tpu_custom_call.1} parent=87 // pred_check
          %p673 = pneg %p60
        $region90: #{tpu_custom_call.1} parent=87 // pred_check_branch
          %675 = sbr.rel (%p673) target = $region92
        $region91: #{tpu_custom_call.1} parent=87 // pred_region
          %s676 = sand.u32 %s50, 1
          %s677 = scalar_lea.sflag [#allocation3], %s676
          %s678 = sand.u32 %s50, 1
          %s679 = smul.addr %s678, 8
          %s680 = scalar_lea.vmem [#allocation2], %s679
          %s682 = ssub.s32 128, 128
          %683 = vsyncadd %s677, %s682
          %s684 = smul.addr %s40, 128
          %s685 = scalar_lea.hbm %s0, %s684
          %s687 = sshll.u32 %s680, 4
          %s688 = int_to_ptr.vmem [resolvable:$true] %s687
          %690 = dma.hbm_to_vmem [thread:$0]  %s685, 128, %s688, %s677
        $region92: #{tpu_custom_call.1} parent=87 // pred_fallthru
          _
        // Predicated region
        $region93: #{tpu_custom_call.1} parent=87 // pred_check
          %p691 = pneg %p86
        $region94: #{tpu_custom_call.1} parent=87 // pred_check_branch
          %693 = sbr.rel (%p691) target = $region96
        $region95: #{tpu_custom_call.1} parent=87 // pred_region
          %s694 = sand.u32 %s40, 1
          %s695 = scalar_lea.sflag [#allocation6], %s694
          %s696 = sand.u32 %s76, 1
          %s697 = scalar_lea.vmem [#allocation5], %s696
          %s699 = ssub.s32 16, 16
          %700 = vsyncadd %s695, %s699
          %s701 = smul.addr %s40, 16
          %s702 = scalar_lea.hbm %s1, %s701
          %s704 = sshll.u32 %s697, 4
          %s705 = int_to_ptr.vmem [resolvable:$true] %s704
          %707 = dma.hbm_to_vmem [thread:$0]  %s702, 16, %s705, %s695
        $region96: #{tpu_custom_call.1} parent=87 // pred_fallthru
          _
      $region88: #{tpu_custom_call.1} parent=5 // pred_fallthru
        _
      %p708 = scmp.le.s32.totalorder 1, %s40
      %p709 = scmp.lt.s32.totalorder %s40, 3
      %p710 = pnand %p708, %p709
      %p711 = pneg %p710
      // Predicated region
      $region97: #{tpu_custom_call.1} parent=5 // pred_check
        _
      $region98: #{tpu_custom_call.1} parent=5 // pred_check_branch
        %713 = sbr.rel (%p710) target = $region100
      $region99: #{tpu_custom_call.1} parent=5 // pred_region
        %s714 = ssub.s32 %s40, 1
        %s715 = sand.u32 %s53, 1
        %s716 = scalar_lea.sflag [#allocation3], %s715
        %s717 = sand.u32 %s53, 1
        %s718 = smul.addr %s717, 8
        %s719 = scalar_lea.vmem [#allocation2], %s718
        // Predicated region
        $region101: #{tpu_custom_call.1} parent=99 // pred_check
          %p720 = pneg %p66
        $region102: #{tpu_custom_call.1} parent=99 // pred_check_branch
          %722 = sbr.rel (%p720) target = $region104
        $region103: #{tpu_custom_call.1} parent=99 // pred_region
          %723 = dma.done %s716, 128
        $region104: #{tpu_custom_call.1} parent=99 // pred_fallthru
          _
        %s724 = sand.u32 %s45, 1
        %s725 = scalar_lea.sflag [#allocation6], %s724
        %s726 = sand.u32 %s79, 1
        %s727 = scalar_lea.vmem [#allocation5], %s726
        // Predicated region
        $region105: #{tpu_custom_call.1} parent=99 // pred_check
          %p728 = pneg %p92
        $region106: #{tpu_custom_call.1} parent=99 // pred_check_branch
          %730 = sbr.rel (%p728) target = $region108
        $region107: #{tpu_custom_call.1} parent=99 // pred_region
          %731 = dma.done %s725, 16
        $region108: #{tpu_custom_call.1} parent=99 // pred_fallthru
          _
        // Predicated region
        $region109: #{tpu_custom_call.1} parent=99 // pred_check
          %p732 = pneg %p113
        $region110: #{tpu_custom_call.1} parent=99 // pred_check_branch
          %734 = sbr.rel (%p732) target = $region112
        $region111: #{tpu_custom_call.1} parent=99 // pred_region
          %735 = dma.done [#allocation6], 16
        $region112: #{tpu_custom_call.1} parent=99 // pred_fallthru
          _
        // Predicated region
        $region113: #{tpu_custom_call.1} parent=99 // pred_check
          %p736 = pneg %p134
        $region114: #{tpu_custom_call.1} parent=99 // pred_check_branch
          %738 = sbr.rel (%p736) target = $region116
        $region115: #{tpu_custom_call.1} parent=99 // pred_region
          %739 = dma.done [#allocation9], 16
        $region116: #{tpu_custom_call.1} parent=99 // pred_fallthru
          _
        // Predicated region
        $region117: #{tpu_custom_call.1} parent=99 // pred_check
          %p740 = pneg %p176
        $region118: #{tpu_custom_call.1} parent=99 // pred_check_branch
          %742 = sbr.rel (%p740) target = $region120
        $region119: #{tpu_custom_call.1} parent=99 // pred_region
          %743 = dma.done [#allocation9], 32
        $region120: #{tpu_custom_call.1} parent=99 // pred_fallthru
          _
        // Predicated region
        $region121: #{tpu_custom_call.1} parent=99 // pred_check
          %p744 = pneg %p218
        $region122: #{tpu_custom_call.1} parent=99 // pred_check_branch
          %746 = sbr.rel (%p744) target = $region124
        $region123: #{tpu_custom_call.1} parent=99 // pred_region
          %747 = dma.done [#allocation12], 32
        $region124: #{tpu_custom_call.1} parent=99 // pred_fallthru
          _
        // Predicated region
        $region125: #{tpu_custom_call.1} parent=99 // pred_check
          %p748 = pneg %p239
        $region126: #{tpu_custom_call.1} parent=99 // pred_check_branch
          %750 = sbr.rel (%p748) target = $region128
        $region127: #{tpu_custom_call.1} parent=99 // pred_region
          %751 = dma.done [#allocation12], 32
        $region128: #{tpu_custom_call.1} parent=99 // pred_fallthru
          _
        // Predicated region
        $region129: #{tpu_custom_call.1} parent=99 // pred_check
          %p752 = pneg %p260
        $region130: #{tpu_custom_call.1} parent=99 // pred_check_branch
          %754 = sbr.rel (%p752) target = $region132
        $region131: #{tpu_custom_call.1} parent=99 // pred_region
          %755 = dma.done [#allocation15], 32
        $region132: #{tpu_custom_call.1} parent=99 // pred_fallthru
          _
        // Predicated region
        $region133: #{tpu_custom_call.1} parent=99 // pred_check
          %p756 = pneg %p302
        $region134: #{tpu_custom_call.1} parent=99 // pred_check_branch
          %758 = sbr.rel (%p756) target = $region136
        $region135: #{tpu_custom_call.1} parent=99 // pred_region
          %759 = dma.done [#allocation15], 32
        $region136: #{tpu_custom_call.1} parent=99 // pred_fallthru
          _
        // Predicated region
        $region137: #{tpu_custom_call.1} parent=99 // pred_check
          %p760 = pneg %p344
        $region138: #{tpu_custom_call.1} parent=99 // pred_check_branch
          %762 = sbr.rel (%p760) target = $region140
        $region139: #{tpu_custom_call.1} parent=99 // pred_region
          %763 = dma.done [#allocation18], 32
        $region140: #{tpu_custom_call.1} parent=99 // pred_fallthru
          _
        // Predicated region
        $region141: #{tpu_custom_call.1} parent=99 // pred_check
          %p764 = pneg %p365
        $region142: #{tpu_custom_call.1} parent=99 // pred_check_branch
          %766 = sbr.rel (%p764) target = $region144
        $region143: #{tpu_custom_call.1} parent=99 // pred_region
          %767 = dma.done [#allocation18], 32
        $region144: #{tpu_custom_call.1} parent=99 // pred_fallthru
          _
        // Predicated region
        $region145: #{tpu_custom_call.1} parent=99 // pred_check
          %p768 = pneg %p386
        $region146: #{tpu_custom_call.1} parent=99 // pred_check_branch
          %770 = sbr.rel (%p768) target = $region148
        $region147: #{tpu_custom_call.1} parent=99 // pred_region
          %771 = dma.done [#allocation21], 32
        $region148: #{tpu_custom_call.1} parent=99 // pred_fallthru
          _
        // Predicated region
        $region149: #{tpu_custom_call.1} parent=99 // pred_check
          %p772 = pneg %p428
        $region150: #{tpu_custom_call.1} parent=99 // pred_check_branch
          %774 = sbr.rel (%p772) target = $region152
        $region151: #{tpu_custom_call.1} parent=99 // pred_region
          %775 = dma.done [#allocation21], 16
        $region152: #{tpu_custom_call.1} parent=99 // pred_fallthru
          _
        %s776 = sand.u32 %s53, 1
        %s777 = scalar_lea.sflag [#allocation3], %s776
        %s778 = sand.u32 %s53, 1
        %s779 = smul.addr %s778, 8
        %s780 = scalar_lea.vmem [#allocation2], %s779
        %p781 = pneg %p66
        %p782 = pneg %p63
        %s783 = sand.u32 %s45, 1
        %s784 = scalar_lea.sflag [#allocation6], %s783
        %s785 = sand.u32 %s79, 1
        %s786 = scalar_lea.vmem [#allocation5], %s785
        %p787 = pneg %p92
        %p788 = pneg %p89
        %p789 = pneg %p113
        %p790 = pneg %p110
        %p791 = pneg %p134
        %p792 = pneg %p131
        %p793 = pneg %p155
        %p794 = pneg %p152
        %p795 = pneg %p176
        %p796 = pneg %p173
        %p797 = pneg %p197
        %p798 = pneg %p194
        %p799 = pneg %p218
        %p800 = pneg %p215
        %p801 = pneg %p239
        %p802 = pneg %p236
        %p803 = pneg %p260
        %p804 = pneg %p257
        %p805 = pneg %p281
        %p806 = pneg %p278
        %p807 = pneg %p302
        %p808 = pneg %p299
        %p809 = pneg %p323
        %p810 = pneg %p320
        %p811 = pneg %p344
        %p812 = pneg %p341
        %p813 = pneg %p365
        %p814 = pneg %p362
        %p815 = pneg %p386
        %p816 = pneg %p383
        %p817 = pneg %p407
        %p818 = pneg %p404
        %p819 = pneg %p428
        %p820 = pneg %p425
        %p821 = pneg %p449
        %p822 = pneg %p446
        %p823 = pneg %p470
        %p824 = pneg %p467
        %p825 = pneg %p496
        %p826 = pneg %p493
        %s827 = sand.u32 %s483, 1
        %s828 = scalar_lea.sflag [#allocation4], %s827
        %s829 = sand.u32 %s483, 1
        %s830 = scalar_lea.vmem [#allocation23], %s829
        %v831 = vld [vmem:[%s719] sm:$0xff]
        %v832 = vld [vmem:[#allocation7] sm:$0x1]
        %v833 = vld [vmem:[#allocation8] sm:$0x1]
        %vm834 = vcmask 261120
        %v835 = vsel %vm834, %v831, 0.0
        %836 = vadd.xlane.f32.xlu0 %v835
        %v837 = vpop.xlane.xlu0 %836
        %v838 = vrcp.pop 32.0
        %v839 = vmul.f32 %v837, %v838
        %v840 = vsub.f32 %v831, %v839
        %v841 = vmul.f32 %v840, %v840
        %v842 = vsel %vm834, %v841, 0.0
        %843 = vadd.xlane.f32.xlu0 %v842
        %v844 = vpop.xlane.xlu0 %843
        %v845 = vmul.f32 %v844, %v838
        %v846 = vadd.f32 %v845, 1e-12
        %v847 = vrsqrt.pop %v846
        %v848 = vmul.f32 %v840, %v847
        %v850 = vlaneseq
        %v851 = vshrl.u32 %v850, 7
        %v852 = vsub.s32 0, %v851
        %v853 = vrot.slane %v832, %v852
        %v855 = vmul.f32 %v848, %v853
        %v857 = vlaneseq
        %v858 = vshrl.u32 %v857, 7
        %v859 = vsub.s32 0, %v858
        %v860 = vrot.slane %v833, %v859
        %v862 = vadd.f32 %v855, %v860
        %v863 = vld [vmem:[%s727] sm:$0x1]
        %v864 = vld [vmem:[%s4] sm:$0xff]
        %v865 = vld [vmem:[%s4 + $0x8] sm:$0xff]
        %v866 = vld [vmem:[%s4 + $0x10] sm:$0xff]
        %v867 = vld [vmem:[%s4 + $0x18] sm:$0xff]
        %v868 = vld [vmem:[#allocation10] sm:$0x1]
        %v870 = vlaneseq
        %v871 = vshrl.u32 %v870, 7
        %v872 = vsub.s32 0, %v871
        %v873 = vrot.slane %v868, %v872
        %v876 = vsel %vm834, %v862, 0
        %878 = vmatprep.subr.mxu0 0.0
        %879 = vmatpush1.msra.mxu0 %v864
        %880 = vmatprep.subr.mxu0 0.0
        %881 = vmatpush1.msra.mxu0 %v865
        %882 = vmatprep.subr.mxu0 0.0
        %883 = vmatpush1.msra.mxu0 %v866
        %884 = vmatprep.subr.mxu0 0.0
        %885 = vmatpush1.msra.mxu0 %v867
        %886 = vmatprep.subr.mxu0 0.0
        %887 = vmatpush1.msra.mxu0 0.0
        %888 = vmatprep.subr.mxu0 0.0
        %889 = vmatpush1.msra.mxu0 0.0
        %890 = vmatprep.subr.mxu0 0.0
        %891 = vmatpush1.msra.mxu0 0.0
        %892 = vmatprep.subr.mxu0 0.0
        %893 = vmatpush1.msra.mxu0 0.0
        %894 = vmatprep.subr.mxu0 0.0
        %895 = vmatpush1.msra.mxu0 0.0
        %896 = vmatprep.subr.mxu0 0.0
        %897 = vmatpush1.msra.mxu0 0.0
        %898 = vmatprep.subr.mxu0 0.0
        %899 = vmatpush1.msra.mxu0 0.0
        %900 = vmatprep.subr.mxu0 0.0
        %901 = vmatpush1.msra.mxu0 0.0
        %902 = vmatprep.subr.mxu0 0.0
        %903 = vmatpush1.msra.mxu0 0.0
        %904 = vmatprep.subr.mxu0 0.0
        %905 = vmatpush1.msra.mxu0 0.0
        %906 = vmatprep.subr.mxu0 0.0
        %907 = vmatpush1.msra.mxu0 0.0
        %908 = vmatprep.subr.mxu0 0.0
        %909 = vmatpush1.msra.mxu0 0.0
        %910 = vmatprep.subr.mxu0 0.0
        %911 = vmatpush1.msra.mxu0 0.0
        %912 = vmatprep.subr.mxu0 0.0
        %913 = vmatpush1.msra.mxu0 0.0
        %914 = vmatprep.subr.mxu0 0.0
        %915 = vmatpush1.msra.mxu0 0.0
        %916 = vmatprep.subr.mxu0 0.0
        %917 = vmatpush1.msra.mxu0 0.0
        %918 = vmatprep.subr.mxu0 0.0
        %919 = vmatpush1.msra.mxu0 0.0
        %920 = vmatprep.subr.mxu0 0.0
        %921 = vmatpush1.msra.mxu0 0.0
        %922 = vmatprep.subr.mxu0 0.0
        %923 = vmatpush1.msra.mxu0 0.0
        %924 = vmatprep.subr.mxu0 0.0
        %925 = vmatpush1.msra.mxu0 0.0
        %926 = vmatprep.subr.mxu0 0.0
        %927 = vmatpush1.msra.mxu0 0.0
        %928 = vmatprep.subr.mxu0 0.0
        %929 = vmatpush1.msra.mxu0 0.0
        %930 = vmatprep.subr.mxu0 0.0
        %931 = vmatpush1.msra.mxu0 0.0
        %932 = vmatprep.subr.mxu0 0.0
        %933 = vmatpush1.msra.mxu0 0.0
        %934 = vmatprep.subr.mxu0 0.0
        %935 = vmatpush1.msra.mxu0 0.0
        %936 = vmatprep.subr.mxu0 0.0
        %937 = vmatpush1.msra.mxu0 0.0
        %938 = vmatprep.subr.mxu0 0.0
        %939 = vmatpush1.msra.mxu0 0.0
        %940 = vmatprep.subr.mxu0 0.0
        %941 = vmatpush1.msra.mxu0 0.0
        %942 = vmatprep.mubr.f32.mxu0 0.0
        %943 = vmatmul.mubr.f32.gmra.mrb[0].mxu0 %v876
        %v944 = vpop.f32.mrb[0].mxu0
        %v945 = vadd.f32 %v873, %v944
        %v946 = vpop.f32.mrb[0].mxu0
        %947 = vdwg.mxu0
        %v948 = vld [vmem:[%s6] sm:$0xff]
        %v949 = vld [vmem:[%s6 + $0x8] sm:$0xff]
        %v950 = vld [vmem:[%s6 + $0x10] sm:$0xff]
        %v951 = vld [vmem:[%s6 + $0x18] sm:$0xff]
        %953 = vrot.lane.b32.xlu0 %v945, 96
        %v954 = vpop.permute.xlu0 %953
        %vm955 = vcmask 130048
        %v956 = vsel %vm955, %v945, 0
        %v958 = vsel %vm955, %v954, 0
        %960 = vmatprep.subr.mxu0 0.0
        %961 = vmatpush1.xpose.msra.mxu0 %v958
        %962 = vmatprep.subr.mxu0 0.0
        %963 = vmatpush1.xpose.msra.mxu0 0.0
        %964 = vmatprep.subr.mxu0 0.0
        %965 = vmatpush1.xpose.msra.mxu0 0.0
        %966 = vmatprep.subr.mxu0 0.0
        %967 = vmatpush1.xpose.msra.mxu0 0.0
        %968 = vmatprep.subr.mxu0 0.0
        %969 = vmatpush1.xpose.msra.mxu0 0.0
        %970 = vmatprep.subr.mxu0 0.0
        %971 = vmatpush1.xpose.msra.mxu0 0.0
        %972 = vmatprep.subr.mxu0 0.0
        %973 = vmatpush1.xpose.msra.mxu0 0.0
        %974 = vmatprep.subr.mxu0 0.0
        %975 = vmatpush1.xpose.msra.mxu0 0.0
        %976 = vmatprep.subr.mxu0 0.0
        %977 = vmatpush1.xpose.msra.mxu0 0.0
        %978 = vmatprep.subr.mxu0 0.0
        %979 = vmatpush1.xpose.msra.mxu0 0.0
        %980 = vmatprep.subr.mxu0 0.0
        %981 = vmatpush1.xpose.msra.mxu0 0.0
        %982 = vmatprep.subr.mxu0 0.0
        %983 = vmatpush1.xpose.msra.mxu0 0.0
        %984 = vmatprep.subr.mxu0 0.0
        %985 = vmatpush1.xpose.msra.mxu0 0.0
        %986 = vmatprep.subr.mxu0 0.0
        %987 = vmatpush1.xpose.msra.mxu0 0.0
        %988 = vmatprep.subr.mxu0 0.0
        %989 = vmatpush1.xpose.msra.mxu0 0.0
        %990 = vmatprep.subr.mxu0 0.0
        %991 = vmatpush1.xpose.msra.mxu0 0.0
        %992 = vmatprep.subr.mxu0 0.0
        %993 = vmatpush1.xpose.msra.mxu0 0.0
        %994 = vmatprep.subr.mxu0 0.0
        %995 = vmatpush1.xpose.msra.mxu0 0.0
        %996 = vmatprep.subr.mxu0 0.0
        %997 = vmatpush1.xpose.msra.mxu0 0.0
        %998 = vmatprep.subr.mxu0 0.0
        %999 = vmatpush1.xpose.msra.mxu0 0.0
        %1000 = vmatprep.subr.mxu0 0.0
        %1001 = vmatpush1.xpose.msra.mxu0 0.0
        %1002 = vmatprep.subr.mxu0 0.0
        %1003 = vmatpush1.xpose.msra.mxu0 0.0
        %1004 = vmatprep.subr.mxu0 0.0
        %1005 = vmatpush1.xpose.msra.mxu0 0.0
        %1006 = vmatprep.subr.mxu0 0.0
        %1007 = vmatpush1.xpose.msra.mxu0 0.0
        %1008 = vmatprep.subr.mxu0 0.0
        %1009 = vmatpush1.xpose.msra.mxu0 0.0
        %1010 = vmatprep.subr.mxu0 0.0
        %1011 = vmatpush1.xpose.msra.mxu0 0.0
        %1012 = vmatprep.subr.mxu0 0.0
        %1013 = vmatpush1.xpose.msra.mxu0 0.0
        %1014 = vmatprep.subr.mxu0 0.0
        %1015 = vmatpush1.xpose.msra.mxu0 0.0
        %1016 = vmatprep.subr.mxu0 0.0
        %1017 = vmatpush1.xpose.msra.mxu0 0.0
        %1018 = vmatprep.subr.mxu0 0.0
        %1019 = vmatpush1.xpose.msra.mxu0 0.0
        %1020 = vmatprep.subr.mxu0 0.0
        %1021 = vmatpush1.xpose.msra.mxu0 0.0
        %1022 = vmatprep.subr.mxu0 0.0
        %1023 = vmatpush1.xpose.msra.mxu0 0.0
        %1024 = vmatprep.mubr.f32.mxu0 0.0
        %1025 = vmatmul.mubr.f32.gmra.mrb[0].mxu0 %v956
        %v1026 = vpop.f32.mrb[0].mxu0
        %v1027 = vadd.f32 0.0, %v1026
        %v1028 = vpop.f32.mrb[0].mxu0
        %1029 = vdwg.mxu0
        %v1030 = vmul.f32 %v1027, 0.25
        %v1032 = vlaneseq
        %v1033 = vshrl.u32 %v1032, 7
        %v1034 = vsub.s32 0, %v1033
        %v1035 = vrot.slane %v863, %v1034
        %v1037 = vadd.f32 %v1030, %v1035
        %vm1038 = vcmask 64512
        %v1039 = vsel %vm1038, %v1037, -inf
        %1040 = vmax.xlane.f32.xlu0 %v1039
        %v1041 = vpop.xlane.xlu0 %1040
        %v1042 = vsub.f32 %v1037, %v1041
        %v1043 = vmul.f32 %v1042, 1.442695
        %v1044 = vpow.pop %v1043
        %v1045 = vsel %vm1038, %v1044, 0.0
        %1046 = vadd.xlane.f32.xlu0 %v1045
        %v1047 = vpop.xlane.xlu0 %1046
        %v1048 = vrcp.pop %v1047
        %v1049 = vmul.f32 %v1044, %v1048
        %1050 = vrot.lane.b32.xlu0 %v945, 64
        %v1051 = vpop.permute.xlu0 %1050
        %v1054 = vsel %vm1038, %v1049, 0
        %1056 = vmatprep.subr.mxu0 0.0
        %1057 = vmatpush1.msra.mxu0 %v1051
        %1058 = vmatprep.subr.mxu0 0.0
        %1059 = vmatpush1.msra.mxu0 0.0
        %1060 = vmatprep.subr.mxu0 0.0
        %1061 = vmatpush1.msra.mxu0 0.0
        %1062 = vmatprep.subr.mxu0 0.0
        %1063 = vmatpush1.msra.mxu0 0.0
        %1064 = vmatprep.subr.mxu0 0.0
        %1065 = vmatpush1.msra.mxu0 0.0
        %1066 = vmatprep.subr.mxu0 0.0
        %1067 = vmatpush1.msra.mxu0 0.0
        %1068 = vmatprep.subr.mxu0 0.0
        %1069 = vmatpush1.msra.mxu0 0.0
        %1070 = vmatprep.subr.mxu0 0.0
        %1071 = vmatpush1.msra.mxu0 0.0
        %1072 = vmatprep.subr.mxu0 0.0
        %1073 = vmatpush1.msra.mxu0 0.0
        %1074 = vmatprep.subr.mxu0 0.0
        %1075 = vmatpush1.msra.mxu0 0.0
        %1076 = vmatprep.subr.mxu0 0.0
        %1077 = vmatpush1.msra.mxu0 0.0
        %1078 = vmatprep.subr.mxu0 0.0
        %1079 = vmatpush1.msra.mxu0 0.0
        %1080 = vmatprep.subr.mxu0 0.0
        %1081 = vmatpush1.msra.mxu0 0.0
        %1082 = vmatprep.subr.mxu0 0.0
        %1083 = vmatpush1.msra.mxu0 0.0
        %1084 = vmatprep.subr.mxu0 0.0
        %1085 = vmatpush1.msra.mxu0 0.0
        %1086 = vmatprep.subr.mxu0 0.0
        %1087 = vmatpush1.msra.mxu0 0.0
        %1088 = vmatprep.subr.mxu0 0.0
        %1089 = vmatpush1.msra.mxu0 0.0
        %1090 = vmatprep.subr.mxu0 0.0
        %1091 = vmatpush1.msra.mxu0 0.0
        %1092 = vmatprep.subr.mxu0 0.0
        %1093 = vmatpush1.msra.mxu0 0.0
        %1094 = vmatprep.subr.mxu0 0.0
        %1095 = vmatpush1.msra.mxu0 0.0
        %1096 = vmatprep.subr.mxu0 0.0
        %1097 = vmatpush1.msra.mxu0 0.0
        %1098 = vmatprep.subr.mxu0 0.0
        %1099 = vmatpush1.msra.mxu0 0.0
        %1100 = vmatprep.subr.mxu0 0.0
        %1101 = vmatpush1.msra.mxu0 0.0
        %1102 = vmatprep.subr.mxu0 0.0
        %1103 = vmatpush1.msra.mxu0 0.0
        %1104 = vmatprep.subr.mxu0 0.0
        %1105 = vmatpush1.msra.mxu0 0.0
        %1106 = vmatprep.subr.mxu0 0.0
        %1107 = vmatpush1.msra.mxu0 0.0
        %1108 = vmatprep.subr.mxu0 0.0
        %1109 = vmatpush1.msra.mxu0 0.0
        %1110 = vmatprep.subr.mxu0 0.0
        %1111 = vmatpush1.msra.mxu0 0.0
        %1112 = vmatprep.subr.mxu0 0.0
        %1113 = vmatpush1.msra.mxu0 0.0
        %1114 = vmatprep.subr.mxu0 0.0
        %1115 = vmatpush1.msra.mxu0 0.0
        %1116 = vmatprep.subr.mxu0 0.0
        %1117 = vmatpush1.msra.mxu0 0.0
        %1118 = vmatprep.subr.mxu0 0.0
        %1119 = vmatpush1.msra.mxu0 0.0
        %1120 = vmatprep.mubr.f32.mxu0 0.0
        %1121 = vmatmul.mubr.f32.gmra.mrb[0].mxu0 %v1054
        %v1122 = vpop.f32.mrb[0].mxu0
        %v1123 = vadd.f32 0.0, %v1122
        %v1124 = vpop.f32.mrb[0].mxu0
        %1125 = vdwg.mxu0
        %1126 = vrot.lane.b32.xlu0 %v945, 112
        %v1127 = vpop.permute.xlu0 %1126
        %1128 = vrot.lane.b32.xlu0 %v945, 80
        %v1129 = vpop.permute.xlu0 %1128
        %v1130 = vsel %vm955, %v1127, 0
        %v1132 = vsel %vm955, %v1129, 0
        %1134 = vmatprep.subr.mxu0 0.0
        %1135 = vmatpush1.xpose.msra.mxu0 %v1132
        %1136 = vmatprep.subr.mxu0 0.0
        %1137 = vmatpush1.xpose.msra.mxu0 0.0
        %1138 = vmatprep.subr.mxu0 0.0
        %1139 = vmatpush1.xpose.msra.mxu0 0.0
        %1140 = vmatprep.subr.mxu0 0.0
        %1141 = vmatpush1.xpose.msra.mxu0 0.0
        %1142 = vmatprep.subr.mxu0 0.0
        %1143 = vmatpush1.xpose.msra.mxu0 0.0
        %1144 = vmatprep.subr.mxu0 0.0
        %1145 = vmatpush1.xpose.msra.mxu0 0.0
        %1146 = vmatprep.subr.mxu0 0.0
        %1147 = vmatpush1.xpose.msra.mxu0 0.0
        %1148 = vmatprep.subr.mxu0 0.0
        %1149 = vmatpush1.xpose.msra.mxu0 0.0
        %1150 = vmatprep.subr.mxu0 0.0
        %1151 = vmatpush1.xpose.msra.mxu0 0.0
        %1152 = vmatprep.subr.mxu0 0.0
        %1153 = vmatpush1.xpose.msra.mxu0 0.0
        %1154 = vmatprep.subr.mxu0 0.0
        %1155 = vmatpush1.xpose.msra.mxu0 0.0
        %1156 = vmatprep.subr.mxu0 0.0
        %1157 = vmatpush1.xpose.msra.mxu0 0.0
        %1158 = vmatprep.subr.mxu0 0.0
        %1159 = vmatpush1.xpose.msra.mxu0 0.0
        %1160 = vmatprep.subr.mxu0 0.0
        %1161 = vmatpush1.xpose.msra.mxu0 0.0
        %1162 = vmatprep.subr.mxu0 0.0
        %1163 = vmatpush1.xpose.msra.mxu0 0.0
        %1164 = vmatprep.subr.mxu0 0.0
        %1165 = vmatpush1.xpose.msra.mxu0 0.0
        %1166 = vmatprep.subr.mxu0 0.0
        %1167 = vmatpush1.xpose.msra.mxu0 0.0
        %1168 = vmatprep.subr.mxu0 0.0
        %1169 = vmatpush1.xpose.msra.mxu0 0.0
        %1170 = vmatprep.subr.mxu0 0.0
        %1171 = vmatpush1.xpose.msra.mxu0 0.0
        %1172 = vmatprep.subr.mxu0 0.0
        %1173 = vmatpush1.xpose.msra.mxu0 0.0
        %1174 = vmatprep.subr.mxu0 0.0
        %1175 = vmatpush1.xpose.msra.mxu0 0.0
        %1176 = vmatprep.subr.mxu0 0.0
        %1177 = vmatpush1.xpose.msra.mxu0 0.0
        %1178 = vmatprep.subr.mxu0 0.0
        %1179 = vmatpush1.xpose.msra.mxu0 0.0
        %1180 = vmatprep.subr.mxu0 0.0
        %1181 = vmatpush1.xpose.msra.mxu0 0.0
        %1182 = vmatprep.subr.mxu0 0.0
        %1183 = vmatpush1.xpose.msra.mxu0 0.0
        %1184 = vmatprep.subr.mxu0 0.0
        %1185 = vmatpush1.xpose.msra.mxu0 0.0
        %1186 = vmatprep.subr.mxu0 0.0
        %1187 = vmatpush1.xpose.msra.mxu0 0.0
        %1188 = vmatprep.subr.mxu0 0.0
        %1189 = vmatpush1.xpose.msra.mxu0 0.0
        %1190 = vmatprep.subr.mxu0 0.0
        %1191 = vmatpush1.xpose.msra.mxu0 0.0
        %1192 = vmatprep.subr.mxu0 0.0
        %1193 = vmatpush1.xpose.msra.mxu0 0.0
        %1194 = vmatprep.subr.mxu0 0.0
        %1195 = vmatpush1.xpose.msra.mxu0 0.0
        %1196 = vmatprep.subr.mxu0 0.0
        %1197 = vmatpush1.xpose.msra.mxu0 0.0
        %1198 = vmatprep.mubr.f32.mxu0 0.0
        %1199 = vmatmul.mubr.f32.gmra.mrb[0].mxu0 %v1130
        %v1200 = vpop.f32.mrb[0].mxu0
        %v1201 = vadd.f32 0.0, %v1200
        %v1202 = vpop.f32.mrb[0].mxu0
        %1203 = vdwg.mxu0
        %v1204 = vmul.f32 %v1201, 0.25
        %v1205 = vadd.f32 %v1204, %v1035
        %v1206 = vsel %vm1038, %v1205, -inf
        %1207 = vmax.xlane.f32.xlu0 %v1206
        %v1208 = vpop.xlane.xlu0 %1207
        %v1209 = vsub.f32 %v1205, %v1208
        %v1210 = vmul.f32 %v1209, 1.442695
        %v1211 = vpow.pop %v1210
        %v1212 = vsel %vm1038, %v1211, 0.0
        %1213 = vadd.xlane.f32.xlu0 %v1212
        %v1214 = vpop.xlane.xlu0 %1213
        %v1215 = vrcp.pop %v1214
        %v1216 = vmul.f32 %v1211, %v1215
        %1217 = vrot.lane.b32.xlu0 %v945, 48
        %v1218 = vpop.permute.xlu0 %1217
        %v1221 = vsel %vm1038, %v1216, 0
        %1223 = vmatprep.subr.mxu0 0.0
        %1224 = vmatpush1.msra.mxu0 %v1218
        %1225 = vmatprep.subr.mxu0 0.0
        %1226 = vmatpush1.msra.mxu0 0.0
        %1227 = vmatprep.subr.mxu0 0.0
        %1228 = vmatpush1.msra.mxu0 0.0
        %1229 = vmatprep.subr.mxu0 0.0
        %1230 = vmatpush1.msra.mxu0 0.0
        %1231 = vmatprep.subr.mxu0 0.0
        %1232 = vmatpush1.msra.mxu0 0.0
        %1233 = vmatprep.subr.mxu0 0.0
        %1234 = vmatpush1.msra.mxu0 0.0
        %1235 = vmatprep.subr.mxu0 0.0
        %1236 = vmatpush1.msra.mxu0 0.0
        %1237 = vmatprep.subr.mxu0 0.0
        %1238 = vmatpush1.msra.mxu0 0.0
        %1239 = vmatprep.subr.mxu0 0.0
        %1240 = vmatpush1.msra.mxu0 0.0
        %1241 = vmatprep.subr.mxu0 0.0
        %1242 = vmatpush1.msra.mxu0 0.0
        %1243 = vmatprep.subr.mxu0 0.0
        %1244 = vmatpush1.msra.mxu0 0.0
        %1245 = vmatprep.subr.mxu0 0.0
        %1246 = vmatpush1.msra.mxu0 0.0
        %1247 = vmatprep.subr.mxu0 0.0
        %1248 = vmatpush1.msra.mxu0 0.0
        %1249 = vmatprep.subr.mxu0 0.0
        %1250 = vmatpush1.msra.mxu0 0.0
        %1251 = vmatprep.subr.mxu0 0.0
        %1252 = vmatpush1.msra.mxu0 0.0
        %1253 = vmatprep.subr.mxu0 0.0
        %1254 = vmatpush1.msra.mxu0 0.0
        %1255 = vmatprep.subr.mxu0 0.0
        %1256 = vmatpush1.msra.mxu0 0.0
        %1257 = vmatprep.subr.mxu0 0.0
        %1258 = vmatpush1.msra.mxu0 0.0
        %1259 = vmatprep.subr.mxu0 0.0
        %1260 = vmatpush1.msra.mxu0 0.0
        %1261 = vmatprep.subr.mxu0 0.0
        %1262 = vmatpush1.msra.mxu0 0.0
        %1263 = vmatprep.subr.mxu0 0.0
        %1264 = vmatpush1.msra.mxu0 0.0
        %1265 = vmatprep.subr.mxu0 0.0
        %1266 = vmatpush1.msra.mxu0 0.0
        %1267 = vmatprep.subr.mxu0 0.0
        %1268 = vmatpush1.msra.mxu0 0.0
        %1269 = vmatprep.subr.mxu0 0.0
        %1270 = vmatpush1.msra.mxu0 0.0
        %1271 = vmatprep.subr.mxu0 0.0
        %1272 = vmatpush1.msra.mxu0 0.0
        %1273 = vmatprep.subr.mxu0 0.0
        %1274 = vmatpush1.msra.mxu0 0.0
        %1275 = vmatprep.subr.mxu0 0.0
        %1276 = vmatpush1.msra.mxu0 0.0
        %1277 = vmatprep.subr.mxu0 0.0
        %1278 = vmatpush1.msra.mxu0 0.0
        %1279 = vmatprep.subr.mxu0 0.0
        %1280 = vmatpush1.msra.mxu0 0.0
        %1281 = vmatprep.subr.mxu0 0.0
        %1282 = vmatpush1.msra.mxu0 0.0
        %1283 = vmatprep.subr.mxu0 0.0
        %1284 = vmatpush1.msra.mxu0 0.0
        %1285 = vmatprep.subr.mxu0 0.0
        %1286 = vmatpush1.msra.mxu0 0.0
        %1287 = vmatprep.mubr.f32.mxu0 0.0
        %1288 = vmatmul.mubr.f32.gmra.mrb[0].mxu0 %v1221
        %v1289 = vpop.f32.mrb[0].mxu0
        %v1290 = vadd.f32 0.0, %v1289
        %v1291 = vpop.f32.mrb[0].mxu0
        %1292 = vdwg.mxu0
        %v1294 = vsel %vm955, %v1290, 0
        %1296 = vmatprep.subr.mxu0 0.0
        %1297 = vmatpush1.msra.mxu0 %v950
        %1298 = vmatprep.subr.mxu0 0.0
        %1299 = vmatpush1.msra.mxu0 %v951
        %1300 = vmatprep.subr.mxu0 0.0
        %1301 = vmatpush1.msra.mxu0 0.0
        %1302 = vmatprep.subr.mxu0 0.0
        %1303 = vmatpush1.msra.mxu0 0.0
        %1304 = vmatprep.subr.mxu0 0.0
        %1305 = vmatpush1.msra.mxu0 0.0
        %1306 = vmatprep.subr.mxu0 0.0
        %1307 = vmatpush1.msra.mxu0 0.0
        %1308 = vmatprep.subr.mxu0 0.0
        %1309 = vmatpush1.msra.mxu0 0.0
        %1310 = vmatprep.subr.mxu0 0.0
        %1311 = vmatpush1.msra.mxu0 0.0
        %1312 = vmatprep.subr.mxu0 0.0
        %1313 = vmatpush1.msra.mxu0 0.0
        %1314 = vmatprep.subr.mxu0 0.0
        %1315 = vmatpush1.msra.mxu0 0.0
        %1316 = vmatprep.subr.mxu0 0.0
        %1317 = vmatpush1.msra.mxu0 0.0
        %1318 = vmatprep.subr.mxu0 0.0
        %1319 = vmatpush1.msra.mxu0 0.0
        %1320 = vmatprep.subr.mxu0 0.0
        %1321 = vmatpush1.msra.mxu0 0.0
        %1322 = vmatprep.subr.mxu0 0.0
        %1323 = vmatpush1.msra.mxu0 0.0
        %1324 = vmatprep.subr.mxu0 0.0
        %1325 = vmatpush1.msra.mxu0 0.0
        %1326 = vmatprep.subr.mxu0 0.0
        %1327 = vmatpush1.msra.mxu0 0.0
        %1328 = vmatprep.subr.mxu0 0.0
        %1329 = vmatpush1.msra.mxu0 0.0
        %1330 = vmatprep.subr.mxu0 0.0
        %1331 = vmatpush1.msra.mxu0 0.0
        %1332 = vmatprep.subr.mxu0 0.0
        %1333 = vmatpush1.msra.mxu0 0.0
        %1334 = vmatprep.subr.mxu0 0.0
        %1335 = vmatpush1.msra.mxu0 0.0
        %1336 = vmatprep.subr.mxu0 0.0
        %1337 = vmatpush1.msra.mxu0 0.0
        %1338 = vmatprep.subr.mxu0 0.0
        %1339 = vmatpush1.msra.mxu0 0.0
        %1340 = vmatprep.subr.mxu0 0.0
        %1341 = vmatpush1.msra.mxu0 0.0
        %1342 = vmatprep.subr.mxu0 0.0
        %1343 = vmatpush1.msra.mxu0 0.0
        %1344 = vmatprep.subr.mxu0 0.0
        %1345 = vmatpush1.msra.mxu0 0.0
        %1346 = vmatprep.subr.mxu0 0.0
        %1347 = vmatpush1.msra.mxu0 0.0
        %1348 = vmatprep.subr.mxu0 0.0
        %1349 = vmatpush1.msra.mxu0 0.0
        %1350 = vmatprep.subr.mxu0 0.0
        %1351 = vmatpush1.msra.mxu0 0.0
        %1352 = vmatprep.subr.mxu0 0.0
        %1353 = vmatpush1.msra.mxu0 0.0
        %1354 = vmatprep.subr.mxu0 0.0
        %1355 = vmatpush1.msra.mxu0 0.0
        %1356 = vmatprep.subr.mxu0 0.0
        %1357 = vmatpush1.msra.mxu0 0.0
        %1358 = vmatprep.subr.mxu0 0.0
        %1359 = vmatpush1.msra.mxu0 0.0
        %1360 = vmatprep.mubr.f32.mxu0 0.0
        %1361 = vmatmul.mubr.f32.gmra.mrb[0].mxu0 %v1294
        %v1362 = vpop.f32.mrb[0].mxu0
        %v1363 = vadd.f32 0.0, %v1362
        %v1364 = vpop.f32.mrb[0].mxu0
        %1365 = vdwg.mxu0
        %v1367 = vsel %vm955, %v1123, 0
        %1369 = vmatprep.subr.mxu0 0.0
        %1370 = vmatpush1.msra.mxu0 %v948
        %1371 = vmatprep.subr.mxu0 0.0
        %1372 = vmatpush1.msra.mxu0 %v949
        %1373 = vmatprep.subr.mxu0 0.0
        %1374 = vmatpush1.msra.mxu0 0.0
        %1375 = vmatprep.subr.mxu0 0.0
        %1376 = vmatpush1.msra.mxu0 0.0
        %1377 = vmatprep.subr.mxu0 0.0
        %1378 = vmatpush1.msra.mxu0 0.0
        %1379 = vmatprep.subr.mxu0 0.0
        %1380 = vmatpush1.msra.mxu0 0.0
        %1381 = vmatprep.subr.mxu0 0.0
        %1382 = vmatpush1.msra.mxu0 0.0
        %1383 = vmatprep.subr.mxu0 0.0
        %1384 = vmatpush1.msra.mxu0 0.0
        %1385 = vmatprep.subr.mxu0 0.0
        %1386 = vmatpush1.msra.mxu0 0.0
        %1387 = vmatprep.subr.mxu0 0.0
        %1388 = vmatpush1.msra.mxu0 0.0
        %1389 = vmatprep.subr.mxu0 0.0
        %1390 = vmatpush1.msra.mxu0 0.0
        %1391 = vmatprep.subr.mxu0 0.0
        %1392 = vmatpush1.msra.mxu0 0.0
        %1393 = vmatprep.subr.mxu0 0.0
        %1394 = vmatpush1.msra.mxu0 0.0
        %1395 = vmatprep.subr.mxu0 0.0
        %1396 = vmatpush1.msra.mxu0 0.0
        %1397 = vmatprep.subr.mxu0 0.0
        %1398 = vmatpush1.msra.mxu0 0.0
        %1399 = vmatprep.subr.mxu0 0.0
        %1400 = vmatpush1.msra.mxu0 0.0
        %1401 = vmatprep.subr.mxu0 0.0
        %1402 = vmatpush1.msra.mxu0 0.0
        %1403 = vmatprep.subr.mxu0 0.0
        %1404 = vmatpush1.msra.mxu0 0.0
        %1405 = vmatprep.subr.mxu0 0.0
        %1406 = vmatpush1.msra.mxu0 0.0
        %1407 = vmatprep.subr.mxu0 0.0
        %1408 = vmatpush1.msra.mxu0 0.0
        %1409 = vmatprep.subr.mxu0 0.0
        %1410 = vmatpush1.msra.mxu0 0.0
        %1411 = vmatprep.subr.mxu0 0.0
        %1412 = vmatpush1.msra.mxu0 0.0
        %1413 = vmatprep.subr.mxu0 0.0
        %1414 = vmatpush1.msra.mxu0 0.0
        %1415 = vmatprep.subr.mxu0 0.0
        %1416 = vmatpush1.msra.mxu0 0.0
        %1417 = vmatprep.subr.mxu0 0.0
        %1418 = vmatpush1.msra.mxu0 0.0
        %1419 = vmatprep.subr.mxu0 0.0
        %1420 = vmatpush1.msra.mxu0 0.0
        %1421 = vmatprep.subr.mxu0 0.0
        %1422 = vmatpush1.msra.mxu0 0.0
        %1423 = vmatprep.subr.mxu0 0.0
        %1424 = vmatpush1.msra.mxu0 0.0
        %1425 = vmatprep.subr.mxu0 0.0
        %1426 = vmatpush1.msra.mxu0 0.0
        %1427 = vmatprep.subr.mxu0 0.0
        %1428 = vmatpush1.msra.mxu0 0.0
        %1429 = vmatprep.subr.mxu0 0.0
        %1430 = vmatpush1.msra.mxu0 0.0
        %1431 = vmatprep.subr.mxu0 0.0
        %1432 = vmatpush1.msra.mxu0 0.0
        %1433 = vmatprep.mubr.f32.mxu0 0.0
        %1434 = vmatmul.mubr.f32.gmra.mrb[0].mxu0 %v1367
        %v1435 = vpop.f32.mrb[0].mxu0
        %v1436 = vadd.f32 %v1363, %v1435
        %v1437 = vpop.f32.mrb[0].mxu0
        %1438 = vdwg.mxu0
        %v1439 = vld [vmem:[#allocation11] sm:$0x1]
        %v1441 = vlaneseq
        %v1442 = vshrl.u32 %v1441, 7
        %v1443 = vsub.s32 0, %v1442
        %v1444 = vrot.slane %v1439, %v1443
        %v1446 = vadd.f32 %v1436, %v1444
        %v1447 = vadd.f32 %v862, %v1446
        %v1448 = vld [vmem:[#allocation13] sm:$0x1]
        %v1449 = vld [vmem:[#allocation14] sm:$0x1]
        %v1450 = vsel %vm834, %v1447, 0.0
        %1451 = vadd.xlane.f32.xlu0 %v1450
        %v1452 = vpop.xlane.xlu0 %1451
        %v1453 = vmul.f32 %v1452, %v838
        %v1454 = vsub.f32 %v1447, %v1453
        %v1455 = vmul.f32 %v1454, %v1454
        %v1456 = vsel %vm834, %v1455, 0.0
        %1457 = vadd.xlane.f32.xlu0 %v1456
        %v1458 = vpop.xlane.xlu0 %1457
        %v1459 = vmul.f32 %v1458, %v838
        %v1460 = vadd.f32 %v1459, 1e-12
        %v1461 = vrsqrt.pop %v1460
        %v1462 = vmul.f32 %v1454, %v1461
        %v1464 = vlaneseq
        %v1465 = vshrl.u32 %v1464, 7
        %v1466 = vsub.s32 0, %v1465
        %v1467 = vrot.slane %v1448, %v1466
        %v1469 = vmul.f32 %v1462, %v1467
        %v1471 = vlaneseq
        %v1472 = vshrl.u32 %v1471, 7
        %v1473 = vsub.s32 0, %v1472
        %v1474 = vrot.slane %v1449, %v1473
        %v1476 = vadd.f32 %v1469, %v1474
        %v1477 = vld [vmem:[%s10] sm:$0xff]
        %v1478 = vld [vmem:[%s10 + $0x8] sm:$0xff]
        %v1479 = vld [vmem:[%s10 + $0x10] sm:$0xff]
        %v1480 = vld [vmem:[%s10 + $0x18] sm:$0xff]
        %v1481 = vld [vmem:[#allocation16] sm:$0x1]
        %v1483 = vlaneseq
        %v1484 = vshrl.u32 %v1483, 7
        %v1485 = vsub.s32 0, %v1484
        %v1486 = vrot.slane %v1481, %v1485
        %v1489 = vsel %vm834, %v1476, 0
        %1491 = vmatprep.subr.mxu0 0.0
        %1492 = vmatpush1.msra.mxu0 %v1477
        %1493 = vmatprep.subr.mxu0 0.0
        %1494 = vmatpush1.msra.mxu0 %v1478
        %1495 = vmatprep.subr.mxu0 0.0
        %1496 = vmatpush1.msra.mxu0 %v1479
        %1497 = vmatprep.subr.mxu0 0.0
        %1498 = vmatpush1.msra.mxu0 %v1480
        %1499 = vmatprep.subr.mxu0 0.0
        %1500 = vmatpush1.msra.mxu0 0.0
        %1501 = vmatprep.subr.mxu0 0.0
        %1502 = vmatpush1.msra.mxu0 0.0
        %1503 = vmatprep.subr.mxu0 0.0
        %1504 = vmatpush1.msra.mxu0 0.0
        %1505 = vmatprep.subr.mxu0 0.0
        %1506 = vmatpush1.msra.mxu0 0.0
        %1507 = vmatprep.subr.mxu0 0.0
        %1508 = vmatpush1.msra.mxu0 0.0
        %1509 = vmatprep.subr.mxu0 0.0
        %1510 = vmatpush1.msra.mxu0 0.0
        %1511 = vmatprep.subr.mxu0 0.0
        %1512 = vmatpush1.msra.mxu0 0.0
        %1513 = vmatprep.subr.mxu0 0.0
        %1514 = vmatpush1.msra.mxu0 0.0
        %1515 = vmatprep.subr.mxu0 0.0
        %1516 = vmatpush1.msra.mxu0 0.0
        %1517 = vmatprep.subr.mxu0 0.0
        %1518 = vmatpush1.msra.mxu0 0.0
        %1519 = vmatprep.subr.mxu0 0.0
        %1520 = vmatpush1.msra.mxu0 0.0
        %1521 = vmatprep.subr.mxu0 0.0
        %1522 = vmatpush1.msra.mxu0 0.0
        %1523 = vmatprep.subr.mxu0 0.0
        %1524 = vmatpush1.msra.mxu0 0.0
        %1525 = vmatprep.subr.mxu0 0.0
        %1526 = vmatpush1.msra.mxu0 0.0
        %1527 = vmatprep.subr.mxu0 0.0
        %1528 = vmatpush1.msra.mxu0 0.0
        %1529 = vmatprep.subr.mxu0 0.0
        %1530 = vmatpush1.msra.mxu0 0.0
        %1531 = vmatprep.subr.mxu0 0.0
        %1532 = vmatpush1.msra.mxu0 0.0
        %1533 = vmatprep.subr.mxu0 0.0
        %1534 = vmatpush1.msra.mxu0 0.0
        %1535 = vmatprep.subr.mxu0 0.0
        %1536 = vmatpush1.msra.mxu0 0.0
        %1537 = vmatprep.subr.mxu0 0.0
        %1538 = vmatpush1.msra.mxu0 0.0
        %1539 = vmatprep.subr.mxu0 0.0
        %1540 = vmatpush1.msra.mxu0 0.0
        %1541 = vmatprep.subr.mxu0 0.0
        %1542 = vmatpush1.msra.mxu0 0.0
        %1543 = vmatprep.subr.mxu0 0.0
        %1544 = vmatpush1.msra.mxu0 0.0
        %1545 = vmatprep.subr.mxu0 0.0
        %1546 = vmatpush1.msra.mxu0 0.0
        %1547 = vmatprep.subr.mxu0 0.0
        %1548 = vmatpush1.msra.mxu0 0.0
        %1549 = vmatprep.subr.mxu0 0.0
        %1550 = vmatpush1.msra.mxu0 0.0
        %1551 = vmatprep.subr.mxu0 0.0
        %1552 = vmatpush1.msra.mxu0 0.0
        %1553 = vmatprep.subr.mxu0 0.0
        %1554 = vmatpush1.msra.mxu0 0.0
        %1555 = vmatprep.mubr.f32.mxu0 0.0
        %1556 = vmatmul.mubr.f32.gmra.mrb[0].mxu0 %v1489
        %v1557 = vpop.f32.mrb[0].mxu0
        %v1558 = vadd.f32 %v1486, %v1557
        %v1559 = vpop.f32.mrb[0].mxu0
        %1560 = vdwg.mxu0
        %v1561 = vmul.f32 %v1558, %v1558
        %v1562 = vmul.f32 %v1558, %v1561
        %v1563 = vmul.f32 %v1562, 0.044715
        %v1564 = vadd.f32 %v1558, %v1563
        %v1565 = vmul.f32 %v1564, 0.7978846
        %v1566 = vtanh.pop %v1565
        %v1567 = vadd.f32 %v1566, 1.0
        %v1568 = vmul.f32 %v1567, 0.5
        %v1569 = vmul.f32 %v1558, %v1568
        %v1570 = vld [vmem:[%s12] sm:$0xff]
        %v1571 = vld [vmem:[%s12 + $0x8] sm:$0xff]
        %v1572 = vld [vmem:[%s12 + $0x10] sm:$0xff]
        %v1573 = vld [vmem:[%s12 + $0x18] sm:$0xff]
        %v1574 = vld [vmem:[%s12 + $0x20] sm:$0xff]
        %v1575 = vld [vmem:[%s12 + $0x28] sm:$0xff]
        %v1576 = vld [vmem:[%s12 + $0x30] sm:$0xff]
        %v1577 = vld [vmem:[%s12 + $0x38] sm:$0xff]
        %v1578 = vld [vmem:[#allocation17] sm:$0x1]
        %v1580 = vlaneseq
        %v1581 = vshrl.u32 %v1580, 7
        %v1582 = vsub.s32 0, %v1581
        %v1583 = vrot.slane %v1578, %v1582
        %vm1585 = vcmask 523264
        %v1587 = vsel %vm1585, %v1569, 0
        %1589 = vmatprep.subr.mxu0 0.0
        %1590 = vmatpush1.msra.mxu0 %v1570
        %1591 = vmatprep.subr.mxu0 0.0
        %1592 = vmatpush1.msra.mxu0 %v1571
        %1593 = vmatprep.subr.mxu0 0.0
        %1594 = vmatpush1.msra.mxu0 %v1572
        %1595 = vmatprep.subr.mxu0 0.0
        %1596 = vmatpush1.msra.mxu0 %v1573
        %1597 = vmatprep.subr.mxu0 0.0
        %1598 = vmatpush1.msra.mxu0 %v1574
        %1599 = vmatprep.subr.mxu0 0.0
        %1600 = vmatpush1.msra.mxu0 %v1575
        %1601 = vmatprep.subr.mxu0 0.0
        %1602 = vmatpush1.msra.mxu0 %v1576
        %1603 = vmatprep.subr.mxu0 0.0
        %1604 = vmatpush1.msra.mxu0 %v1577
        %1605 = vmatprep.subr.mxu0 0.0
        %1606 = vmatpush1.msra.mxu0 0.0
        %1607 = vmatprep.subr.mxu0 0.0
        %1608 = vmatpush1.msra.mxu0 0.0
        %1609 = vmatprep.subr.mxu0 0.0
        %1610 = vmatpush1.msra.mxu0 0.0
        %1611 = vmatprep.subr.mxu0 0.0
        %1612 = vmatpush1.msra.mxu0 0.0
        %1613 = vmatprep.subr.mxu0 0.0
        %1614 = vmatpush1.msra.mxu0 0.0
        %1615 = vmatprep.subr.mxu0 0.0
        %1616 = vmatpush1.msra.mxu0 0.0
        %1617 = vmatprep.subr.mxu0 0.0
        %1618 = vmatpush1.msra.mxu0 0.0
        %1619 = vmatprep.subr.mxu0 0.0
        %1620 = vmatpush1.msra.mxu0 0.0
        %1621 = vmatprep.subr.mxu0 0.0
        %1622 = vmatpush1.msra.mxu0 0.0
        %1623 = vmatprep.subr.mxu0 0.0
        %1624 = vmatpush1.msra.mxu0 0.0
        %1625 = vmatprep.subr.mxu0 0.0
        %1626 = vmatpush1.msra.mxu0 0.0
        %1627 = vmatprep.subr.mxu0 0.0
        %1628 = vmatpush1.msra.mxu0 0.0
        %1629 = vmatprep.subr.mxu0 0.0
        %1630 = vmatpush1.msra.mxu0 0.0
        %1631 = vmatprep.subr.mxu0 0.0
        %1632 = vmatpush1.msra.mxu0 0.0
        %1633 = vmatprep.subr.mxu0 0.0
        %1634 = vmatpush1.msra.mxu0 0.0
        %1635 = vmatprep.subr.mxu0 0.0
        %1636 = vmatpush1.msra.mxu0 0.0
        %1637 = vmatprep.subr.mxu0 0.0
        %1638 = vmatpush1.msra.mxu0 0.0
        %1639 = vmatprep.subr.mxu0 0.0
        %1640 = vmatpush1.msra.mxu0 0.0
        %1641 = vmatprep.subr.mxu0 0.0
        %1642 = vmatpush1.msra.mxu0 0.0
        %1643 = vmatprep.subr.mxu0 0.0
        %1644 = vmatpush1.msra.mxu0 0.0
        %1645 = vmatprep.subr.mxu0 0.0
        %1646 = vmatpush1.msra.mxu0 0.0
        %1647 = vmatprep.subr.mxu0 0.0
        %1648 = vmatpush1.msra.mxu0 0.0
        %1649 = vmatprep.subr.mxu0 0.0
        %1650 = vmatpush1.msra.mxu0 0.0
        %1651 = vmatprep.subr.mxu0 0.0
        %1652 = vmatpush1.msra.mxu0 0.0
        %1653 = vmatprep.mubr.f32.mxu0 0.0
        %1654 = vmatmul.mubr.f32.gmra.mrb[0].mxu0 %v1587
        %v1655 = vpop.f32.mrb[0].mxu0
        %v1656 = vadd.f32 %v1583, %v1655
        %v1657 = vpop.f32.mrb[0].mxu0
        %1658 = vdwg.mxu0
        %v1659 = vadd.f32 %v1476, %v1656
        %v1660 = vld [vmem:[#allocation19] sm:$0x1]
        %v1661 = vld [vmem:[#allocation20] sm:$0x1]
        %v1662 = vsel %vm834, %v1659, 0.0
        %1663 = vadd.xlane.f32.xlu0 %v1662
        %v1664 = vpop.xlane.xlu0 %1663
        %v1665 = vmul.f32 %v1664, %v838
        %v1666 = vsub.f32 %v1659, %v1665
        %v1667 = vmul.f32 %v1666, %v1666
        %v1668 = vsel %vm834, %v1667, 0.0
        %1669 = vadd.xlane.f32.xlu0 %v1668
        %v1670 = vpop.xlane.xlu0 %1669
        %v1671 = vmul.f32 %v1670, %v838
        %v1672 = vadd.f32 %v1671, 1e-12
        %v1673 = vrsqrt.pop %v1672
        %v1674 = vmul.f32 %v1666, %v1673
        %v1676 = vlaneseq
        %v1677 = vshrl.u32 %v1676, 7
        %v1678 = vsub.s32 0, %v1677
        %v1679 = vrot.slane %v1660, %v1678
        %v1681 = vmul.f32 %v1674, %v1679
        %v1683 = vlaneseq
        %v1684 = vshrl.u32 %v1683, 7
        %v1685 = vsub.s32 0, %v1684
        %v1686 = vrot.slane %v1661, %v1685
        %v1688 = vadd.f32 %v1681, %v1686
        %s1689 = scalar_lea.vmem %s4, 32
        %v1690 = vld [vmem:[%s1689] sm:$0xff]
        %v1691 = vld [vmem:[%s1689 + $0x8] sm:$0xff]
        %v1692 = vld [vmem:[%s1689 + $0x10] sm:$0xff]
        %v1693 = vld [vmem:[%s1689 + $0x18] sm:$0xff]
        %s1694 = scalar_lea.vmem [#allocation10], 1
        %v1695 = vld [vmem:[%s1694] sm:$0x1]
        %v1697 = vlaneseq
        %v1698 = vshrl.u32 %v1697, 7
        %v1699 = vsub.s32 0, %v1698
        %v1700 = vrot.slane %v1695, %v1699
        %v1703 = vsel %vm834, %v1688, 0
        %1705 = vmatprep.subr.mxu0 0.0
        %1706 = vmatpush1.msra.mxu0 %v1690
        %1707 = vmatprep.subr.mxu0 0.0
        %1708 = vmatpush1.msra.mxu0 %v1691
        %1709 = vmatprep.subr.mxu0 0.0
        %1710 = vmatpush1.msra.mxu0 %v1692
        %1711 = vmatprep.subr.mxu0 0.0
        %1712 = vmatpush1.msra.mxu0 %v1693
        %1713 = vmatprep.subr.mxu0 0.0
        %1714 = vmatpush1.msra.mxu0 0.0
        %1715 = vmatprep.subr.mxu0 0.0
        %1716 = vmatpush1.msra.mxu0 0.0
        %1717 = vmatprep.subr.mxu0 0.0
        %1718 = vmatpush1.msra.mxu0 0.0
        %1719 = vmatprep.subr.mxu0 0.0
        %1720 = vmatpush1.msra.mxu0 0.0
        %1721 = vmatprep.subr.mxu0 0.0
        %1722 = vmatpush1.msra.mxu0 0.0
        %1723 = vmatprep.subr.mxu0 0.0
        %1724 = vmatpush1.msra.mxu0 0.0
        %1725 = vmatprep.subr.mxu0 0.0
        %1726 = vmatpush1.msra.mxu0 0.0
        %1727 = vmatprep.subr.mxu0 0.0
        %1728 = vmatpush1.msra.mxu0 0.0
        %1729 = vmatprep.subr.mxu0 0.0
        %1730 = vmatpush1.msra.mxu0 0.0
        %1731 = vmatprep.subr.mxu0 0.0
        %1732 = vmatpush1.msra.mxu0 0.0
        %1733 = vmatprep.subr.mxu0 0.0
        %1734 = vmatpush1.msra.mxu0 0.0
        %1735 = vmatprep.subr.mxu0 0.0
        %1736 = vmatpush1.msra.mxu0 0.0
        %1737 = vmatprep.subr.mxu0 0.0
        %1738 = vmatpush1.msra.mxu0 0.0
        %1739 = vmatprep.subr.mxu0 0.0
        %1740 = vmatpush1.msra.mxu0 0.0
        %1741 = vmatprep.subr.mxu0 0.0
        %1742 = vmatpush1.msra.mxu0 0.0
        %1743 = vmatprep.subr.mxu0 0.0
        %1744 = vmatpush1.msra.mxu0 0.0
        %1745 = vmatprep.subr.mxu0 0.0
        %1746 = vmatpush1.msra.mxu0 0.0
        %1747 = vmatprep.subr.mxu0 0.0
        %1748 = vmatpush1.msra.mxu0 0.0
        %1749 = vmatprep.subr.mxu0 0.0
        %1750 = vmatpush1.msra.mxu0 0.0
        %1751 = vmatprep.subr.mxu0 0.0
        %1752 = vmatpush1.msra.mxu0 0.0
        %1753 = vmatprep.subr.mxu0 0.0
        %1754 = vmatpush1.msra.mxu0 0.0
        %1755 = vmatprep.subr.mxu0 0.0
        %1756 = vmatpush1.msra.mxu0 0.0
        %1757 = vmatprep.subr.mxu0 0.0
        %1758 = vmatpush1.msra.mxu0 0.0
        %1759 = vmatprep.subr.mxu0 0.0
        %1760 = vmatpush1.msra.mxu0 0.0
        %1761 = vmatprep.subr.mxu0 0.0
        %1762 = vmatpush1.msra.mxu0 0.0
        %1763 = vmatprep.subr.mxu0 0.0
        %1764 = vmatpush1.msra.mxu0 0.0
        %1765 = vmatprep.subr.mxu0 0.0
        %1766 = vmatpush1.msra.mxu0 0.0
        %1767 = vmatprep.subr.mxu0 0.0
        %1768 = vmatpush1.msra.mxu0 0.0
        %1769 = vmatprep.mubr.f32.mxu0 0.0
        %1770 = vmatmul.mubr.f32.gmra.mrb[0].mxu0 %v1703
        %v1771 = vpop.f32.mrb[0].mxu0
        %v1772 = vadd.f32 %v1700, %v1771
        %v1773 = vpop.f32.mrb[0].mxu0
        %1774 = vdwg.mxu0
        %s1775 = scalar_lea.vmem %s6, 32
        %v1776 = vld [vmem:[%s1775] sm:$0xff]
        %v1777 = vld [vmem:[%s1775 + $0x8] sm:$0xff]
        %v1778 = vld [vmem:[%s1775 + $0x10] sm:$0xff]
        %v1779 = vld [vmem:[%s1775 + $0x18] sm:$0xff]
        %1781 = vrot.lane.b32.xlu0 %v1772, 96
        %v1782 = vpop.permute.xlu0 %1781
        %v1783 = vsel %vm955, %v1772, 0
        %v1785 = vsel %vm955, %v1782, 0
        %1787 = vmatprep.subr.mxu0 0.0
        %1788 = vmatpush1.xpose.msra.mxu0 %v1785
        %1789 = vmatprep.subr.mxu0 0.0
        %1790 = vmatpush1.xpose.msra.mxu0 0.0
        %1791 = vmatprep.subr.mxu0 0.0
        %1792 = vmatpush1.xpose.msra.mxu0 0.0
        %1793 = vmatprep.subr.mxu0 0.0
        %1794 = vmatpush1.xpose.msra.mxu0 0.0
        %1795 = vmatprep.subr.mxu0 0.0
        %1796 = vmatpush1.xpose.msra.mxu0 0.0
        %1797 = vmatprep.subr.mxu0 0.0
        %1798 = vmatpush1.xpose.msra.mxu0 0.0
        %1799 = vmatprep.subr.mxu0 0.0
        %1800 = vmatpush1.xpose.msra.mxu0 0.0
        %1801 = vmatprep.subr.mxu0 0.0
        %1802 = vmatpush1.xpose.msra.mxu0 0.0
        %1803 = vmatprep.subr.mxu0 0.0
        %1804 = vmatpush1.xpose.msra.mxu0 0.0
        %1805 = vmatprep.subr.mxu0 0.0
        %1806 = vmatpush1.xpose.msra.mxu0 0.0
        %1807 = vmatprep.subr.mxu0 0.0
        %1808 = vmatpush1.xpose.msra.mxu0 0.0
        %1809 = vmatprep.subr.mxu0 0.0
        %1810 = vmatpush1.xpose.msra.mxu0 0.0
        %1811 = vmatprep.subr.mxu0 0.0
        %1812 = vmatpush1.xpose.msra.mxu0 0.0
        %1813 = vmatprep.subr.mxu0 0.0
        %1814 = vmatpush1.xpose.msra.mxu0 0.0
        %1815 = vmatprep.subr.mxu0 0.0
        %1816 = vmatpush1.xpose.msra.mxu0 0.0
        %1817 = vmatprep.subr.mxu0 0.0
        %1818 = vmatpush1.xpose.msra.mxu0 0.0
        %1819 = vmatprep.subr.mxu0 0.0
        %1820 = vmatpush1.xpose.msra.mxu0 0.0
        %1821 = vmatprep.subr.mxu0 0.0
        %1822 = vmatpush1.xpose.msra.mxu0 0.0
        %1823 = vmatprep.subr.mxu0 0.0
        %1824 = vmatpush1.xpose.msra.mxu0 0.0
        %1825 = vmatprep.subr.mxu0 0.0
        %1826 = vmatpush1.xpose.msra.mxu0 0.0
        %1827 = vmatprep.subr.mxu0 0.0
        %1828 = vmatpush1.xpose.msra.mxu0 0.0
        %1829 = vmatprep.subr.mxu0 0.0
        %1830 = vmatpush1.xpose.msra.mxu0 0.0
        %1831 = vmatprep.subr.mxu0 0.0
        %1832 = vmatpush1.xpose.msra.mxu0 0.0
        %1833 = vmatprep.subr.mxu0 0.0
        %1834 = vmatpush1.xpose.msra.mxu0 0.0
        %1835 = vmatprep.subr.mxu0 0.0
        %1836 = vmatpush1.xpose.msra.mxu0 0.0
        %1837 = vmatprep.subr.mxu0 0.0
        %1838 = vmatpush1.xpose.msra.mxu0 0.0
        %1839 = vmatprep.subr.mxu0 0.0
        %1840 = vmatpush1.xpose.msra.mxu0 0.0
        %1841 = vmatprep.subr.mxu0 0.0
        %1842 = vmatpush1.xpose.msra.mxu0 0.0
        %1843 = vmatprep.subr.mxu0 0.0
        %1844 = vmatpush1.xpose.msra.mxu0 0.0
        %1845 = vmatprep.subr.mxu0 0.0
        %1846 = vmatpush1.xpose.msra.mxu0 0.0
        %1847 = vmatprep.subr.mxu0 0.0
        %1848 = vmatpush1.xpose.msra.mxu0 0.0
        %1849 = vmatprep.subr.mxu0 0.0
        %1850 = vmatpush1.xpose.msra.mxu0 0.0
        %1851 = vmatprep.mubr.f32.mxu0 0.0
        %1852 = vmatmul.mubr.f32.gmra.mrb[0].mxu0 %v1783
        %v1853 = vpop.f32.mrb[0].mxu0
        %v1854 = vadd.f32 0.0, %v1853
        %v1855 = vpop.f32.mrb[0].mxu0
        %1856 = vdwg.mxu0
        %v1857 = vmul.f32 %v1854, 0.25
        %v1858 = vadd.f32 %v1857, %v1035
        %v1859 = vsel %vm1038, %v1858, -inf
        %1860 = vmax.xlane.f32.xlu0 %v1859
        %v1861 = vpop.xlane.xlu0 %1860
        %v1862 = vsub.f32 %v1858, %v1861
        %v1863 = vmul.f32 %v1862, 1.442695
        %v1864 = vpow.pop %v1863
        %v1865 = vsel %vm1038, %v1864, 0.0
        %1866 = vadd.xlane.f32.xlu0 %v1865
        %v1867 = vpop.xlane.xlu0 %1866
        %v1868 = vrcp.pop %v1867
        %v1869 = vmul.f32 %v1864, %v1868
        %1870 = vrot.lane.b32.xlu0 %v1772, 64
        %v1871 = vpop.permute.xlu0 %1870
        %v1874 = vsel %vm1038, %v1869, 0
        %1876 = vmatprep.subr.mxu0 0.0
        %1877 = vmatpush1.msra.mxu0 %v1871
        %1878 = vmatprep.subr.mxu0 0.0
        %1879 = vmatpush1.msra.mxu0 0.0
        %1880 = vmatprep.subr.mxu0 0.0
        %1881 = vmatpush1.msra.mxu0 0.0
        %1882 = vmatprep.subr.mxu0 0.0
        %1883 = vmatpush1.msra.mxu0 0.0
        %1884 = vmatprep.subr.mxu0 0.0
        %1885 = vmatpush1.msra.mxu0 0.0
        %1886 = vmatprep.subr.mxu0 0.0
        %1887 = vmatpush1.msra.mxu0 0.0
        %1888 = vmatprep.subr.mxu0 0.0
        %1889 = vmatpush1.msra.mxu0 0.0
        %1890 = vmatprep.subr.mxu0 0.0
        %1891 = vmatpush1.msra.mxu0 0.0
        %1892 = vmatprep.subr.mxu0 0.0
        %1893 = vmatpush1.msra.mxu0 0.0
        %1894 = vmatprep.subr.mxu0 0.0
        %1895 = vmatpush1.msra.mxu0 0.0
        %1896 = vmatprep.subr.mxu0 0.0
        %1897 = vmatpush1.msra.mxu0 0.0
        %1898 = vmatprep.subr.mxu0 0.0
        %1899 = vmatpush1.msra.mxu0 0.0
        %1900 = vmatprep.subr.mxu0 0.0
        %1901 = vmatpush1.msra.mxu0 0.0
        %1902 = vmatprep.subr.mxu0 0.0
        %1903 = vmatpush1.msra.mxu0 0.0
        %1904 = vmatprep.subr.mxu0 0.0
        %1905 = vmatpush1.msra.mxu0 0.0
        %1906 = vmatprep.subr.mxu0 0.0
        %1907 = vmatpush1.msra.mxu0 0.0
        %1908 = vmatprep.subr.mxu0 0.0
        %1909 = vmatpush1.msra.mxu0 0.0
        %1910 = vmatprep.subr.mxu0 0.0
        %1911 = vmatpush1.msra.mxu0 0.0
        %1912 = vmatprep.subr.mxu0 0.0
        %1913 = vmatpush1.msra.mxu0 0.0
        %1914 = vmatprep.subr.mxu0 0.0
        %1915 = vmatpush1.msra.mxu0 0.0
        %1916 = vmatprep.subr.mxu0 0.0
        %1917 = vmatpush1.msra.mxu0 0.0
        %1918 = vmatprep.subr.mxu0 0.0
        %1919 = vmatpush1.msra.mxu0 0.0
        %1920 = vmatprep.subr.mxu0 0.0
        %1921 = vmatpush1.msra.mxu0 0.0
        %1922 = vmatprep.subr.mxu0 0.0
        %1923 = vmatpush1.msra.mxu0 0.0
        %1924 = vmatprep.subr.mxu0 0.0
        %1925 = vmatpush1.msra.mxu0 0.0
        %1926 = vmatprep.subr.mxu0 0.0
        %1927 = vmatpush1.msra.mxu0 0.0
        %1928 = vmatprep.subr.mxu0 0.0
        %1929 = vmatpush1.msra.mxu0 0.0
        %1930 = vmatprep.subr.mxu0 0.0
        %1931 = vmatpush1.msra.mxu0 0.0
        %1932 = vmatprep.subr.mxu0 0.0
        %1933 = vmatpush1.msra.mxu0 0.0
        %1934 = vmatprep.subr.mxu0 0.0
        %1935 = vmatpush1.msra.mxu0 0.0
        %1936 = vmatprep.subr.mxu0 0.0
        %1937 = vmatpush1.msra.mxu0 0.0
        %1938 = vmatprep.subr.mxu0 0.0
        %1939 = vmatpush1.msra.mxu0 0.0
        %1940 = vmatprep.mubr.f32.mxu0 0.0
        %1941 = vmatmul.mubr.f32.gmra.mrb[0].mxu0 %v1874
        %v1942 = vpop.f32.mrb[0].mxu0
        %v1943 = vadd.f32 0.0, %v1942
        %v1944 = vpop.f32.mrb[0].mxu0
        %1945 = vdwg.mxu0
        %1946 = vrot.lane.b32.xlu0 %v1772, 112
        %v1947 = vpop.permute.xlu0 %1946
        %1948 = vrot.lane.b32.xlu0 %v1772, 80
        %v1949 = vpop.permute.xlu0 %1948
        %v1950 = vsel %vm955, %v1947, 0
        %v1952 = vsel %vm955, %v1949, 0
        %1954 = vmatprep.subr.mxu0 0.0
        %1955 = vmatpush1.xpose.msra.mxu0 %v1952
        %1956 = vmatprep.subr.mxu0 0.0
        %1957 = vmatpush1.xpose.msra.mxu0 0.0
        %1958 = vmatprep.subr.mxu0 0.0
        %1959 = vmatpush1.xpose.msra.mxu0 0.0
        %1960 = vmatprep.subr.mxu0 0.0
        %1961 = vmatpush1.xpose.msra.mxu0 0.0
        %1962 = vmatprep.subr.mxu0 0.0
        %1963 = vmatpush1.xpose.msra.mxu0 0.0
        %1964 = vmatprep.subr.mxu0 0.0
        %1965 = vmatpush1.xpose.msra.mxu0 0.0
        %1966 = vmatprep.subr.mxu0 0.0
        %1967 = vmatpush1.xpose.msra.mxu0 0.0
        %1968 = vmatprep.subr.mxu0 0.0
        %1969 = vmatpush1.xpose.msra.mxu0 0.0
        %1970 = vmatprep.subr.mxu0 0.0
        %1971 = vmatpush1.xpose.msra.mxu0 0.0
        %1972 = vmatprep.subr.mxu0 0.0
        %1973 = vmatpush1.xpose.msra.mxu0 0.0
        %1974 = vmatprep.subr.mxu0 0.0
        %1975 = vmatpush1.xpose.msra.mxu0 0.0
        %1976 = vmatprep.subr.mxu0 0.0
        %1977 = vmatpush1.xpose.msra.mxu0 0.0
        %1978 = vmatprep.subr.mxu0 0.0
        %1979 = vmatpush1.xpose.msra.mxu0 0.0
        %1980 = vmatprep.subr.mxu0 0.0
        %1981 = vmatpush1.xpose.msra.mxu0 0.0
        %1982 = vmatprep.subr.mxu0 0.0
        %1983 = vmatpush1.xpose.msra.mxu0 0.0
        %1984 = vmatprep.subr.mxu0 0.0
        %1985 = vmatpush1.xpose.msra.mxu0 0.0
        %1986 = vmatprep.subr.mxu0 0.0
        %1987 = vmatpush1.xpose.msra.mxu0 0.0
        %1988 = vmatprep.subr.mxu0 0.0
        %1989 = vmatpush1.xpose.msra.mxu0 0.0
        %1990 = vmatprep.subr.mxu0 0.0
        %1991 = vmatpush1.xpose.msra.mxu0 0.0
        %1992 = vmatprep.subr.mxu0 0.0
        %1993 = vmatpush1.xpose.msra.mxu0 0.0
        %1994 = vmatprep.subr.mxu0 0.0
        %1995 = vmatpush1.xpose.msra.mxu0 0.0
        %1996 = vmatprep.subr.mxu0 0.0
        %1997 = vmatpush1.xpose.msra.mxu0 0.0
        %1998 = vmatprep.subr.mxu0 0.0
        %1999 = vmatpush1.xpose.msra.mxu0 0.0
        %2000 = vmatprep.subr.mxu0 0.0
        %2001 = vmatpush1.xpose.msra.mxu0 0.0
        %2002 = vmatprep.subr.mxu0 0.0
        %2003 = vmatpush1.xpose.msra.mxu0 0.0
        %2004 = vmatprep.subr.mxu0 0.0
        %2005 = vmatpush1.xpose.msra.mxu0 0.0
        %2006 = vmatprep.subr.mxu0 0.0
        %2007 = vmatpush1.xpose.msra.mxu0 0.0
        %2008 = vmatprep.subr.mxu0 0.0
        %2009 = vmatpush1.xpose.msra.mxu0 0.0
        %2010 = vmatprep.subr.mxu0 0.0
        %2011 = vmatpush1.xpose.msra.mxu0 0.0
        %2012 = vmatprep.subr.mxu0 0.0
        %2013 = vmatpush1.xpose.msra.mxu0 0.0
        %2014 = vmatprep.subr.mxu0 0.0
        %2015 = vmatpush1.xpose.msra.mxu0 0.0
        %2016 = vmatprep.subr.mxu0 0.0
        %2017 = vmatpush1.xpose.msra.mxu0 0.0
        %2018 = vmatprep.mubr.f32.mxu0 0.0
        %2019 = vmatmul.mubr.f32.gmra.mrb[0].mxu0 %v1950
        %v2020 = vpop.f32.mrb[0].mxu0
        %v2021 = vadd.f32 0.0, %v2020
        %v2022 = vpop.f32.mrb[0].mxu0
        %2023 = vdwg.mxu0
        %v2024 = vmul.f32 %v2021, 0.25
        %v2025 = vadd.f32 %v2024, %v1035
        %v2026 = vsel %vm1038, %v2025, -inf
        %2027 = vmax.xlane.f32.xlu0 %v2026
        %v2028 = vpop.xlane.xlu0 %2027
        %v2029 = vsub.f32 %v2025, %v2028
        %v2030 = vmul.f32 %v2029, 1.442695
        %v2031 = vpow.pop %v2030
        %v2032 = vsel %vm1038, %v2031, 0.0
        %2033 = vadd.xlane.f32.xlu0 %v2032
        %v2034 = vpop.xlane.xlu0 %2033
        %v2035 = vrcp.pop %v2034
        %v2036 = vmul.f32 %v2031, %v2035
        %2037 = vrot.lane.b32.xlu0 %v1772, 48
        %v2038 = vpop.permute.xlu0 %2037
        %v2041 = vsel %vm1038, %v2036, 0
        %2043 = vmatprep.subr.mxu0 0.0
        %2044 = vmatpush1.msra.mxu0 %v2038
        %2045 = vmatprep.subr.mxu0 0.0
        %2046 = vmatpush1.msra.mxu0 0.0
        %2047 = vmatprep.subr.mxu0 0.0
        %2048 = vmatpush1.msra.mxu0 0.0
        %2049 = vmatprep.subr.mxu0 0.0
        %2050 = vmatpush1.msra.mxu0 0.0
        %2051 = vmatprep.subr.mxu0 0.0
        %2052 = vmatpush1.msra.mxu0 0.0
        %2053 = vmatprep.subr.mxu0 0.0
        %2054 = vmatpush1.msra.mxu0 0.0
        %2055 = vmatprep.subr.mxu0 0.0
        %2056 = vmatpush1.msra.mxu0 0.0
        %2057 = vmatprep.subr.mxu0 0.0
        %2058 = vmatpush1.msra.mxu0 0.0
        %2059 = vmatprep.subr.mxu0 0.0
        %2060 = vmatpush1.msra.mxu0 0.0
        %2061 = vmatprep.subr.mxu0 0.0
        %2062 = vmatpush1.msra.mxu0 0.0
        %2063 = vmatprep.subr.mxu0 0.0
        %2064 = vmatpush1.msra.mxu0 0.0
        %2065 = vmatprep.subr.mxu0 0.0
        %2066 = vmatpush1.msra.mxu0 0.0
        %2067 = vmatprep.subr.mxu0 0.0
        %2068 = vmatpush1.msra.mxu0 0.0
        %2069 = vmatprep.subr.mxu0 0.0
        %2070 = vmatpush1.msra.mxu0 0.0
        %2071 = vmatprep.subr.mxu0 0.0
        %2072 = vmatpush1.msra.mxu0 0.0
        %2073 = vmatprep.subr.mxu0 0.0
        %2074 = vmatpush1.msra.mxu0 0.0
        %2075 = vmatprep.subr.mxu0 0.0
        %2076 = vmatpush1.msra.mxu0 0.0
        %2077 = vmatprep.subr.mxu0 0.0
        %2078 = vmatpush1.msra.mxu0 0.0
        %2079 = vmatprep.subr.mxu0 0.0
        %2080 = vmatpush1.msra.mxu0 0.0
        %2081 = vmatprep.subr.mxu0 0.0
        %2082 = vmatpush1.msra.mxu0 0.0
        %2083 = vmatprep.subr.mxu0 0.0
        %2084 = vmatpush1.msra.mxu0 0.0
        %2085 = vmatprep.subr.mxu0 0.0
        %2086 = vmatpush1.msra.mxu0 0.0
        %2087 = vmatprep.subr.mxu0 0.0
        %2088 = vmatpush1.msra.mxu0 0.0
        %2089 = vmatprep.subr.mxu0 0.0
        %2090 = vmatpush1.msra.mxu0 0.0
        %2091 = vmatprep.subr.mxu0 0.0
        %2092 = vmatpush1.msra.mxu0 0.0
        %2093 = vmatprep.subr.mxu0 0.0
        %2094 = vmatpush1.msra.mxu0 0.0
        %2095 = vmatprep.subr.mxu0 0.0
        %2096 = vmatpush1.msra.mxu0 0.0
        %2097 = vmatprep.subr.mxu0 0.0
        %2098 = vmatpush1.msra.mxu0 0.0
        %2099 = vmatprep.subr.mxu0 0.0
        %2100 = vmatpush1.msra.mxu0 0.0
        %2101 = vmatprep.subr.mxu0 0.0
        %2102 = vmatpush1.msra.mxu0 0.0
        %2103 = vmatprep.subr.mxu0 0.0
        %2104 = vmatpush1.msra.mxu0 0.0
        %2105 = vmatprep.subr.mxu0 0.0
        %2106 = vmatpush1.msra.mxu0 0.0
        %2107 = vmatprep.mubr.f32.mxu0 0.0
        %2108 = vmatmul.mubr.f32.gmra.mrb[0].mxu0 %v2041
        %v2109 = vpop.f32.mrb[0].mxu0
        %v2110 = vadd.f32 0.0, %v2109
        %v2111 = vpop.f32.mrb[0].mxu0
        %2112 = vdwg.mxu0
        %v2114 = vsel %vm955, %v2110, 0
        %2116 = vmatprep.subr.mxu0 0.0
        %2117 = vmatpush1.msra.mxu0 %v1778
        %2118 = vmatprep.subr.mxu0 0.0
        %2119 = vmatpush1.msra.mxu0 %v1779
        %2120 = vmatprep.subr.mxu0 0.0
        %2121 = vmatpush1.msra.mxu0 0.0
        %2122 = vmatprep.subr.mxu0 0.0
        %2123 = vmatpush1.msra.mxu0 0.0
        %2124 = vmatprep.subr.mxu0 0.0
        %2125 = vmatpush1.msra.mxu0 0.0
        %2126 = vmatprep.subr.mxu0 0.0
        %2127 = vmatpush1.msra.mxu0 0.0
        %2128 = vmatprep.subr.mxu0 0.0
        %2129 = vmatpush1.msra.mxu0 0.0
        %2130 = vmatprep.subr.mxu0 0.0
        %2131 = vmatpush1.msra.mxu0 0.0
        %2132 = vmatprep.subr.mxu0 0.0
        %2133 = vmatpush1.msra.mxu0 0.0
        %2134 = vmatprep.subr.mxu0 0.0
        %2135 = vmatpush1.msra.mxu0 0.0
        %2136 = vmatprep.subr.mxu0 0.0
        %2137 = vmatpush1.msra.mxu0 0.0
        %2138 = vmatprep.subr.mxu0 0.0
        %2139 = vmatpush1.msra.mxu0 0.0
        %2140 = vmatprep.subr.mxu0 0.0
        %2141 = vmatpush1.msra.mxu0 0.0
        %2142 = vmatprep.subr.mxu0 0.0
        %2143 = vmatpush1.msra.mxu0 0.0
        %2144 = vmatprep.subr.mxu0 0.0
        %2145 = vmatpush1.msra.mxu0 0.0
        %2146 = vmatprep.subr.mxu0 0.0
        %2147 = vmatpush1.msra.mxu0 0.0
        %2148 = vmatprep.subr.mxu0 0.0
        %2149 = vmatpush1.msra.mxu0 0.0
        %2150 = vmatprep.subr.mxu0 0.0
        %2151 = vmatpush1.msra.mxu0 0.0
        %2152 = vmatprep.subr.mxu0 0.0
        %2153 = vmatpush1.msra.mxu0 0.0
        %2154 = vmatprep.subr.mxu0 0.0
        %2155 = vmatpush1.msra.mxu0 0.0
        %2156 = vmatprep.subr.mxu0 0.0
        %2157 = vmatpush1.msra.mxu0 0.0
        %2158 = vmatprep.subr.mxu0 0.0
        %2159 = vmatpush1.msra.mxu0 0.0
        %2160 = vmatprep.subr.mxu0 0.0
        %2161 = vmatpush1.msra.mxu0 0.0
        %2162 = vmatprep.subr.mxu0 0.0
        %2163 = vmatpush1.msra.mxu0 0.0
        %2164 = vmatprep.subr.mxu0 0.0
        %2165 = vmatpush1.msra.mxu0 0.0
        %2166 = vmatprep.subr.mxu0 0.0
        %2167 = vmatpush1.msra.mxu0 0.0
        %2168 = vmatprep.subr.mxu0 0.0
        %2169 = vmatpush1.msra.mxu0 0.0
        %2170 = vmatprep.subr.mxu0 0.0
        %2171 = vmatpush1.msra.mxu0 0.0
        %2172 = vmatprep.subr.mxu0 0.0
        %2173 = vmatpush1.msra.mxu0 0.0
        %2174 = vmatprep.subr.mxu0 0.0
        %2175 = vmatpush1.msra.mxu0 0.0
        %2176 = vmatprep.subr.mxu0 0.0
        %2177 = vmatpush1.msra.mxu0 0.0
        %2178 = vmatprep.subr.mxu0 0.0
        %2179 = vmatpush1.msra.mxu0 0.0
        %2180 = vmatprep.mubr.f32.mxu0 0.0
        %2181 = vmatmul.mubr.f32.gmra.mrb[0].mxu0 %v2114
        %v2182 = vpop.f32.mrb[0].mxu0
        %v2183 = vadd.f32 0.0, %v2182
        %v2184 = vpop.f32.mrb[0].mxu0
        %2185 = vdwg.mxu0
        %v2187 = vsel %vm955, %v1943, 0
        %2189 = vmatprep.subr.mxu0 0.0
        %2190 = vmatpush1.msra.mxu0 %v1776
        %2191 = vmatprep.subr.mxu0 0.0
        %2192 = vmatpush1.msra.mxu0 %v1777
        %2193 = vmatprep.subr.mxu0 0.0
        %2194 = vmatpush1.msra.mxu0 0.0
        %2195 = vmatprep.subr.mxu0 0.0
        %2196 = vmatpush1.msra.mxu0 0.0
        %2197 = vmatprep.subr.mxu0 0.0
        %2198 = vmatpush1.msra.mxu0 0.0
        %2199 = vmatprep.subr.mxu0 0.0
        %2200 = vmatpush1.msra.mxu0 0.0
        %2201 = vmatprep.subr.mxu0 0.0
        %2202 = vmatpush1.msra.mxu0 0.0
        %2203 = vmatprep.subr.mxu0 0.0
        %2204 = vmatpush1.msra.mxu0 0.0
        %2205 = vmatprep.subr.mxu0 0.0
        %2206 = vmatpush1.msra.mxu0 0.0
        %2207 = vmatprep.subr.mxu0 0.0
        %2208 = vmatpush1.msra.mxu0 0.0
        %2209 = vmatprep.subr.mxu0 0.0
        %2210 = vmatpush1.msra.mxu0 0.0
        %2211 = vmatprep.subr.mxu0 0.0
        %2212 = vmatpush1.msra.mxu0 0.0
        %2213 = vmatprep.subr.mxu0 0.0
        %2214 = vmatpush1.msra.mxu0 0.0
        %2215 = vmatprep.subr.mxu0 0.0
        %2216 = vmatpush1.msra.mxu0 0.0
        %2217 = vmatprep.subr.mxu0 0.0
        %2218 = vmatpush1.msra.mxu0 0.0
        %2219 = vmatprep.subr.mxu0 0.0
        %2220 = vmatpush1.msra.mxu0 0.0
        %2221 = vmatprep.subr.mxu0 0.0
        %2222 = vmatpush1.msra.mxu0 0.0
        %2223 = vmatprep.subr.mxu0 0.0
        %2224 = vmatpush1.msra.mxu0 0.0
        %2225 = vmatprep.subr.mxu0 0.0
        %2226 = vmatpush1.msra.mxu0 0.0
        %2227 = vmatprep.subr.mxu0 0.0
        %2228 = vmatpush1.msra.mxu0 0.0
        %2229 = vmatprep.subr.mxu0 0.0
        %2230 = vmatpush1.msra.mxu0 0.0
        %2231 = vmatprep.subr.mxu0 0.0
        %2232 = vmatpush1.msra.mxu0 0.0
        %2233 = vmatprep.subr.mxu0 0.0
        %2234 = vmatpush1.msra.mxu0 0.0
        %2235 = vmatprep.subr.mxu0 0.0
        %2236 = vmatpush1.msra.mxu0 0.0
        %2237 = vmatprep.subr.mxu0 0.0
        %2238 = vmatpush1.msra.mxu0 0.0
        %2239 = vmatprep.subr.mxu0 0.0
        %2240 = vmatpush1.msra.mxu0 0.0
        %2241 = vmatprep.subr.mxu0 0.0
        %2242 = vmatpush1.msra.mxu0 0.0
        %2243 = vmatprep.subr.mxu0 0.0
        %2244 = vmatpush1.msra.mxu0 0.0
        %2245 = vmatprep.subr.mxu0 0.0
        %2246 = vmatpush1.msra.mxu0 0.0
        %2247 = vmatprep.subr.mxu0 0.0
        %2248 = vmatpush1.msra.mxu0 0.0
        %2249 = vmatprep.subr.mxu0 0.0
        %2250 = vmatpush1.msra.mxu0 0.0
        %2251 = vmatprep.subr.mxu0 0.0
        %2252 = vmatpush1.msra.mxu0 0.0
        %2253 = vmatprep.mubr.f32.mxu0 0.0
        %2254 = vmatmul.mubr.f32.gmra.mrb[0].mxu0 %v2187
        %v2255 = vpop.f32.mrb[0].mxu0
        %v2256 = vadd.f32 %v2183, %v2255
        %v2257 = vpop.f32.mrb[0].mxu0
        %2258 = vdwg.mxu0
        %s2259 = scalar_lea.vmem [#allocation11], 1
        %v2260 = vld [vmem:[%s2259] sm:$0x1]
        %v2262 = vlaneseq
        %v2263 = vshrl.u32 %v2262, 7
        %v2264 = vsub.s32 0, %v2263
        %v2265 = vrot.slane %v2260, %v2264
        %v2267 = vadd.f32 %v2256, %v2265
        %v2268 = vadd.f32 %v1688, %v2267
        %s2269 = scalar_lea.vmem [#allocation13], 1
        %v2270 = vld [vmem:[%s2269] sm:$0x1]
        %s2271 = scalar_lea.vmem [#allocation14], 1
        %v2272 = vld [vmem:[%s2271] sm:$0x1]
        %v2273 = vsel %vm834, %v2268, 0.0
        %2274 = vadd.xlane.f32.xlu0 %v2273
        %v2275 = vpop.xlane.xlu0 %2274
        %v2276 = vmul.f32 %v2275, %v838
        %v2277 = vsub.f32 %v2268, %v2276
        %v2278 = vmul.f32 %v2277, %v2277
        %v2279 = vsel %vm834, %v2278, 0.0
        %2280 = vadd.xlane.f32.xlu0 %v2279
        %v2281 = vpop.xlane.xlu0 %2280
        %v2282 = vmul.f32 %v2281, %v838
        %v2283 = vadd.f32 %v2282, 1e-12
        %v2284 = vrsqrt.pop %v2283
        %v2285 = vmul.f32 %v2277, %v2284
        %v2287 = vlaneseq
        %v2288 = vshrl.u32 %v2287, 7
        %v2289 = vsub.s32 0, %v2288
        %v2290 = vrot.slane %v2270, %v2289
        %v2292 = vmul.f32 %v2285, %v2290
        %v2294 = vlaneseq
        %v2295 = vshrl.u32 %v2294, 7
        %v2296 = vsub.s32 0, %v2295
        %v2297 = vrot.slane %v2272, %v2296
        %v2299 = vadd.f32 %v2292, %v2297
        %s2300 = scalar_lea.vmem %s10, 32
        %v2301 = vld [vmem:[%s2300] sm:$0xff]
        %v2302 = vld [vmem:[%s2300 + $0x8] sm:$0xff]
        %v2303 = vld [vmem:[%s2300 + $0x10] sm:$0xff]
        %v2304 = vld [vmem:[%s2300 + $0x18] sm:$0xff]
        %s2305 = scalar_lea.vmem [#allocation16], 1
        %v2306 = vld [vmem:[%s2305] sm:$0x1]
        %v2308 = vlaneseq
        %v2309 = vshrl.u32 %v2308, 7
        %v2310 = vsub.s32 0, %v2309
        %v2311 = vrot.slane %v2306, %v2310
        %v2314 = vsel %vm834, %v2299, 0
        %2316 = vmatprep.subr.mxu0 0.0
        %2317 = vmatpush1.msra.mxu0 %v2301
        %2318 = vmatprep.subr.mxu0 0.0
        %2319 = vmatpush1.msra.mxu0 %v2302
        %2320 = vmatprep.subr.mxu0 0.0
        %2321 = vmatpush1.msra.mxu0 %v2303
        %2322 = vmatprep.subr.mxu0 0.0
        %2323 = vmatpush1.msra.mxu0 %v2304
        %2324 = vmatprep.subr.mxu0 0.0
        %2325 = vmatpush1.msra.mxu0 0.0
        %2326 = vmatprep.subr.mxu0 0.0
        %2327 = vmatpush1.msra.mxu0 0.0
        %2328 = vmatprep.subr.mxu0 0.0
        %2329 = vmatpush1.msra.mxu0 0.0
        %2330 = vmatprep.subr.mxu0 0.0
        %2331 = vmatpush1.msra.mxu0 0.0
        %2332 = vmatprep.subr.mxu0 0.0
        %2333 = vmatpush1.msra.mxu0 0.0
        %2334 = vmatprep.subr.mxu0 0.0
        %2335 = vmatpush1.msra.mxu0 0.0
        %2336 = vmatprep.subr.mxu0 0.0
        %2337 = vmatpush1.msra.mxu0 0.0
        %2338 = vmatprep.subr.mxu0 0.0
        %2339 = vmatpush1.msra.mxu0 0.0
        %2340 = vmatprep.subr.mxu0 0.0
        %2341 = vmatpush1.msra.mxu0 0.0
        %2342 = vmatprep.subr.mxu0 0.0
        %2343 = vmatpush1.msra.mxu0 0.0
        %2344 = vmatprep.subr.mxu0 0.0
        %2345 = vmatpush1.msra.mxu0 0.0
        %2346 = vmatprep.subr.mxu0 0.0
        %2347 = vmatpush1.msra.mxu0 0.0
        %2348 = vmatprep.subr.mxu0 0.0
        %2349 = vmatpush1.msra.mxu0 0.0
        %2350 = vmatprep.subr.mxu0 0.0
        %2351 = vmatpush1.msra.mxu0 0.0
        %2352 = vmatprep.subr.mxu0 0.0
        %2353 = vmatpush1.msra.mxu0 0.0
        %2354 = vmatprep.subr.mxu0 0.0
        %2355 = vmatpush1.msra.mxu0 0.0
        %2356 = vmatprep.subr.mxu0 0.0
        %2357 = vmatpush1.msra.mxu0 0.0
        %2358 = vmatprep.subr.mxu0 0.0
        %2359 = vmatpush1.msra.mxu0 0.0
        %2360 = vmatprep.subr.mxu0 0.0
        %2361 = vmatpush1.msra.mxu0 0.0
        %2362 = vmatprep.subr.mxu0 0.0
        %2363 = vmatpush1.msra.mxu0 0.0
        %2364 = vmatprep.subr.mxu0 0.0
        %2365 = vmatpush1.msra.mxu0 0.0
        %2366 = vmatprep.subr.mxu0 0.0
        %2367 = vmatpush1.msra.mxu0 0.0
        %2368 = vmatprep.subr.mxu0 0.0
        %2369 = vmatpush1.msra.mxu0 0.0
        %2370 = vmatprep.subr.mxu0 0.0
        %2371 = vmatpush1.msra.mxu0 0.0
        %2372 = vmatprep.subr.mxu0 0.0
        %2373 = vmatpush1.msra.mxu0 0.0
        %2374 = vmatprep.subr.mxu0 0.0
        %2375 = vmatpush1.msra.mxu0 0.0
        %2376 = vmatprep.subr.mxu0 0.0
        %2377 = vmatpush1.msra.mxu0 0.0
        %2378 = vmatprep.subr.mxu0 0.0
        %2379 = vmatpush1.msra.mxu0 0.0
        %2380 = vmatprep.mubr.f32.mxu0 0.0
        %2381 = vmatmul.mubr.f32.gmra.mrb[0].mxu0 %v2314
        %v2382 = vpop.f32.mrb[0].mxu0
        %v2383 = vadd.f32 %v2311, %v2382
        %v2384 = vpop.f32.mrb[0].mxu0
        %2385 = vdwg.mxu0
        %v2386 = vmul.f32 %v2383, %v2383
        %v2387 = vmul.f32 %v2383, %v2386
        %v2388 = vmul.f32 %v2387, 0.044715
        %v2389 = vadd.f32 %v2383, %v2388
        %v2390 = vmul.f32 %v2389, 0.7978846
        %v2391 = vtanh.pop %v2390
        %v2392 = vadd.f32 %v2391, 1.0
        %v2393 = vmul.f32 %v2392, 0.5
        %v2394 = vmul.f32 %v2383, %v2393
        %s2395 = scalar_lea.vmem %s12, 64
        %v2396 = vld [vmem:[%s2395] sm:$0xff]
        %v2397 = vld [vmem:[%s2395 + $0x8] sm:$0xff]
        %v2398 = vld [vmem:[%s2395 + $0x10] sm:$0xff]
        %v2399 = vld [vmem:[%s2395 + $0x18] sm:$0xff]
        %v2400 = vld [vmem:[%s2395 + $0x20] sm:$0xff]
        %v2401 = vld [vmem:[%s2395 + $0x28] sm:$0xff]
        %v2402 = vld [vmem:[%s2395 + $0x30] sm:$0xff]
        %v2403 = vld [vmem:[%s2395 + $0x38] sm:$0xff]
        %s2404 = scalar_lea.vmem [#allocation17], 1
        %v2405 = vld [vmem:[%s2404] sm:$0x1]
        %v2407 = vlaneseq
        %v2408 = vshrl.u32 %v2407, 7
        %v2409 = vsub.s32 0, %v2408
        %v2410 = vrot.slane %v2405, %v2409
        %v2413 = vsel %vm1585, %v2394, 0
        %2415 = vmatprep.subr.mxu0 0.0
        %2416 = vmatpush1.msra.mxu0 %v2396
        %2417 = vmatprep.subr.mxu0 0.0
        %2418 = vmatpush1.msra.mxu0 %v2397
        %2419 = vmatprep.subr.mxu0 0.0
        %2420 = vmatpush1.msra.mxu0 %v2398
        %2421 = vmatprep.subr.mxu0 0.0
        %2422 = vmatpush1.msra.mxu0 %v2399
        %2423 = vmatprep.subr.mxu0 0.0
        %2424 = vmatpush1.msra.mxu0 %v2400
        %2425 = vmatprep.subr.mxu0 0.0
        %2426 = vmatpush1.msra.mxu0 %v2401
        %2427 = vmatprep.subr.mxu0 0.0
        %2428 = vmatpush1.msra.mxu0 %v2402
        %2429 = vmatprep.subr.mxu0 0.0
        %2430 = vmatpush1.msra.mxu0 %v2403
        %2431 = vmatprep.subr.mxu0 0.0
        %2432 = vmatpush1.msra.mxu0 0.0
        %2433 = vmatprep.subr.mxu0 0.0
        %2434 = vmatpush1.msra.mxu0 0.0
        %2435 = vmatprep.subr.mxu0 0.0
        %2436 = vmatpush1.msra.mxu0 0.0
        %2437 = vmatprep.subr.mxu0 0.0
        %2438 = vmatpush1.msra.mxu0 0.0
        %2439 = vmatprep.subr.mxu0 0.0
        %2440 = vmatpush1.msra.mxu0 0.0
        %2441 = vmatprep.subr.mxu0 0.0
        %2442 = vmatpush1.msra.mxu0 0.0
        %2443 = vmatprep.subr.mxu0 0.0
        %2444 = vmatpush1.msra.mxu0 0.0
        %2445 = vmatprep.subr.mxu0 0.0
        %2446 = vmatpush1.msra.mxu0 0.0
        %2447 = vmatprep.subr.mxu0 0.0
        %2448 = vmatpush1.msra.mxu0 0.0
        %2449 = vmatprep.subr.mxu0 0.0
        %2450 = vmatpush1.msra.mxu0 0.0
        %2451 = vmatprep.subr.mxu0 0.0
        %2452 = vmatpush1.msra.mxu0 0.0
        %2453 = vmatprep.subr.mxu0 0.0
        %2454 = vmatpush1.msra.mxu0 0.0
        %2455 = vmatprep.subr.mxu0 0.0
        %2456 = vmatpush1.msra.mxu0 0.0
        %2457 = vmatprep.subr.mxu0 0.0
        %2458 = vmatpush1.msra.mxu0 0.0
        %2459 = vmatprep.subr.mxu0 0.0
        %2460 = vmatpush1.msra.mxu0 0.0
        %2461 = vmatprep.subr.mxu0 0.0
        %2462 = vmatpush1.msra.mxu0 0.0
        %2463 = vmatprep.subr.mxu0 0.0
        %2464 = vmatpush1.msra.mxu0 0.0
        %2465 = vmatprep.subr.mxu0 0.0
        %2466 = vmatpush1.msra.mxu0 0.0
        %2467 = vmatprep.subr.mxu0 0.0
        %2468 = vmatpush1.msra.mxu0 0.0
        %2469 = vmatprep.subr.mxu0 0.0
        %2470 = vmatpush1.msra.mxu0 0.0
        %2471 = vmatprep.subr.mxu0 0.0
        %2472 = vmatpush1.msra.mxu0 0.0
        %2473 = vmatprep.subr.mxu0 0.0
        %2474 = vmatpush1.msra.mxu0 0.0
        %2475 = vmatprep.subr.mxu0 0.0
        %2476 = vmatpush1.msra.mxu0 0.0
        %2477 = vmatprep.subr.mxu0 0.0
        %2478 = vmatpush1.msra.mxu0 0.0
        %2479 = vmatprep.mubr.f32.mxu0 0.0
        %2480 = vmatmul.mubr.f32.gmra.mrb[0].mxu0 %v2413
        %v2481 = vpop.f32.mrb[0].mxu0
        %v2482 = vadd.f32 %v2410, %v2481
        %v2483 = vpop.f32.mrb[0].mxu0
        %2484 = vdwg.mxu0
        %v2485 = vadd.f32 %v2299, %v2482
        %s2486 = scalar_lea.vmem [#allocation19], 1
        %v2487 = vld [vmem:[%s2486] sm:$0x1]
        %s2488 = scalar_lea.vmem [#allocation20], 1
        %v2489 = vld [vmem:[%s2488] sm:$0x1]
        %v2490 = vsel %vm834, %v2485, 0.0
        %2491 = vadd.xlane.f32.xlu0 %v2490
        %v2492 = vpop.xlane.xlu0 %2491
        %v2493 = vmul.f32 %v2492, %v838
        %v2494 = vsub.f32 %v2485, %v2493
        %v2495 = vmul.f32 %v2494, %v2494
        %v2496 = vsel %vm834, %v2495, 0.0
        %2497 = vadd.xlane.f32.xlu0 %v2496
        %v2498 = vpop.xlane.xlu0 %2497
        %v2499 = vmul.f32 %v2498, %v838
        %v2500 = vadd.f32 %v2499, 1e-12
        %v2501 = vrsqrt.pop %v2500
        %v2502 = vmul.f32 %v2494, %v2501
        %v2504 = vlaneseq
        %v2505 = vshrl.u32 %v2504, 7
        %v2506 = vsub.s32 0, %v2505
        %v2507 = vrot.slane %v2487, %v2506
        %v2509 = vmul.f32 %v2502, %v2507
        %v2511 = vlaneseq
        %v2512 = vshrl.u32 %v2511, 7
        %v2513 = vsub.s32 0, %v2512
        %v2514 = vrot.slane %v2489, %v2513
        %v2516 = vadd.f32 %v2509, %v2514
        %v2517 = vld [vmem:[%s16] sm:$0xff]
        %v2518 = vld [vmem:[%s16 + $0x8] sm:$0xff]
        %v2519 = vld [vmem:[%s16 + $0x10] sm:$0xff]
        %v2520 = vld [vmem:[%s16 + $0x18] sm:$0xff]
        %v2521 = vld [vmem:[#allocation22] sm:$0x1]
        %v2523 = vsel %vm834, %v2516, 0
        %2525 = vmatprep.subr.mxu0 0.0
        %2526 = vmatpush1.msra.mxu0 %v2517
        %2527 = vmatprep.subr.mxu0 0.0
        %2528 = vmatpush1.msra.mxu0 %v2518
        %2529 = vmatprep.subr.mxu0 0.0
        %2530 = vmatpush1.msra.mxu0 %v2519
        %2531 = vmatprep.subr.mxu0 0.0
        %2532 = vmatpush1.msra.mxu0 %v2520
        %2533 = vmatprep.subr.mxu0 0.0
        %2534 = vmatpush1.msra.mxu0 0.0
        %2535 = vmatprep.subr.mxu0 0.0
        %2536 = vmatpush1.msra.mxu0 0.0
        %2537 = vmatprep.subr.mxu0 0.0
        %2538 = vmatpush1.msra.mxu0 0.0
        %2539 = vmatprep.subr.mxu0 0.0
        %2540 = vmatpush1.msra.mxu0 0.0
        %2541 = vmatprep.subr.mxu0 0.0
        %2542 = vmatpush1.msra.mxu0 0.0
        %2543 = vmatprep.subr.mxu0 0.0
        %2544 = vmatpush1.msra.mxu0 0.0
        %2545 = vmatprep.subr.mxu0 0.0
        %2546 = vmatpush1.msra.mxu0 0.0
        %2547 = vmatprep.subr.mxu0 0.0
        %2548 = vmatpush1.msra.mxu0 0.0
        %2549 = vmatprep.subr.mxu0 0.0
        %2550 = vmatpush1.msra.mxu0 0.0
        %2551 = vmatprep.subr.mxu0 0.0
        %2552 = vmatpush1.msra.mxu0 0.0
        %2553 = vmatprep.subr.mxu0 0.0
        %2554 = vmatpush1.msra.mxu0 0.0
        %2555 = vmatprep.subr.mxu0 0.0
        %2556 = vmatpush1.msra.mxu0 0.0
        %2557 = vmatprep.subr.mxu0 0.0
        %2558 = vmatpush1.msra.mxu0 0.0
        %2559 = vmatprep.subr.mxu0 0.0
        %2560 = vmatpush1.msra.mxu0 0.0
        %2561 = vmatprep.subr.mxu0 0.0
        %2562 = vmatpush1.msra.mxu0 0.0
        %2563 = vmatprep.subr.mxu0 0.0
        %2564 = vmatpush1.msra.mxu0 0.0
        %2565 = vmatprep.subr.mxu0 0.0
        %2566 = vmatpush1.msra.mxu0 0.0
        %2567 = vmatprep.subr.mxu0 0.0
        %2568 = vmatpush1.msra.mxu0 0.0
        %2569 = vmatprep.subr.mxu0 0.0
        %2570 = vmatpush1.msra.mxu0 0.0
        %2571 = vmatprep.subr.mxu0 0.0
        %2572 = vmatpush1.msra.mxu0 0.0
        %2573 = vmatprep.subr.mxu0 0.0
        %2574 = vmatpush1.msra.mxu0 0.0
        %2575 = vmatprep.subr.mxu0 0.0
        %2576 = vmatpush1.msra.mxu0 0.0
        %2577 = vmatprep.subr.mxu0 0.0
        %2578 = vmatpush1.msra.mxu0 0.0
        %2579 = vmatprep.subr.mxu0 0.0
        %2580 = vmatpush1.msra.mxu0 0.0
        %2581 = vmatprep.subr.mxu0 0.0
        %2582 = vmatpush1.msra.mxu0 0.0
        %2583 = vmatprep.subr.mxu0 0.0
        %2584 = vmatpush1.msra.mxu0 0.0
        %2585 = vmatprep.subr.mxu0 0.0
        %2586 = vmatpush1.msra.mxu0 0.0
        %2587 = vmatprep.subr.mxu0 0.0
        %2588 = vmatpush1.msra.mxu0 0.0
        %2589 = vmatprep.mubr.f32.mxu0 0.0
        %2590 = vmatmul.mubr.f32.gmra.mrb[0].mxu0 %v2523
        %v2591 = vpop.f32.mrb[0].mxu0
        %v2592 = vadd.f32 %v2521, %v2591
        %v2593 = vpop.f32.mrb[0].mxu0
        %2594 = vdwg.mxu0
        %v2595 = vtanh.pop %v2592
        %v2596 = vld [vmem:[%s18] sm:$0xff]
        %v2597 = vld [vmem:[%s18 + $0x8] sm:$0xff]
        %v2598 = vld [vmem:[%s18 + $0x10] sm:$0xff]
        %v2599 = vld [vmem:[%s18 + $0x18] sm:$0xff]
        %v2600 = vld [vmem:[%s19] sm:$0x1]
        %v2602 = vsel %vm834, %v2595, 0
        %2604 = vmatprep.subr.mxu0 0.0
        %2605 = vmatpush1.msra.mxu0 %v2596
        %2606 = vmatprep.subr.mxu0 0.0
        %2607 = vmatpush1.msra.mxu0 %v2597
        %2608 = vmatprep.subr.mxu0 0.0
        %2609 = vmatpush1.msra.mxu0 %v2598
        %2610 = vmatprep.subr.mxu0 0.0
        %2611 = vmatpush1.msra.mxu0 %v2599
        %2612 = vmatprep.subr.mxu0 0.0
        %2613 = vmatpush1.msra.mxu0 0.0
        %2614 = vmatprep.subr.mxu0 0.0
        %2615 = vmatpush1.msra.mxu0 0.0
        %2616 = vmatprep.subr.mxu0 0.0
        %2617 = vmatpush1.msra.mxu0 0.0
        %2618 = vmatprep.subr.mxu0 0.0
        %2619 = vmatpush1.msra.mxu0 0.0
        %2620 = vmatprep.subr.mxu0 0.0
        %2621 = vmatpush1.msra.mxu0 0.0
        %2622 = vmatprep.subr.mxu0 0.0
        %2623 = vmatpush1.msra.mxu0 0.0
        %2624 = vmatprep.subr.mxu0 0.0
        %2625 = vmatpush1.msra.mxu0 0.0
        %2626 = vmatprep.subr.mxu0 0.0
        %2627 = vmatpush1.msra.mxu0 0.0
        %2628 = vmatprep.subr.mxu0 0.0
        %2629 = vmatpush1.msra.mxu0 0.0
        %2630 = vmatprep.subr.mxu0 0.0
        %2631 = vmatpush1.msra.mxu0 0.0
        %2632 = vmatprep.subr.mxu0 0.0
        %2633 = vmatpush1.msra.mxu0 0.0
        %2634 = vmatprep.subr.mxu0 0.0
        %2635 = vmatpush1.msra.mxu0 0.0
        %2636 = vmatprep.subr.mxu0 0.0
        %2637 = vmatpush1.msra.mxu0 0.0
        %2638 = vmatprep.subr.mxu0 0.0
        %2639 = vmatpush1.msra.mxu0 0.0
        %2640 = vmatprep.subr.mxu0 0.0
        %2641 = vmatpush1.msra.mxu0 0.0
        %2642 = vmatprep.subr.mxu0 0.0
        %2643 = vmatpush1.msra.mxu0 0.0
        %2644 = vmatprep.subr.mxu0 0.0
        %2645 = vmatpush1.msra.mxu0 0.0
        %2646 = vmatprep.subr.mxu0 0.0
        %2647 = vmatpush1.msra.mxu0 0.0
        %2648 = vmatprep.subr.mxu0 0.0
        %2649 = vmatpush1.msra.mxu0 0.0
        %2650 = vmatprep.subr.mxu0 0.0
        %2651 = vmatpush1.msra.mxu0 0.0
        %2652 = vmatprep.subr.mxu0 0.0
        %2653 = vmatpush1.msra.mxu0 0.0
        %2654 = vmatprep.subr.mxu0 0.0
        %2655 = vmatpush1.msra.mxu0 0.0
        %2656 = vmatprep.subr.mxu0 0.0
        %2657 = vmatpush1.msra.mxu0 0.0
        %2658 = vmatprep.subr.mxu0 0.0
        %2659 = vmatpush1.msra.mxu0 0.0
        %2660 = vmatprep.subr.mxu0 0.0
        %2661 = vmatpush1.msra.mxu0 0.0
        %2662 = vmatprep.subr.mxu0 0.0
        %2663 = vmatpush1.msra.mxu0 0.0
        %2664 = vmatprep.subr.mxu0 0.0
        %2665 = vmatpush1.msra.mxu0 0.0
        %2666 = vmatprep.subr.mxu0 0.0
        %2667 = vmatpush1.msra.mxu0 0.0
        %2668 = vmatprep.mubr.f32.mxu0 0.0
        %2669 = vmatmul.mubr.f32.gmra.mrb[0].mxu0 %v2602
        %v2670 = vpop.f32.mrb[0].mxu0
        %v2671 = vadd.f32 %v2600, %v2670
        %v2672 = vpop.f32.mrb[0].mxu0
        %2673 = vdwg.mxu0
        %vm2674 = vcmask 1040384
        %v2675 = vsel %vm2674, %v2671, -inf
        %2676 = vmax.xlane.f32.xlu0 %v2675
        %v2677 = vpop.xlane.xlu0 %2676
        %v2678 = vsub.f32 %v2671, %v2677
        %v2679 = vmul.f32 %v2678, 1.442695
        %v2680 = vpow.pop %v2679
        %v2681 = vsel %vm2674, %v2680, 0.0
        %2682 = vadd.xlane.f32.xlu0 %v2681
        %v2683 = vpop.xlane.xlu0 %2682
        %v2684 = vrcp.pop %v2683
        %v2685 = vmul.f32 %v2680, %v2684
        %2686 = vst [vmem:[%s830] sm:$0x1] %v2685
        %s2687 = sand.u32 %s483, 1
        %s2688 = scalar_lea.sflag [#allocation4], %s2687
        %s2689 = sand.u32 %s483, 1
        %s2690 = scalar_lea.vmem [#allocation23], %s2689
        // Predicated region
        $region153: #{tpu_custom_call.1} parent=99 // pred_check
          %p2691 = pneg %p493
        $region154: #{tpu_custom_call.1} parent=99 // pred_check_branch
          %2693 = sbr.rel (%p2691) target = $region156
        $region155: #{tpu_custom_call.1} parent=99 // pred_region
          %s2695 = ssub.s32 16, 16
          %2696 = vsyncadd %s2688, %s2695
          %s2697 = smul.addr %s45, 16
          %s2698 = scalar_lea.hbm %s20, %s2697
          %s2700 = sshll.u32 %s2690, 4
          %s2701 = int_to_ptr.vmem [resolvable:$true] %s2700
          %2703 = dma.vmem_to_hbm [thread:$0]  %s2701, 16, %s2698, %s2688
        $region156: #{tpu_custom_call.1} parent=99 // pred_fallthru
          _
      $region100: #{tpu_custom_call.1} parent=5 // pred_fallthru
        _
      %p2704 = scmp.le.s32.totalorder 2, %s40
      // Predicated region
      $region157: #{tpu_custom_call.1} parent=5 // pred_check
        %p2705 = pneg %p2704
      $region158: #{tpu_custom_call.1} parent=5 // pred_check_branch
        %2707 = sbr.rel (%p2705) target = $region160
      $region159: #{tpu_custom_call.1} parent=5 // pred_region
        %s2708 = ssub.s32 %s40, 2
        // Predicated region
        $region161: #{tpu_custom_call.1} parent=159 // pred_check
          %p2709 = pneg %p499
        $region162: #{tpu_custom_call.1} parent=159 // pred_check_branch
          %2711 = sbr.rel (%p2709) target = $region164
        $region163: #{tpu_custom_call.1} parent=159 // pred_region
          %s2712 = sand.u32 %s484, 1
          %s2713 = scalar_lea.sflag [#allocation4], %s2712
          %s2714 = sand.u32 %s484, 1
          %s2715 = scalar_lea.vmem [#allocation23], %s2714
          %2716 = dma.done %s2713, 16
        $region164: #{tpu_custom_call.1} parent=159 // pred_fallthru
          _
      $region160: #{tpu_custom_call.1} parent=5 // pred_fallthru
        _
    $region6: #{tpu_custom_call.1} parent=1 // loop_footer
      %s44 = sadd.s32 1, %s40
    $region7: #{tpu_custom_call.1} parent=1 // loop_footer_branch
      %39 = sbr.rel target = $region3
    $region8: #{tpu_custom_call.1} parent=1 // loop_exit
      _
    %2717 = vsyncpa [#allocation3], 1
    %s2718 = scalar_lea.sflag [#allocation3], 1
    %2719 = vsyncpa %s2718, 1
    %2720 = vsyncpa [#allocation6], 1
    %s2721 = scalar_lea.sflag [#allocation6], 1
    %2722 = vsyncpa %s2721, 1
    %2723 = vsyncpa [#allocation9], 1
    %2724 = vsyncpa [#allocation12], 1
    %2725 = vsyncpa [#allocation15], 1
    %2726 = vsyncpa [#allocation18], 1
    %2727 = vsyncpa [#allocation21], 1
    %2728 = vsyncpa [#allocation4], 1
    %s2729 = scalar_lea.sflag [#allocation4], 1
    %2730 = vsyncpa %s2729, 1

</llo_original>
